<compile_context>
chip_gen: v7x
topology: tpu7x:2x2x1
jax: 0.10.0
libtpu: 0.0.40
codegen_flags: <defaults>
</compile_context>

<pallas_src>
import math

import jax
import jax.numpy as jnp
from jax.experimental import pallas as pl
from jax.experimental.pallas import tpu as pltpu

# ---- small config consistent with the module's constructor ----
IMG = 16            # img_size
PATCH = 8           # patch_size
IN_CHANS = 3        # in_chans
EMBED_DIM = 64      # embed_dim
DEPTH = 2           # depth
NUM_HEADS = 2       # num_heads
MLP_RATIO = 4.0
PREDICT_DIM = 64    # predict_feature_dim
LN_EPS = 1e-6       # norm_layer = partial(nn.LayerNorm, eps=1e-6) in EVA configs
INIT_STD = 0.02

GRID_HW = IMG // PATCH
NUM_PATCHES = GRID_HW * GRID_HW            # N
SEQ_LEN = NUM_PATCHES + 1                  # T = N + 1 (cls token)
SEQ_PAD = ((SEQ_LEN + 7) // 8) * 8         # pad token axis to sublane multiple (8)
MLP_HIDDEN = int(EMBED_DIM * MLP_RATIO)
HEAD_DIM = EMBED_DIM // NUM_HEADS
ATTN_SCALE = HEAD_DIM ** -0.5
CPP = IN_CHANS * PATCH * PATCH             # im2col row width

# Set to jnp.bfloat16 on v6e / v7x to feed the MXU bf16 inputs (accumulation
# stays f32 via preferred_element_type; LN/softmax stats stay f32).  Keep f32
# for bit-closer parity with the f32 PyTorch reference and on v5e elementwise.
MATMUL_DTYPE = jnp.float32


# ---------------- in-kernel math helpers (traced inside Pallas) ----------------
def _layernorm(x, w, b, eps=LN_EPS):
    mu = jnp.mean(x, axis=-1, keepdims=True)
    var = jnp.mean((x - mu) ** 2, axis=-1, keepdims=True)
    return (x - mu) * jax.lax.rsqrt(var + eps) * w + b


def _erf(x):
    # float32-accurate rational approx (Abramowitz & Stegun 7.1.26, |err|<1.5e-7),
    # built only from ops that lower on Mosaic; matches torch.erf to f32 precision.
    a1, a2, a3, a4, a5 = (0.254829592, -0.284496736, 1.421413741,
                          -1.453152027, 1.061405429)
    p = 0.3275911
    sgn = jnp.where(x >= 0.0, 1.0, -1.0)
    ax = jnp.abs(x)
    t = 1.0 / (1.0 + p * ax)
    poly = ((((a5 * t + a4) * t + a3) * t + a2) * t + a1) * t
    return sgn * (1.0 - poly * jnp.exp(-ax * ax))


def _gelu_exact(x):
    # nn.GELU() default (exact erf form)
    return 0.5 * x * (1.0 + _erf(x * 0.7071067811865476))


# ------------------------------- fused Pallas kernel ----------------------------
def fused_vit_kernel(patches_ref, maskw_ref, convw_ref, convb_ref, mtok_ref,
                     ctok_ref, pos_ref,
                     ln1w_ref, ln1b_ref, qkvw_ref, qkvb_ref, projw_ref, projb_ref,
                     ln2w_ref, ln2b_ref, fc1w_ref, fc1b_ref, fc2w_ref, fc2b_ref,
                     normw_ref, normb_ref, headw_ref, headb_ref,
                     o_ref, tok_scr):
    """Fused: patch-embed -> (pre-norm block) x DEPTH -> final LN -> lm_head."""
    f32 = jnp.float32
    B, T, D = tok_scr.shape            # (batch, padded seq, embed)
    N = NUM_PATCHES
    M = B * T                          # rows fed to every weight matmul
    dh = D // NUM_HEADS

    # ---- patch embed: one matmul over all B*N patch rows ----
    p = patches_ref[...].astype(MATMUL_DTYPE)                       # (B*N, CPP)
    e = jnp.dot(p, convw_ref[...].astype(MATMUL_DTYPE),
                preferred_element_type=f32) + convb_ref[...]        # (B*N, D)
    w = maskw_ref[...]                                              # (B*N, 1)
    e = e * (1.0 - w) + mtok_ref[...] * w                           # mask-token mix

    # ---- assemble tokens (cls | patches | zero pad): two vectorized stores ----
    tok_scr[...] = jnp.zeros_like(tok_scr)                          # init (pads = 0)
    cls_row = ctok_ref[...] + pos_ref[0:1, :]                       # (1, D)
    tok_scr[:, 0:1, :] = jnp.broadcast_to(cls_row[None, :, :], (B, 1, D))
    tok_scr[:, 1:1 + N, :] = (e.reshape(B, N, D)
                              + pos_ref[1:1 + N, :][None, :, :])    # (B, N, D)
    x = tok_scr[...].reshape(M, D)                                  # residual stream

    # padded key columns get a large negative score bias (hoisted, built once)
    key_idx = jax.lax.broadcasted_iota(jnp.int32, (1, 1, T), 2)
    key_bias = jnp.where(key_idx < 1 + N, 0.0, -1e30).astype(f32)

    for d in range(DEPTH):                     # static; weights stacked on depth
        # ---------------- attention: x + proj(softmax(qk^T)v) ----------------
        h = _layernorm(x, ln1w_ref[d], ln1b_ref[d])
        qkv = jnp.dot(h.astype(MATMUL_DTYPE), qkvw_ref[d].astype(MATMUL_DTYPE),
                      preferred_element_type=f32) + qkvb_ref[d]     # (M, 3D)
        q = (qkv[:, 0:D] * ATTN_SCALE).reshape(B, T, D)
        k = qkv[:, D:2 * D].reshape(B, T, D)
        v = qkv[:, 2 * D:3 * D].reshape(B, T, D)
        for hd in range(NUM_HEADS):            # 2 heads, each batched over B
            sl = slice(hd * dh, (hd + 1) * dh)
            s = jnp.einsum('bqd,bkd->bqk',
                           q[:, :, sl].astype(MATMUL_DTYPE),
                           k[:, :, sl].astype(MATMUL_DTYPE),
                           preferred_element_type=f32) + key_bias   # (B, T, T)
            s = s - jnp.max(s, axis=-1, keepdims=True)
            ex = jnp.exp(s)
            prob = ex * pl.reciprocal(jnp.sum(ex, axis=-1, keepdims=True),
                                      approx=True)
            oh = jnp.einsum('bqk,bkd->bqd',
                            prob.astype(MATMUL_DTYPE),
                            v[:, :, sl].astype(MATMUL_DTYPE),
                            preferred_element_type=f32)             # (B, T, dh)
            tok_scr[:, :, sl] = oh             # assemble heads in-place (no concat)
        ao = jnp.dot(tok_scr[...].reshape(M, D).astype(MATMUL_DTYPE),
                     projw_ref[d].astype(MATMUL_DTYPE),
                     preferred_element_type=f32) + projb_ref[d]
        x = x + ao
        # ------------------------- MLP: x + fc2(gelu(fc1)) --------------------
        h2 = _layernorm(x, ln2w_ref[d], ln2b_ref[d])
        m = jnp.dot(h2.astype(MATMUL_DTYPE), fc1w_ref[d].astype(MATMUL_DTYPE),
                    preferred_element_type=f32) + fc1b_ref[d]
        m = _gelu_exact(m)
        m = jnp.dot(m.astype(MATMUL_DTYPE), fc2w_ref[d].astype(MATMUL_DTYPE),
                    preferred_element_type=f32) + fc2b_ref[d]
        x = x + m

    # ---- final LayerNorm + lm_head on every (padded) token: static shape ----
    hn = _layernorm(x, normw_ref[...], normb_ref[...])
    out = jnp.dot(hn.astype(MATMUL_DTYPE), headw_ref[...].astype(MATMUL_DTYPE),
                  preferred_element_type=f32) + headb_ref[...]      # (M, PRED)
    o_ref[...] = out.astype(o_ref.dtype)       # single dense 2-D store


# ------------------------------ pallas_call wrapper -----------------------------
def _full_specs(arrays):
    # whole-array blocks (block == full dims satisfies the (8,128) rule)
    return [pl.BlockSpec(a.shape, lambda i, n=a.ndim: (0,) * n) for a in arrays]


@jax.jit
def _forward_core(patches, mask_w, params):
    """Static-shaped, jittable core: (B*N, CPP) patches -> (B*SEQ_PAD, PRED)."""
    B = patches.shape[0] // NUM_PATCHES
    args = (patches, mask_w,
            params["conv_wT"], params["conv_b"], params["mask_token"],
            params["cls_token"], params["pos_embed"],
            params["ln1_w"], params["ln1_b"], params["qkv_wT"], params["qkv_b"],
            params["proj_wT"], params["proj_b"], params["ln2_w"], params["ln2_b"],
            params["fc1_wT"], params["fc1_b"], params["fc2_wT"], params["fc2_b"],
            params["norm_w"], params["norm_b"], params["head_wT"], params["head_b"])
    # NOTE: for real EVA dims / large B, make batch a "parallel" grid axis so
    # v7x's two TensorCores split the work, and tile activations to fit 64 MiB
    # VMEM; at this toy size a single fused program is optimal.
    return pl.pallas_call(
        fused_vit_kernel,
        out_shape=jax.ShapeDtypeStruct((B * SEQ_PAD, PREDICT_DIM), jnp.float32),
        grid=(1,),
        in_specs=_full_specs(args),
        out_specs=pl.BlockSpec((B * SEQ_PAD, PREDICT_DIM), lambda i: (0, 0)),
        scratch_shapes=[pltpu.VMEM((B, SEQ_PAD, EMBED_DIM), jnp.float32)],
        compiler_params=pltpu.CompilerParams(
            dimension_semantics=("arbitrary",)),
    )(*args)


# ----------------------------------- forward ------------------------------------
def forward(image, bool_masked_pos, params):
    """image: (B, C, H, W) NCHW; bool_masked_pos: (B, num_patches) bool."""
    B, C, H, W = image.shape
    Hp, Wp = H // PATCH, W // PATCH
    # im2col glue: (B*N, C*P*P) with (c, kh, kw) flattening to match Conv2d weight
    patches = image.reshape(B, C, Hp, PATCH, Wp, PATCH)
    patches = patches.transpose(0, 2, 4, 1, 3, 5).reshape(B * Hp * Wp, CPP)
    mask_w = bool_masked_pos.reshape(-1).astype(jnp.float32)[:, None]   # (B*N, 1)

    full = _forward_core(patches, mask_w, params)          # (B*SEQ_PAD, PRED)
    full = full.reshape(B, SEQ_PAD, PREDICT_DIM)
    patch_logits = full[:, 1:1 + NUM_PATCHES, :]           # drop cls + pad rows
    # TODO(synk): the boolean gather below has a data-dependent output shape
    # (mirrors `image_features[bool_masked_pos]` in PyTorch); it stays as eager
    # glue outside the jitted/Pallas path, which is fully static-shaped.
    return patch_logits[bool_masked_pos]                   # (num_masked, PRED)


# ------------------------------ deterministic init ------------------------------
def init_params(key):
    keys = iter(jax.random.split(key, 64))

    def tn(shape, std=INIT_STD):
        # trunc_normal_(t, std=s) truncates at +/- std in the reference code
        return std * jax.random.truncated_normal(next(keys), -1.0, 1.0, shape,
                                                 jnp.float32)

    conv_w = tn((EMBED_DIM, IN_CHANS, PATCH, PATCH))
    params = dict(
        conv_wT=conv_w.reshape(EMBED_DIM, -1).T,                   # (C*P*P, D)
        conv_b=jnp.zeros((1, EMBED_DIM), jnp.float32),
        cls_token=tn((1, EMBED_DIM)),
        mask_token=tn((1, EMBED_DIM)),
        pos_embed=tn((SEQ_LEN, EMBED_DIM)),
        norm_w=jnp.ones((1, EMBED_DIM), jnp.float32),
        norm_b=jnp.zeros((1, EMBED_DIM), jnp.float32),
        head_wT=tn((PREDICT_DIM, EMBED_DIM)).T,
        head_b=jnp.zeros((1, PREDICT_DIM), jnp.float32),
    )
    # per-block weights stacked along a leading depth axis (indexed ref[d] in-kernel)
    qkv_wT, proj_wT, fc1_wT, fc2_wT = [], [], [], []
    for i in range(DEPTH):
        rescale = 1.0 / math.sqrt(2.0 * (i + 1))                   # fix_init_weight
        qkv_wT.append(tn((3 * EMBED_DIM, EMBED_DIM)).T)
        proj_wT.append((tn((EMBED_DIM, EMBED_DIM)) * rescale).T)
        fc1_wT.append(tn((MLP_HIDDEN, EMBED_DIM)).T)
        fc2_wT.append((tn((EMBED_DIM, MLP_HIDDEN)) * rescale).T)
    params.update(
        ln1_w=jnp.ones((DEPTH, 1, EMBED_DIM), jnp.float32),
        ln1_b=jnp.zeros((DEPTH, 1, EMBED_DIM), jnp.float32),
        qkv_wT=jnp.stack(qkv_wT),                                  # (DEPTH, D, 3D)
        # EVA Attention bias = cat(q_bias, zeros_like(k), v_bias), zeros at init
        qkv_b=jnp.zeros((DEPTH, 1, 3 * EMBED_DIM), jnp.float32),
        proj_wT=jnp.stack(proj_wT),                                # (DEPTH, D, D)
        proj_b=jnp.zeros((DEPTH, 1, EMBED_DIM), jnp.float32),
        ln2_w=jnp.ones((DEPTH, 1, EMBED_DIM), jnp.float32),
        ln2_b=jnp.zeros((DEPTH, 1, EMBED_DIM), jnp.float32),
        fc1_wT=jnp.stack(fc1_wT),                                  # (DEPTH, D, H)
        fc1_b=jnp.zeros((DEPTH, 1, MLP_HIDDEN), jnp.float32),
        fc2_wT=jnp.stack(fc2_wT),                                  # (DEPTH, H, D)
        fc2_b=jnp.zeros((DEPTH, 1, EMBED_DIM), jnp.float32),
    )
    return params


if __name__ == "__main__":
    key = jax.random.PRNGKey(0)
    k_img, k_par = jax.random.split(key)

    image = jax.random.normal(k_img, (2, IN_CHANS, IMG, IMG), jnp.float32)
    bool_masked_pos = jnp.array([[True, False, True, False],
                                 [False, True, True, False]], dtype=bool)  # (B, N)

    params = init_params(k_par)
    out = forward(image, bool_masked_pos, params)
    out = jax.block_until_ready(out)

    num_masked = int(bool_masked_pos.sum())
    assert out.shape == (num_masked, PREDICT_DIM), out.shape
    assert bool(jnp.all(jnp.isfinite(out)))
    print("KERNEL_OK")
</pallas_src>

<mosaic_0001>
module attributes {stable_mosaic.version = 11 : i64} {
  func.func @fused_vit_kernel(%arg0: i32, %arg1: memref<8x192xf32, #tpu.memory_space<vmem>>, %arg2: memref<8x1xf32, #tpu.memory_space<vmem>>, %arg3: memref<192x64xf32, #tpu.memory_space<vmem>>, %arg4: memref<1x64xf32, #tpu.memory_space<vmem>>, %arg5: memref<1x64xf32, #tpu.memory_space<vmem>>, %arg6: memref<1x64xf32, #tpu.memory_space<vmem>>, %arg7: memref<5x64xf32, #tpu.memory_space<vmem>>, %arg8: memref<2x1x64xf32, #tpu.memory_space<vmem>>, %arg9: memref<2x1x64xf32, #tpu.memory_space<vmem>>, %arg10: memref<2x64x192xf32, #tpu.memory_space<vmem>>, %arg11: memref<2x1x192xf32, #tpu.memory_space<vmem>>, %arg12: memref<2x64x64xf32, #tpu.memory_space<vmem>>, %arg13: memref<2x1x64xf32, #tpu.memory_space<vmem>>, %arg14: memref<2x1x64xf32, #tpu.memory_space<vmem>>, %arg15: memref<2x1x64xf32, #tpu.memory_space<vmem>>, %arg16: memref<2x64x256xf32, #tpu.memory_space<vmem>>, %arg17: memref<2x1x256xf32, #tpu.memory_space<vmem>>, %arg18: memref<2x256x64xf32, #tpu.memory_space<vmem>>, %arg19: memref<2x1x64xf32, #tpu.memory_space<vmem>>, %arg20: memref<1x64xf32, #tpu.memory_space<vmem>>, %arg21: memref<1x64xf32, #tpu.memory_space<vmem>>, %arg22: memref<64x64xf32, #tpu.memory_space<vmem>>, %arg23: memref<1x64xf32, #tpu.memory_space<vmem>>, %arg24: memref<16x64xf32, #tpu.memory_space<vmem>>, %arg25: memref<2x8x64xf32, #tpu.memory_space<vmem>>) attributes {dimension_semantics = [#tpu.dimension_semantics<arbitrary>], iteration_bounds = array<i64: 1>, scalar_prefetch = 0 : i64, scratch_operands = 1 : i64, tpu.core_type = #tpu.core_type<tc>, window_params = [{pipeline_mode = #tpu.pipeline_mode<synchronous>, transform_indices = @transform_0, window_bounds = array<i64: 8, 192>}, {pipeline_mode = #tpu.pipeline_mode<synchronous>, transform_indices = @transform_1, window_bounds = array<i64: 8, 1>}, {pipeline_mode = #tpu.pipeline_mode<synchronous>, transform_indices = @transform_2, window_bounds = array<i64: 192, 64>}, {pipeline_mode = #tpu.pipeline_mode<synchronous>, transform_indices = @transform_3, window_bounds = array<i64: 1, 64>}, {pipeline_mode = #tpu.pipeline_mode<synchronous>, transform_indices = @transform_4, window_bounds = array<i64: 1, 64>}, {pipeline_mode = #tpu.pipeline_mode<synchronous>, transform_indices = @transform_5, window_bounds = array<i64: 1, 64>}, {pipeline_mode = #tpu.pipeline_mode<synchronous>, transform_indices = @transform_6, window_bounds = array<i64: 5, 64>}, {pipeline_mode = #tpu.pipeline_mode<synchronous>, transform_indices = @transform_7, window_bounds = array<i64: 2, 1, 64>}, {pipeline_mode = #tpu.pipeline_mode<synchronous>, transform_indices = @transform_8, window_bounds = array<i64: 2, 1, 64>}, {pipeline_mode = #tpu.pipeline_mode<synchronous>, transform_indices = @transform_9, window_bounds = array<i64: 2, 64, 192>}, {pipeline_mode = #tpu.pipeline_mode<synchronous>, transform_indices = @transform_10, window_bounds = array<i64: 2, 1, 192>}, {pipeline_mode = #tpu.pipeline_mode<synchronous>, transform_indices = @transform_11, window_bounds = array<i64: 2, 64, 64>}, {pipeline_mode = #tpu.pipeline_mode<synchronous>, transform_indices = @transform_12, window_bounds = array<i64: 2, 1, 64>}, {pipeline_mode = #tpu.pipeline_mode<synchronous>, transform_indices = @transform_13, window_bounds = array<i64: 2, 1, 64>}, {pipeline_mode = #tpu.pipeline_mode<synchronous>, transform_indices = @transform_14, window_bounds = array<i64: 2, 1, 64>}, {pipeline_mode = #tpu.pipeline_mode<synchronous>, transform_indices = @transform_15, window_bounds = array<i64: 2, 64, 256>}, {pipeline_mode = #tpu.pipeline_mode<synchronous>, transform_indices = @transform_16, window_bounds = array<i64: 2, 1, 256>}, {pipeline_mode = #tpu.pipeline_mode<synchronous>, transform_indices = @transform_17, window_bounds = array<i64: 2, 256, 64>}, {pipeline_mode = #tpu.pipeline_mode<synchronous>, transform_indices = @transform_18, window_bounds = array<i64: 2, 1, 64>}, {pipeline_mode = #tpu.pipeline_mode<synchronous>, transform_indices = @transform_19, window_bounds = array<i64: 1, 64>}, {pipeline_mode = #tpu.pipeline_mode<synchronous>, transform_indices = @transform_20, window_bounds = array<i64: 1, 64>}, {pipeline_mode = #tpu.pipeline_mode<synchronous>, transform_indices = @transform_21, window_bounds = array<i64: 64, 64>}, {pipeline_mode = #tpu.pipeline_mode<synchronous>, transform_indices = @transform_22, window_bounds = array<i64: 1, 64>}, {pipeline_mode = #tpu.pipeline_mode<synchronous>, transform_indices = @transform_23, window_bounds = array<i64: 16, 64>}]} {
    %c0 = arith.constant 0 : index
    %c0_0 = arith.constant 0 : index
    %0 = vector.load %arg1[%c0, %c0_0] : memref<8x192xf32, #tpu.memory_space<vmem>>, vector<8x192xf32>
    %c0_1 = arith.constant 0 : index
    %c0_2 = arith.constant 0 : index
    %1 = vector.load %arg3[%c0_1, %c0_2] : memref<192x64xf32, #tpu.memory_space<vmem>>, vector<192x64xf32>
    %cst = arith.constant dense<0.000000e+00> : vector<8x64xf32>
    %2 = tpu.matmul %0, %1, %cst {dimension_numbers = #tpu.dot_dimension_numbers<[1], [0], [0], [1], [0, 0, 1, 1], [], []>} : vector<8x192xf32>, vector<192x64xf32>, vector<8x64xf32> -> vector<8x64xf32>
    %c0_3 = arith.constant 0 : index
    %c0_4 = arith.constant 0 : index
    %3 = vector.load %arg4[%c0_3, %c0_4] : memref<1x64xf32, #tpu.memory_space<vmem>>, vector<1x64xf32>
    %4 = vector.broadcast %3 : vector<1x64xf32> to vector<8x64xf32>
    %5 = arith.addf %2, %4 : vector<8x64xf32>
    %c0_5 = arith.constant 0 : index
    %c0_6 = arith.constant 0 : index
    %6 = vector.load %arg2[%c0_5, %c0_6] : memref<8x1xf32, #tpu.memory_space<vmem>>, vector<8x1xf32>
    %cst_7 = arith.constant 1.000000e+00 : f32
    %7 = vector.broadcast %cst_7 : f32 to vector<8x1xf32>
    %8 = arith.subf %7, %6 : vector<8x1xf32>
    %9 = vector.broadcast %8 : vector<8x1xf32> to vector<8x64xf32>
    %10 = arith.mulf %5, %9 : vector<8x64xf32>
    %c0_8 = arith.constant 0 : index
    %c0_9 = arith.constant 0 : index
    %11 = vector.load %arg5[%c0_8, %c0_9] : memref<1x64xf32, #tpu.memory_space<vmem>>, vector<1x64xf32>
    %12 = vector.broadcast %11 : vector<1x64xf32> to vector<8x64xf32>
    %13 = vector.broadcast %6 : vector<8x1xf32> to vector<8x64xf32>
    %14 = arith.mulf %12, %13 : vector<8x64xf32>
    %15 = arith.addf %10, %14 : vector<8x64xf32>
    %cst_10 = arith.constant 0.000000e+00 : f32
    %16 = vector.broadcast %cst_10 : f32 to vector<2x8x64xf32>
    %c0_11 = arith.constant 0 : index
    %c0_12 = arith.constant 0 : index
    %c0_13 = arith.constant 0 : index
    %17 = vector.load %arg25[%c0_11, %c0_12, %c0_13] : memref<2x8x64xf32, #tpu.memory_space<vmem>>, vector<2x8x64xf32>
    tpu.vector_store %arg25[%c0_11, %c0_12, %c0_13], %16 {strides = array<i32>} : memref<2x8x64xf32, #tpu.memory_space<vmem>>, vector<2x8x64xf32>,
    %c0_14 = arith.constant 0 : index
    %c0_15 = arith.constant 0 : index
    %18 = vector.load %arg6[%c0_14, %c0_15] : memref<1x64xf32, #tpu.memory_space<vmem>>, vector<1x64xf32>
    %c0_16 = arith.constant 0 : index
    %c0_17 = arith.constant 0 : index
    %19 = vector.load %arg7[%c0_16, %c0_17] : memref<5x64xf32, #tpu.memory_space<vmem>>, vector<1x64xf32>
    %20 = arith.addf %18, %19 : vector<1x64xf32>
    %21 = vector.shape_cast %20 : vector<1x64xf32> to vector<1x1x64xf32>
    %22 = vector.shape_cast %21 : vector<1x1x64xf32> to vector<1x1x64xf32>
    %23 = vector.broadcast %22 : vector<1x1x64xf32> to vector<2x1x64xf32>
    %c0_18 = arith.constant 0 : index
    %c0_19 = arith.constant 0 : index
    %c0_20 = arith.constant 0 : index
    %24 = vector.load %arg25[%c0_18, %c0_19, %c0_20] : memref<2x8x64xf32, #tpu.memory_space<vmem>>, vector<2x1x64xf32>
    tpu.vector_store %arg25[%c0_18, %c0_19, %c0_20], %23 {strides = array<i32>} : memref<2x8x64xf32, #tpu.memory_space<vmem>>, vector<2x1x64xf32>,
    %25 = vector.shape_cast %15 : vector<8x64xf32> to vector<2x4x64xf32>
    %c1 = arith.constant 1 : index
    %c0_21 = arith.constant 0 : index
    %26 = vector.load %arg7[%c1, %c0_21] : memref<5x64xf32, #tpu.memory_space<vmem>>, vector<4x64xf32>
    %27 = vector.shape_cast %26 : vector<4x64xf32> to vector<1x4x64xf32>
    %28 = vector.broadcast %27 : vector<1x4x64xf32> to vector<2x4x64xf32>
    %29 = arith.addf %25, %28 : vector<2x4x64xf32>
    %c0_22 = arith.constant 0 : index
    %c1_23 = arith.constant 1 : index
    %c0_24 = arith.constant 0 : index
    %30 = vector.load %arg25[%c0_22, %c1_23, %c0_24] : memref<2x8x64xf32, #tpu.memory_space<vmem>>, vector<2x4x64xf32>
    tpu.vector_store %arg25[%c0_22, %c1_23, %c0_24], %29 {strides = array<i32>} : memref<2x8x64xf32, #tpu.memory_space<vmem>>, vector<2x4x64xf32>,
    %c0_25 = arith.constant 0 : index
    %c0_26 = arith.constant 0 : index
    %c0_27 = arith.constant 0 : index
    %31 = vector.load %arg25[%c0_25, %c0_26, %c0_27] : memref<2x8x64xf32, #tpu.memory_space<vmem>>, vector<2x8x64xf32>
    %32 = vector.shape_cast %31 : vector<2x8x64xf32> to vector<16x64xf32>
    %33 = tpu.iota {dimensions = array<i32: 2>} : vector<1x1x8xi32>
    %c5_i32 = arith.constant 5 : i32
    %34 = vector.broadcast %c5_i32 : i32 to vector<1x1x8xi32>
    %35 = arith.cmpi slt, %33, %34 : vector<1x1x8xi32>
    %cst_28 = arith.constant 0.000000e+00 : f32
    %cst_29 = arith.constant -1.000000e+30 : f32
    %36 = vector.broadcast %cst_28 : f32 to vector<1x1x8xf32>
    %37 = vector.broadcast %cst_29 : f32 to vector<1x1x8xf32>
    %38 = arith.select %35, %36, %37 : vector<1x1x8xi1>, vector<1x1x8xf32>
    %c0_30 = arith.constant 0 : index
    %c0_31 = arith.constant 0 : index
    %c0_32 = arith.constant 0 : index
    %39 = vector.load %arg8[%c0_30, %c0_31, %c0_32] : memref<2x1x64xf32, #tpu.memory_space<vmem>>, vector<1x1x64xf32>
    %40 = vector.shape_cast %39 : vector<1x1x64xf32> to vector<1x64xf32>
    %c0_33 = arith.constant 0 : index
    %c0_34 = arith.constant 0 : index
    %c0_35 = arith.constant 0 : index
    %41 = vector.load %arg9[%c0_33, %c0_34, %c0_35] : memref<2x1x64xf32, #tpu.memory_space<vmem>>, vector<1x1x64xf32>
    %42 = vector.shape_cast %41 : vector<1x1x64xf32> to vector<1x64xf32>
    %cst_36 = arith.constant dense<0.000000e+00> : vector<16xf32>
    %43 = vector.multi_reduction <add>, %32, %cst_36 [1] : vector<16x64xf32> to vector<16xf32>
    %44 = vector.shape_cast %43 : vector<16xf32> to vector<16x1xf32>
    %cst_37 = arith.constant 6.400000e+01 : f32
    %45 = vector.broadcast %cst_37 : f32 to vector<16x1xf32>
    %46 = arith.divf %44, %45 : vector<16x1xf32>
    %47 = vector.broadcast %46 : vector<16x1xf32> to vector<16x64xf32>
    %48 = arith.subf %32, %47 : vector<16x64xf32>
    %49 = arith.mulf %48, %48 : vector<16x64xf32>
    %cst_38 = arith.constant dense<0.000000e+00> : vector<16xf32>
    %50 = vector.multi_reduction <add>, %49, %cst_38 [1] : vector<16x64xf32> to vector<16xf32>
    %51 = vector.shape_cast %50 : vector<16xf32> to vector<16x1xf32>
    %cst_39 = arith.constant 6.400000e+01 : f32
    %52 = vector.broadcast %cst_39 : f32 to vector<16x1xf32>
    %53 = arith.divf %51, %52 : vector<16x1xf32>
    %54 = vector.broadcast %46 : vector<16x1xf32> to vector<16x64xf32>
    %55 = arith.subf %32, %54 : vector<16x64xf32>
    %cst_40 = arith.constant 9.99999997E-7 : f32
    %56 = vector.broadcast %cst_40 : f32 to vector<16x1xf32>
    %57 = arith.addf %53, %56 : vector<16x1xf32>
    %58 = math.rsqrt %57 : vector<16x1xf32>
    %59 = vector.broadcast %58 : vector<16x1xf32> to vector<16x64xf32>
    %60 = arith.mulf %55, %59 : vector<16x64xf32>
    %61 = vector.broadcast %40 : vector<1x64xf32> to vector<16x64xf32>
    %62 = arith.mulf %60, %61 : vector<16x64xf32>
    %63 = vector.broadcast %42 : vector<1x64xf32> to vector<16x64xf32>
    %64 = arith.addf %62, %63 : vector<16x64xf32>
    %c0_41 = arith.constant 0 : index
    %c0_42 = arith.constant 0 : index
    %c0_43 = arith.constant 0 : index
    %65 = vector.load %arg10[%c0_41, %c0_42, %c0_43] : memref<2x64x192xf32, #tpu.memory_space<vmem>>, vector<1x64x192xf32>
    %66 = vector.shape_cast %65 : vector<1x64x192xf32> to vector<64x192xf32>
    %cst_44 = arith.constant dense<0.000000e+00> : vector<16x192xf32>
    %67 = tpu.matmul %64, %66, %cst_44 {dimension_numbers = #tpu.dot_dimension_numbers<[1], [0], [0], [1], [0, 0, 1, 1], [], []>} : vector<16x64xf32>, vector<64x192xf32>, vector<16x192xf32> -> vector<16x192xf32>
    %c0_45 = arith.constant 0 : index
    %c0_46 = arith.constant 0 : index
    %c0_47 = arith.constant 0 : index
    %68 = vector.load %arg11[%c0_45, %c0_46, %c0_47] : memref<2x1x192xf32, #tpu.memory_space<vmem>>, vector<1x1x192xf32>
    %69 = vector.shape_cast %68 : vector<1x1x192xf32> to vector<1x192xf32>
    %70 = vector.broadcast %69 : vector<1x192xf32> to vector<16x192xf32>
    %71 = arith.addf %67, %70 : vector<16x192xf32>
    %72 = vector.extract_strided_slice %71 {offsets = [0, 0], sizes = [16, 64], strides = [1, 1]} : vector<16x192xf32> to vector<16x64xf32>
    %cst_48 = arith.constant 0.176776692 : f32
    %73 = vector.broadcast %cst_48 : f32 to vector<16x64xf32>
    %74 = arith.mulf %72, %73 : vector<16x64xf32>
    %75 = vector.shape_cast %74 : vector<16x64xf32> to vector<2x8x64xf32>
    %76 = vector.extract_strided_slice %71 {offsets = [0, 64], sizes = [16, 64], strides = [1, 1]} : vector<16x192xf32> to vector<16x64xf32>
    %77 = vector.shape_cast %76 : vector<16x64xf32> to vector<2x8x64xf32>
    %78 = vector.extract_strided_slice %71 {offsets = [0, 128], sizes = [16, 64], strides = [1, 1]} : vector<16x192xf32> to vector<16x64xf32>
    %79 = vector.shape_cast %78 : vector<16x64xf32> to vector<2x8x64xf32>
    %80 = vector.extract_strided_slice %75 {offsets = [0, 0, 0], sizes = [2, 8, 32], strides = [1, 1, 1]} : vector<2x8x64xf32> to vector<2x8x32xf32>
    %81 = vector.extract_strided_slice %77 {offsets = [0, 0, 0], sizes = [2, 8, 32], strides = [1, 1, 1]} : vector<2x8x64xf32> to vector<2x8x32xf32>
    "tpu.trace_start"() <{level = 10 : i32, message = "bqd,bkd->bqk"}> : () -> ()
    %cst_49 = arith.constant dense<0.000000e+00> : vector<2x8x8xf32>
    %82 = tpu.matmul %80, %81, %cst_49 {dimension_numbers = #tpu.dot_dimension_numbers<[2], [2], [1], [1], [0, 0, 0, 1, 1, 1], [0], [0]>} : vector<2x8x32xf32>, vector<2x8x32xf32>, vector<2x8x8xf32> -> vector<2x8x8xf32>
    "tpu.trace_stop"() : () -> ()
    %83 = vector.broadcast %38 : vector<1x1x8xf32> to vector<2x8x8xf32>
    %84 = arith.addf %82, %83 : vector<2x8x8xf32>
    %cst_50 = arith.constant dense<0xFF800000> : vector<2x8xf32>
    %85 = vector.multi_reduction <maximumf>, %84, %cst_50 [2] : vector<2x8x8xf32> to vector<2x8xf32>
    %86 = vector.shape_cast %85 : vector<2x8xf32> to vector<2x8x1xf32>
    %87 = vector.broadcast %86 : vector<2x8x1xf32> to vector<2x8x8xf32>
    %88 = arith.subf %84, %87 : vector<2x8x8xf32>
    %89 = math.exp %88 : vector<2x8x8xf32>
    %cst_51 = arith.constant dense<0.000000e+00> : vector<2x8xf32>
    %90 = vector.multi_reduction <add>, %89, %cst_51 [2] : vector<2x8x8xf32> to vector<2x8xf32>
    %91 = vector.shape_cast %90 : vector<2x8xf32> to vector<2x8x1xf32>
    %92 = tpu.reciprocal %91 {approx = true} : vector<2x8x1xf32> -> vector<2x8x1xf32>
    %93 = vector.broadcast %92 : vector<2x8x1xf32> to vector<2x8x8xf32>
    %94 = arith.mulf %89, %93 : vector<2x8x8xf32>
    %95 = vector.extract_strided_slice %79 {offsets = [0, 0, 0], sizes = [2, 8, 32], strides = [1, 1, 1]} : vector<2x8x64xf32> to vector<2x8x32xf32>
    "tpu.trace_start"() <{level = 10 : i32, message = "bqk,bkd->bqd"}> : () -> ()
    %cst_52 = arith.constant dense<0.000000e+00> : vector<2x8x32xf32>
    %96 = tpu.matmul %94, %95, %cst_52 {dimension_numbers = #tpu.dot_dimension_numbers<[2], [1], [1], [2], [0, 0, 0, 1, 1, 2], [0], [0]>} : vector<2x8x8xf32>, vector<2x8x32xf32>, vector<2x8x32xf32> -> vector<2x8x32xf32>
    "tpu.trace_stop"() : () -> ()
    %c0_53 = arith.constant 0 : index
    %c0_54 = arith.constant 0 : index
    %c0_55 = arith.constant 0 : index
    %97 = vector.load %arg25[%c0_53, %c0_54, %c0_55] : memref<2x8x64xf32, #tpu.memory_space<vmem>>, vector<2x8x32xf32>
    tpu.vector_store %arg25[%c0_53, %c0_54, %c0_55], %96 {strides = array<i32>} : memref<2x8x64xf32, #tpu.memory_space<vmem>>, vector<2x8x32xf32>,
    %98 = vector.extract_strided_slice %75 {offsets = [0, 0, 32], sizes = [2, 8, 32], strides = [1, 1, 1]} : vector<2x8x64xf32> to vector<2x8x32xf32>
    %99 = vector.extract_strided_slice %77 {offsets = [0, 0, 32], sizes = [2, 8, 32], strides = [1, 1, 1]} : vector<2x8x64xf32> to vector<2x8x32xf32>
    "tpu.trace_start"() <{level = 10 : i32, message = "bqd,bkd->bqk"}> : () -> ()
    %cst_56 = arith.constant dense<0.000000e+00> : vector<2x8x8xf32>
    %100 = tpu.matmul %98, %99, %cst_56 {dimension_numbers = #tpu.dot_dimension_numbers<[2], [2], [1], [1], [0, 0, 0, 1, 1, 1], [0], [0]>} : vector<2x8x32xf32>, vector<2x8x32xf32>, vector<2x8x8xf32> -> vector<2x8x8xf32>
    "tpu.trace_stop"() : () -> ()
    %101 = vector.broadcast %38 : vector<1x1x8xf32> to vector<2x8x8xf32>
    %102 = arith.addf %100, %101 : vector<2x8x8xf32>
    %cst_57 = arith.constant dense<0xFF800000> : vector<2x8xf32>
    %103 = vector.multi_reduction <maximumf>, %102, %cst_57 [2] : vector<2x8x8xf32> to vector<2x8xf32>
    %104 = vector.shape_cast %103 : vector<2x8xf32> to vector<2x8x1xf32>
    %105 = vector.broadcast %104 : vector<2x8x1xf32> to vector<2x8x8xf32>
    %106 = arith.subf %102, %105 : vector<2x8x8xf32>
    %107 = math.exp %106 : vector<2x8x8xf32>
    %cst_58 = arith.constant dense<0.000000e+00> : vector<2x8xf32>
    %108 = vector.multi_reduction <add>, %107, %cst_58 [2] : vector<2x8x8xf32> to vector<2x8xf32>
    %109 = vector.shape_cast %108 : vector<2x8xf32> to vector<2x8x1xf32>
    %110 = tpu.reciprocal %109 {approx = true} : vector<2x8x1xf32> -> vector<2x8x1xf32>
    %111 = vector.broadcast %110 : vector<2x8x1xf32> to vector<2x8x8xf32>
    %112 = arith.mulf %107, %111 : vector<2x8x8xf32>
    %113 = vector.extract_strided_slice %79 {offsets = [0, 0, 32], sizes = [2, 8, 32], strides = [1, 1, 1]} : vector<2x8x64xf32> to vector<2x8x32xf32>
    "tpu.trace_start"() <{level = 10 : i32, message = "bqk,bkd->bqd"}> : () -> ()
    %cst_59 = arith.constant dense<0.000000e+00> : vector<2x8x32xf32>
    %114 = tpu.matmul %112, %113, %cst_59 {dimension_numbers = #tpu.dot_dimension_numbers<[2], [1], [1], [2], [0, 0, 0, 1, 1, 2], [0], [0]>} : vector<2x8x8xf32>, vector<2x8x32xf32>, vector<2x8x32xf32> -> vector<2x8x32xf32>
    "tpu.trace_stop"() : () -> ()
    %c0_60 = arith.constant 0 : index
    %c0_61 = arith.constant 0 : index
    %c32 = arith.constant 32 : index
    %115 = vector.load %arg25[%c0_60, %c0_61, %c32] : memref<2x8x64xf32, #tpu.memory_space<vmem>>, vector<2x8x32xf32>
    tpu.vector_store %arg25[%c0_60, %c0_61, %c32], %114 {strides = array<i32>} : memref<2x8x64xf32, #tpu.memory_space<vmem>>, vector<2x8x32xf32>,
    %c0_62 = arith.constant 0 : index
    %c0_63 = arith.constant 0 : index
    %c0_64 = arith.constant 0 : index
    %116 = vector.load %arg25[%c0_62, %c0_63, %c0_64] : memref<2x8x64xf32, #tpu.memory_space<vmem>>, vector<2x8x64xf32>
    %117 = vector.shape_cast %116 : vector<2x8x64xf32> to vector<16x64xf32>
    %c0_65 = arith.constant 0 : index
    %c0_66 = arith.constant 0 : index
    %c0_67 = arith.constant 0 : index
    %118 = vector.load %arg12[%c0_65, %c0_66, %c0_67] : memref<2x64x64xf32, #tpu.memory_space<vmem>>, vector<1x64x64xf32>
    %119 = vector.shape_cast %118 : vector<1x64x64xf32> to vector<64x64xf32>
    %cst_68 = arith.constant dense<0.000000e+00> : vector<16x64xf32>
    %120 = tpu.matmul %117, %119, %cst_68 {dimension_numbers = #tpu.dot_dimension_numbers<[1], [0], [0], [1], [0, 0, 1, 1], [], []>} : vector<16x64xf32>, vector<64x64xf32>, vector<16x64xf32> -> vector<16x64xf32>
    %c0_69 = arith.constant 0 : index
    %c0_70 = arith.constant 0 : index
    %c0_71 = arith.constant 0 : index
    %121 = vector.load %arg13[%c0_69, %c0_70, %c0_71] : memref<2x1x64xf32, #tpu.memory_space<vmem>>, vector<1x1x64xf32>
    %122 = vector.shape_cast %121 : vector<1x1x64xf32> to vector<1x64xf32>
    %123 = vector.broadcast %122 : vector<1x64xf32> to vector<16x64xf32>
    %124 = arith.addf %120, %123 : vector<16x64xf32>
    %125 = arith.addf %32, %124 : vector<16x64xf32>
    %c0_72 = arith.constant 0 : index
    %c0_73 = arith.constant 0 : index
    %c0_74 = arith.constant 0 : index
    %126 = vector.load %arg14[%c0_72, %c0_73, %c0_74] : memref<2x1x64xf32, #tpu.memory_space<vmem>>, vector<1x1x64xf32>
    %127 = vector.shape_cast %126 : vector<1x1x64xf32> to vector<1x64xf32>
    %c0_75 = arith.constant 0 : index
    %c0_76 = arith.constant 0 : index
    %c0_77 = arith.constant 0 : index
    %128 = vector.load %arg15[%c0_75, %c0_76, %c0_77] : memref<2x1x64xf32, #tpu.memory_space<vmem>>, vector<1x1x64xf32>
    %129 = vector.shape_cast %128 : vector<1x1x64xf32> to vector<1x64xf32>
    %cst_78 = arith.constant dense<0.000000e+00> : vector<16xf32>
    %130 = vector.multi_reduction <add>, %125, %cst_78 [1] : vector<16x64xf32> to vector<16xf32>
    %131 = vector.shape_cast %130 : vector<16xf32> to vector<16x1xf32>
    %cst_79 = arith.constant 6.400000e+01 : f32
    %132 = vector.broadcast %cst_79 : f32 to vector<16x1xf32>
    %133 = arith.divf %131, %132 : vector<16x1xf32>
    %134 = vector.broadcast %133 : vector<16x1xf32> to vector<16x64xf32>
    %135 = arith.subf %125, %134 : vector<16x64xf32>
    %136 = arith.mulf %135, %135 : vector<16x64xf32>
    %cst_80 = arith.constant dense<0.000000e+00> : vector<16xf32>
    %137 = vector.multi_reduction <add>, %136, %cst_80 [1] : vector<16x64xf32> to vector<16xf32>
    %138 = vector.shape_cast %137 : vector<16xf32> to vector<16x1xf32>
    %cst_81 = arith.constant 6.400000e+01 : f32
    %139 = vector.broadcast %cst_81 : f32 to vector<16x1xf32>
    %140 = arith.divf %138, %139 : vector<16x1xf32>
    %141 = vector.broadcast %133 : vector<16x1xf32> to vector<16x64xf32>
    %142 = arith.subf %125, %141 : vector<16x64xf32>
    %cst_82 = arith.constant 9.99999997E-7 : f32
    %143 = vector.broadcast %cst_82 : f32 to vector<16x1xf32>
    %144 = arith.addf %140, %143 : vector<16x1xf32>
    %145 = math.rsqrt %144 : vector<16x1xf32>
    %146 = vector.broadcast %145 : vector<16x1xf32> to vector<16x64xf32>
    %147 = arith.mulf %142, %146 : vector<16x64xf32>
    %148 = vector.broadcast %127 : vector<1x64xf32> to vector<16x64xf32>
    %149 = arith.mulf %147, %148 : vector<16x64xf32>
    %150 = vector.broadcast %129 : vector<1x64xf32> to vector<16x64xf32>
    %151 = arith.addf %149, %150 : vector<16x64xf32>
    %c0_83 = arith.constant 0 : index
    %c0_84 = arith.constant 0 : index
    %c0_85 = arith.constant 0 : index
    %152 = vector.load %arg16[%c0_83, %c0_84, %c0_85] : memref<2x64x256xf32, #tpu.memory_space<vmem>>, vector<1x64x256xf32>
    %153 = vector.shape_cast %152 : vector<1x64x256xf32> to vector<64x256xf32>
    %cst_86 = arith.constant dense<0.000000e+00> : vector<16x256xf32>
    %154 = tpu.matmul %151, %153, %cst_86 {dimension_numbers = #tpu.dot_dimension_numbers<[1], [0], [0], [1], [0, 0, 1, 1], [], []>} : vector<16x64xf32>, vector<64x256xf32>, vector<16x256xf32> -> vector<16x256xf32>
    %c0_87 = arith.constant 0 : index
    %c0_88 = arith.constant 0 : index
    %c0_89 = arith.constant 0 : index
    %155 = vector.load %arg17[%c0_87, %c0_88, %c0_89] : memref<2x1x256xf32, #tpu.memory_space<vmem>>, vector<1x1x256xf32>
    %156 = vector.shape_cast %155 : vector<1x1x256xf32> to vector<1x256xf32>
    %157 = vector.broadcast %156 : vector<1x256xf32> to vector<16x256xf32>
    %158 = arith.addf %154, %157 : vector<16x256xf32>
    %cst_90 = arith.constant 5.000000e-01 : f32
    %159 = vector.broadcast %cst_90 : f32 to vector<16x256xf32>
    %160 = arith.mulf %159, %158 : vector<16x256xf32>
    %cst_91 = arith.constant 0.707106769 : f32
    %161 = vector.broadcast %cst_91 : f32 to vector<16x256xf32>
    %162 = arith.mulf %158, %161 : vector<16x256xf32>
    %cst_92 = arith.constant 0.000000e+00 : f32
    %163 = vector.broadcast %cst_92 : f32 to vector<16x256xf32>
    %164 = arith.cmpf oge, %162, %163 : vector<16x256xf32>
    %cst_93 = arith.constant 1.000000e+00 : f32
    %cst_94 = arith.constant -1.000000e+00 : f32
    %165 = vector.broadcast %cst_93 : f32 to vector<16x256xf32>
    %166 = vector.broadcast %cst_94 : f32 to vector<16x256xf32>
    %167 = arith.select %164, %165, %166 : vector<16x256xi1>, vector<16x256xf32>
    %168 = math.absf %162 : vector<16x256xf32>
    %cst_95 = arith.constant 0.327591091 : f32
    %169 = vector.broadcast %cst_95 : f32 to vector<16x256xf32>
    %170 = arith.mulf %169, %168 : vector<16x256xf32>
    %cst_96 = arith.constant 1.000000e+00 : f32
    %171 = vector.broadcast %cst_96 : f32 to vector<16x256xf32>
    %172 = arith.addf %171, %170 : vector<16x256xf32>
    %cst_97 = arith.constant 1.000000e+00 : f32
    %173 = vector.broadcast %cst_97 : f32 to vector<16x256xf32>
    %174 = arith.divf %173, %172 : vector<16x256xf32>
    %cst_98 = arith.constant 1.06140542 : f32
    %175 = vector.broadcast %cst_98 : f32 to vector<16x256xf32>
    %176 = arith.mulf %175, %174 : vector<16x256xf32>
    %cst_99 = arith.constant -1.45315206 : f32
    %177 = vector.broadcast %cst_99 : f32 to vector<16x256xf32>
    %178 = arith.addf %176, %177 : vector<16x256xf32>
    %179 = arith.mulf %178, %174 : vector<16x256xf32>
    %cst_100 = arith.constant 1.42141378 : f32
    %180 = vector.broadcast %cst_100 : f32 to vector<16x256xf32>
    %181 = arith.addf %179, %180 : vector<16x256xf32>
    %182 = arith.mulf %181, %174 : vector<16x256xf32>
    %cst_101 = arith.constant -0.284496725 : f32
    %183 = vector.broadcast %cst_101 : f32 to vector<16x256xf32>
    %184 = arith.addf %182, %183 : vector<16x256xf32>
    %185 = arith.mulf %184, %174 : vector<16x256xf32>
    %cst_102 = arith.constant 0.254829586 : f32
    %186 = vector.broadcast %cst_102 : f32 to vector<16x256xf32>
    %187 = arith.addf %185, %186 : vector<16x256xf32>
    %188 = arith.mulf %187, %174 : vector<16x256xf32>
    %cst_103 = arith.constant 0.000000e+00 : f32
    %189 = vector.broadcast %cst_103 : f32 to vector<16x256xf32>
    %190 = arith.subf %189, %168 : vector<16x256xf32>
    %191 = arith.mulf %190, %168 : vector<16x256xf32>
    %192 = math.exp %191 : vector<16x256xf32>
    %193 = arith.mulf %188, %192 : vector<16x256xf32>
    %cst_104 = arith.constant 1.000000e+00 : f32
    %194 = vector.broadcast %cst_104 : f32 to vector<16x256xf32>
    %195 = arith.subf %194, %193 : vector<16x256xf32>
    %196 = arith.mulf %167, %195 : vector<16x256xf32>
    %cst_105 = arith.constant 1.000000e+00 : f32
    %197 = vector.broadcast %cst_105 : f32 to vector<16x256xf32>
    %198 = arith.addf %197, %196 : vector<16x256xf32>
    %199 = arith.mulf %160, %198 : vector<16x256xf32>
    %c0_106 = arith.constant 0 : index
    %c0_107 = arith.constant 0 : index
    %c0_108 = arith.constant 0 : index
    %200 = vector.load %arg18[%c0_106, %c0_107, %c0_108] : memref<2x256x64xf32, #tpu.memory_space<vmem>>, vector<1x256x64xf32>
    %201 = vector.shape_cast %200 : vector<1x256x64xf32> to vector<256x64xf32>
    %cst_109 = arith.constant dense<0.000000e+00> : vector<16x64xf32>
    %202 = tpu.matmul %199, %201, %cst_109 {dimension_numbers = #tpu.dot_dimension_numbers<[1], [0], [0], [1], [0, 0, 1, 1], [], []>} : vector<16x256xf32>, vector<256x64xf32>, vector<16x64xf32> -> vector<16x64xf32>
    %c0_110 = arith.constant 0 : index
    %c0_111 = arith.constant 0 : index
    %c0_112 = arith.constant 0 : index
    %203 = vector.load %arg19[%c0_110, %c0_111, %c0_112] : memref<2x1x64xf32, #tpu.memory_space<vmem>>, vector<1x1x64xf32>
    %204 = vector.shape_cast %203 : vector<1x1x64xf32> to vector<1x64xf32>
    %205 = vector.broadcast %204 : vector<1x64xf32> to vector<16x64xf32>
    %206 = arith.addf %202, %205 : vector<16x64xf32>
    %207 = arith.addf %125, %206 : vector<16x64xf32>
    %c1_113 = arith.constant 1 : index
    %c0_114 = arith.constant 0 : index
    %c0_115 = arith.constant 0 : index
    %208 = vector.load %arg8[%c1_113, %c0_114, %c0_115] : memref<2x1x64xf32, #tpu.memory_space<vmem>>, vector<1x1x64xf32>
    %209 = vector.shape_cast %208 : vector<1x1x64xf32> to vector<1x64xf32>
    %c1_116 = arith.constant 1 : index
    %c0_117 = arith.constant 0 : index
    %c0_118 = arith.constant 0 : index
    %210 = vector.load %arg9[%c1_116, %c0_117, %c0_118] : memref<2x1x64xf32, #tpu.memory_space<vmem>>, vector<1x1x64xf32>
    %211 = vector.shape_cast %210 : vector<1x1x64xf32> to vector<1x64xf32>
    %cst_119 = arith.constant dense<0.000000e+00> : vector<16xf32>
    %212 = vector.multi_reduction <add>, %207, %cst_119 [1] : vector<16x64xf32> to vector<16xf32>
    %213 = vector.shape_cast %212 : vector<16xf32> to vector<16x1xf32>
    %cst_120 = arith.constant 6.400000e+01 : f32
    %214 = vector.broadcast %cst_120 : f32 to vector<16x1xf32>
    %215 = arith.divf %213, %214 : vector<16x1xf32>
    %216 = vector.broadcast %215 : vector<16x1xf32> to vector<16x64xf32>
    %217 = arith.subf %207, %216 : vector<16x64xf32>
    %218 = arith.mulf %217, %217 : vector<16x64xf32>
    %cst_121 = arith.constant dense<0.000000e+00> : vector<16xf32>
    %219 = vector.multi_reduction <add>, %218, %cst_121 [1] : vector<16x64xf32> to vector<16xf32>
    %220 = vector.shape_cast %219 : vector<16xf32> to vector<16x1xf32>
    %cst_122 = arith.constant 6.400000e+01 : f32
    %221 = vector.broadcast %cst_122 : f32 to vector<16x1xf32>
    %222 = arith.divf %220, %221 : vector<16x1xf32>
    %223 = vector.broadcast %215 : vector<16x1xf32> to vector<16x64xf32>
    %224 = arith.subf %207, %223 : vector<16x64xf32>
    %cst_123 = arith.constant 9.99999997E-7 : f32
    %225 = vector.broadcast %cst_123 : f32 to vector<16x1xf32>
    %226 = arith.addf %222, %225 : vector<16x1xf32>
    %227 = math.rsqrt %226 : vector<16x1xf32>
    %228 = vector.broadcast %227 : vector<16x1xf32> to vector<16x64xf32>
    %229 = arith.mulf %224, %228 : vector<16x64xf32>
    %230 = vector.broadcast %209 : vector<1x64xf32> to vector<16x64xf32>
    %231 = arith.mulf %229, %230 : vector<16x64xf32>
    %232 = vector.broadcast %211 : vector<1x64xf32> to vector<16x64xf32>
    %233 = arith.addf %231, %232 : vector<16x64xf32>
    %c1_124 = arith.constant 1 : index
    %c0_125 = arith.constant 0 : index
    %c0_126 = arith.constant 0 : index
    %234 = vector.load %arg10[%c1_124, %c0_125, %c0_126] : memref<2x64x192xf32, #tpu.memory_space<vmem>>, vector<1x64x192xf32>
    %235 = vector.shape_cast %234 : vector<1x64x192xf32> to vector<64x192xf32>
    %cst_127 = arith.constant dense<0.000000e+00> : vector<16x192xf32>
    %236 = tpu.matmul %233, %235, %cst_127 {dimension_numbers = #tpu.dot_dimension_numbers<[1], [0], [0], [1], [0, 0, 1, 1], [], []>} : vector<16x64xf32>, vector<64x192xf32>, vector<16x192xf32> -> vector<16x192xf32>
    %c1_128 = arith.constant 1 : index
    %c0_129 = arith.constant 0 : index
    %c0_130 = arith.constant 0 : index
    %237 = vector.load %arg11[%c1_128, %c0_129, %c0_130] : memref<2x1x192xf32, #tpu.memory_space<vmem>>, vector<1x1x192xf32>
    %238 = vector.shape_cast %237 : vector<1x1x192xf32> to vector<1x192xf32>
    %239 = vector.broadcast %238 : vector<1x192xf32> to vector<16x192xf32>
    %240 = arith.addf %236, %239 : vector<16x192xf32>
    %241 = vector.extract_strided_slice %240 {offsets = [0, 0], sizes = [16, 64], strides = [1, 1]} : vector<16x192xf32> to vector<16x64xf32>
    %cst_131 = arith.constant 0.176776692 : f32
    %242 = vector.broadcast %cst_131 : f32 to vector<16x64xf32>
    %243 = arith.mulf %241, %242 : vector<16x64xf32>
    %244 = vector.shape_cast %243 : vector<16x64xf32> to vector<2x8x64xf32>
    %245 = vector.extract_strided_slice %240 {offsets = [0, 64], sizes = [16, 64], strides = [1, 1]} : vector<16x192xf32> to vector<16x64xf32>
    %246 = vector.shape_cast %245 : vector<16x64xf32> to vector<2x8x64xf32>
    %247 = vector.extract_strided_slice %240 {offsets = [0, 128], sizes = [16, 64], strides = [1, 1]} : vector<16x192xf32> to vector<16x64xf32>
    %248 = vector.shape_cast %247 : vector<16x64xf32> to vector<2x8x64xf32>
    %249 = vector.extract_strided_slice %244 {offsets = [0, 0, 0], sizes = [2, 8, 32], strides = [1, 1, 1]} : vector<2x8x64xf32> to vector<2x8x32xf32>
    %250 = vector.extract_strided_slice %246 {offsets = [0, 0, 0], sizes = [2, 8, 32], strides = [1, 1, 1]} : vector<2x8x64xf32> to vector<2x8x32xf32>
    "tpu.trace_start"() <{level = 10 : i32, message = "bqd,bkd->bqk"}> : () -> ()
    %cst_132 = arith.constant dense<0.000000e+00> : vector<2x8x8xf32>
    %251 = tpu.matmul %249, %250, %cst_132 {dimension_numbers = #tpu.dot_dimension_numbers<[2], [2], [1], [1], [0, 0, 0, 1, 1, 1], [0], [0]>} : vector<2x8x32xf32>, vector<2x8x32xf32>, vector<2x8x8xf32> -> vector<2x8x8xf32>
    "tpu.trace_stop"() : () -> ()
    %252 = vector.broadcast %38 : vector<1x1x8xf32> to vector<2x8x8xf32>
    %253 = arith.addf %251, %252 : vector<2x8x8xf32>
    %cst_133 = arith.constant dense<0xFF800000> : vector<2x8xf32>
    %254 = vector.multi_reduction <maximumf>, %253, %cst_133 [2] : vector<2x8x8xf32> to vector<2x8xf32>
    %255 = vector.shape_cast %254 : vector<2x8xf32> to vector<2x8x1xf32>
    %256 = vector.broadcast %255 : vector<2x8x1xf32> to vector<2x8x8xf32>
    %257 = arith.subf %253, %256 : vector<2x8x8xf32>
    %258 = math.exp %257 : vector<2x8x8xf32>
    %cst_134 = arith.constant dense<0.000000e+00> : vector<2x8xf32>
    %259 = vector.multi_reduction <add>, %258, %cst_134 [2] : vector<2x8x8xf32> to vector<2x8xf32>
    %260 = vector.shape_cast %259 : vector<2x8xf32> to vector<2x8x1xf32>
    %261 = tpu.reciprocal %260 {approx = true} : vector<2x8x1xf32> -> vector<2x8x1xf32>
    %262 = vector.broadcast %261 : vector<2x8x1xf32> to vector<2x8x8xf32>
    %263 = arith.mulf %258, %262 : vector<2x8x8xf32>
    %264 = vector.extract_strided_slice %248 {offsets = [0, 0, 0], sizes = [2, 8, 32], strides = [1, 1, 1]} : vector<2x8x64xf32> to vector<2x8x32xf32>
    "tpu.trace_start"() <{level = 10 : i32, message = "bqk,bkd->bqd"}> : () -> ()
    %cst_135 = arith.constant dense<0.000000e+00> : vector<2x8x32xf32>
    %265 = tpu.matmul %263, %264, %cst_135 {dimension_numbers = #tpu.dot_dimension_numbers<[2], [1], [1], [2], [0, 0, 0, 1, 1, 2], [0], [0]>} : vector<2x8x8xf32>, vector<2x8x32xf32>, vector<2x8x32xf32> -> vector<2x8x32xf32>
    "tpu.trace_stop"() : () -> ()
    %c0_136 = arith.constant 0 : index
    %c0_137 = arith.constant 0 : index
    %c0_138 = arith.constant 0 : index
    %266 = vector.load %arg25[%c0_136, %c0_137, %c0_138] : memref<2x8x64xf32, #tpu.memory_space<vmem>>, vector<2x8x32xf32>
    tpu.vector_store %arg25[%c0_136, %c0_137, %c0_138], %265 {strides = array<i32>} : memref<2x8x64xf32, #tpu.memory_space<vmem>>, vector<2x8x32xf32>,
    %267 = vector.extract_strided_slice %244 {offsets = [0, 0, 32], sizes = [2, 8, 32], strides = [1, 1, 1]} : vector<2x8x64xf32> to vector<2x8x32xf32>
    %268 = vector.extract_strided_slice %246 {offsets = [0, 0, 32], sizes = [2, 8, 32], strides = [1, 1, 1]} : vector<2x8x64xf32> to vector<2x8x32xf32>
    "tpu.trace_start"() <{level = 10 : i32, message = "bqd,bkd->bqk"}> : () -> ()
    %cst_139 = arith.constant dense<0.000000e+00> : vector<2x8x8xf32>
    %269 = tpu.matmul %267, %268, %cst_139 {dimension_numbers = #tpu.dot_dimension_numbers<[2], [2], [1], [1], [0, 0, 0, 1, 1, 1], [0], [0]>} : vector<2x8x32xf32>, vector<2x8x32xf32>, vector<2x8x8xf32> -> vector<2x8x8xf32>
    "tpu.trace_stop"() : () -> ()
    %270 = vector.broadcast %38 : vector<1x1x8xf32> to vector<2x8x8xf32>
    %271 = arith.addf %269, %270 : vector<2x8x8xf32>
    %cst_140 = arith.constant dense<0xFF800000> : vector<2x8xf32>
    %272 = vector.multi_reduction <maximumf>, %271, %cst_140 [2] : vector<2x8x8xf32> to vector<2x8xf32>
    %273 = vector.shape_cast %272 : vector<2x8xf32> to vector<2x8x1xf32>
    %274 = vector.broadcast %273 : vector<2x8x1xf32> to vector<2x8x8xf32>
    %275 = arith.subf %271, %274 : vector<2x8x8xf32>
    %276 = math.exp %275 : vector<2x8x8xf32>
    %cst_141 = arith.constant dense<0.000000e+00> : vector<2x8xf32>
    %277 = vector.multi_reduction <add>, %276, %cst_141 [2] : vector<2x8x8xf32> to vector<2x8xf32>
    %278 = vector.shape_cast %277 : vector<2x8xf32> to vector<2x8x1xf32>
    %279 = tpu.reciprocal %278 {approx = true} : vector<2x8x1xf32> -> vector<2x8x1xf32>
    %280 = vector.broadcast %279 : vector<2x8x1xf32> to vector<2x8x8xf32>
    %281 = arith.mulf %276, %280 : vector<2x8x8xf32>
    %282 = vector.extract_strided_slice %248 {offsets = [0, 0, 32], sizes = [2, 8, 32], strides = [1, 1, 1]} : vector<2x8x64xf32> to vector<2x8x32xf32>
    "tpu.trace_start"() <{level = 10 : i32, message = "bqk,bkd->bqd"}> : () -> ()
    %cst_142 = arith.constant dense<0.000000e+00> : vector<2x8x32xf32>
    %283 = tpu.matmul %281, %282, %cst_142 {dimension_numbers = #tpu.dot_dimension_numbers<[2], [1], [1], [2], [0, 0, 0, 1, 1, 2], [0], [0]>} : vector<2x8x8xf32>, vector<2x8x32xf32>, vector<2x8x32xf32> -> vector<2x8x32xf32>
    "tpu.trace_stop"() : () -> ()
    %c0_143 = arith.constant 0 : index
    %c0_144 = arith.constant 0 : index
    %c32_145 = arith.constant 32 : index
    %284 = vector.load %arg25[%c0_143, %c0_144, %c32_145] : memref<2x8x64xf32, #tpu.memory_space<vmem>>, vector<2x8x32xf32>
    tpu.vector_store %arg25[%c0_143, %c0_144, %c32_145], %283 {strides = array<i32>} : memref<2x8x64xf32, #tpu.memory_space<vmem>>, vector<2x8x32xf32>,
    %c0_146 = arith.constant 0 : index
    %c0_147 = arith.constant 0 : index
    %c0_148 = arith.constant 0 : index
    %285 = vector.load %arg25[%c0_146, %c0_147, %c0_148] : memref<2x8x64xf32, #tpu.memory_space<vmem>>, vector<2x8x64xf32>
    %286 = vector.shape_cast %285 : vector<2x8x64xf32> to vector<16x64xf32>
    %c1_149 = arith.constant 1 : index
    %c0_150 = arith.constant 0 : index
    %c0_151 = arith.constant 0 : index
    %287 = vector.load %arg12[%c1_149, %c0_150, %c0_151] : memref<2x64x64xf32, #tpu.memory_space<vmem>>, vector<1x64x64xf32>
    %288 = vector.shape_cast %287 : vector<1x64x64xf32> to vector<64x64xf32>
    %cst_152 = arith.constant dense<0.000000e+00> : vector<16x64xf32>
    %289 = tpu.matmul %286, %288, %cst_152 {dimension_numbers = #tpu.dot_dimension_numbers<[1], [0], [0], [1], [0, 0, 1, 1], [], []>} : vector<16x64xf32>, vector<64x64xf32>, vector<16x64xf32> -> vector<16x64xf32>
    %c1_153 = arith.constant 1 : index
    %c0_154 = arith.constant 0 : index
    %c0_155 = arith.constant 0 : index
    %290 = vector.load %arg13[%c1_153, %c0_154, %c0_155] : memref<2x1x64xf32, #tpu.memory_space<vmem>>, vector<1x1x64xf32>
    %291 = vector.shape_cast %290 : vector<1x1x64xf32> to vector<1x64xf32>
    %292 = vector.broadcast %291 : vector<1x64xf32> to vector<16x64xf32>
    %293 = arith.addf %289, %292 : vector<16x64xf32>
    %294 = arith.addf %207, %293 : vector<16x64xf32>
    %c1_156 = arith.constant 1 : index
    %c0_157 = arith.constant 0 : index
    %c0_158 = arith.constant 0 : index
    %295 = vector.load %arg14[%c1_156, %c0_157, %c0_158] : memref<2x1x64xf32, #tpu.memory_space<vmem>>, vector<1x1x64xf32>
    %296 = vector.shape_cast %295 : vector<1x1x64xf32> to vector<1x64xf32>
    %c1_159 = arith.constant 1 : index
    %c0_160 = arith.constant 0 : index
    %c0_161 = arith.constant 0 : index
    %297 = vector.load %arg15[%c1_159, %c0_160, %c0_161] : memref<2x1x64xf32, #tpu.memory_space<vmem>>, vector<1x1x64xf32>
    %298 = vector.shape_cast %297 : vector<1x1x64xf32> to vector<1x64xf32>
    %cst_162 = arith.constant dense<0.000000e+00> : vector<16xf32>
    %299 = vector.multi_reduction <add>, %294, %cst_162 [1] : vector<16x64xf32> to vector<16xf32>
    %300 = vector.shape_cast %299 : vector<16xf32> to vector<16x1xf32>
    %cst_163 = arith.constant 6.400000e+01 : f32
    %301 = vector.broadcast %cst_163 : f32 to vector<16x1xf32>
    %302 = arith.divf %300, %301 : vector<16x1xf32>
    %303 = vector.broadcast %302 : vector<16x1xf32> to vector<16x64xf32>
    %304 = arith.subf %294, %303 : vector<16x64xf32>
    %305 = arith.mulf %304, %304 : vector<16x64xf32>
    %cst_164 = arith.constant dense<0.000000e+00> : vector<16xf32>
    %306 = vector.multi_reduction <add>, %305, %cst_164 [1] : vector<16x64xf32> to vector<16xf32>
    %307 = vector.shape_cast %306 : vector<16xf32> to vector<16x1xf32>
    %cst_165 = arith.constant 6.400000e+01 : f32
    %308 = vector.broadcast %cst_165 : f32 to vector<16x1xf32>
    %309 = arith.divf %307, %308 : vector<16x1xf32>
    %310 = vector.broadcast %302 : vector<16x1xf32> to vector<16x64xf32>
    %311 = arith.subf %294, %310 : vector<16x64xf32>
    %cst_166 = arith.constant 9.99999997E-7 : f32
    %312 = vector.broadcast %cst_166 : f32 to vector<16x1xf32>
    %313 = arith.addf %309, %312 : vector<16x1xf32>
    %314 = math.rsqrt %313 : vector<16x1xf32>
    %315 = vector.broadcast %314 : vector<16x1xf32> to vector<16x64xf32>
    %316 = arith.mulf %311, %315 : vector<16x64xf32>
    %317 = vector.broadcast %296 : vector<1x64xf32> to vector<16x64xf32>
    %318 = arith.mulf %316, %317 : vector<16x64xf32>
    %319 = vector.broadcast %298 : vector<1x64xf32> to vector<16x64xf32>
    %320 = arith.addf %318, %319 : vector<16x64xf32>
    %c1_167 = arith.constant 1 : index
    %c0_168 = arith.constant 0 : index
    %c0_169 = arith.constant 0 : index
    %321 = vector.load %arg16[%c1_167, %c0_168, %c0_169] : memref<2x64x256xf32, #tpu.memory_space<vmem>>, vector<1x64x256xf32>
    %322 = vector.shape_cast %321 : vector<1x64x256xf32> to vector<64x256xf32>
    %cst_170 = arith.constant dense<0.000000e+00> : vector<16x256xf32>
    %323 = tpu.matmul %320, %322, %cst_170 {dimension_numbers = #tpu.dot_dimension_numbers<[1], [0], [0], [1], [0, 0, 1, 1], [], []>} : vector<16x64xf32>, vector<64x256xf32>, vector<16x256xf32> -> vector<16x256xf32>
    %c1_171 = arith.constant 1 : index
    %c0_172 = arith.constant 0 : index
    %c0_173 = arith.constant 0 : index
    %324 = vector.load %arg17[%c1_171, %c0_172, %c0_173] : memref<2x1x256xf32, #tpu.memory_space<vmem>>, vector<1x1x256xf32>
    %325 = vector.shape_cast %324 : vector<1x1x256xf32> to vector<1x256xf32>
    %326 = vector.broadcast %325 : vector<1x256xf32> to vector<16x256xf32>
    %327 = arith.addf %323, %326 : vector<16x256xf32>
    %cst_174 = arith.constant 5.000000e-01 : f32
    %328 = vector.broadcast %cst_174 : f32 to vector<16x256xf32>
    %329 = arith.mulf %328, %327 : vector<16x256xf32>
    %cst_175 = arith.constant 0.707106769 : f32
    %330 = vector.broadcast %cst_175 : f32 to vector<16x256xf32>
    %331 = arith.mulf %327, %330 : vector<16x256xf32>
    %cst_176 = arith.constant 0.000000e+00 : f32
    %332 = vector.broadcast %cst_176 : f32 to vector<16x256xf32>
    %333 = arith.cmpf oge, %331, %332 : vector<16x256xf32>
    %cst_177 = arith.constant 1.000000e+00 : f32
    %cst_178 = arith.constant -1.000000e+00 : f32
    %334 = vector.broadcast %cst_177 : f32 to vector<16x256xf32>
    %335 = vector.broadcast %cst_178 : f32 to vector<16x256xf32>
    %336 = arith.select %333, %334, %335 : vector<16x256xi1>, vector<16x256xf32>
    %337 = math.absf %331 : vector<16x256xf32>
    %cst_179 = arith.constant 0.327591091 : f32
    %338 = vector.broadcast %cst_179 : f32 to vector<16x256xf32>
    %339 = arith.mulf %338, %337 : vector<16x256xf32>
    %cst_180 = arith.constant 1.000000e+00 : f32
    %340 = vector.broadcast %cst_180 : f32 to vector<16x256xf32>
    %341 = arith.addf %340, %339 : vector<16x256xf32>
    %cst_181 = arith.constant 1.000000e+00 : f32
    %342 = vector.broadcast %cst_181 : f32 to vector<16x256xf32>
    %343 = arith.divf %342, %341 : vector<16x256xf32>
    %cst_182 = arith.constant 1.06140542 : f32
    %344 = vector.broadcast %cst_182 : f32 to vector<16x256xf32>
    %345 = arith.mulf %344, %343 : vector<16x256xf32>
    %cst_183 = arith.constant -1.45315206 : f32
    %346 = vector.broadcast %cst_183 : f32 to vector<16x256xf32>
    %347 = arith.addf %345, %346 : vector<16x256xf32>
    %348 = arith.mulf %347, %343 : vector<16x256xf32>
    %cst_184 = arith.constant 1.42141378 : f32
    %349 = vector.broadcast %cst_184 : f32 to vector<16x256xf32>
    %350 = arith.addf %348, %349 : vector<16x256xf32>
    %351 = arith.mulf %350, %343 : vector<16x256xf32>
    %cst_185 = arith.constant -0.284496725 : f32
    %352 = vector.broadcast %cst_185 : f32 to vector<16x256xf32>
    %353 = arith.addf %351, %352 : vector<16x256xf32>
    %354 = arith.mulf %353, %343 : vector<16x256xf32>
    %cst_186 = arith.constant 0.254829586 : f32
    %355 = vector.broadcast %cst_186 : f32 to vector<16x256xf32>
    %356 = arith.addf %354, %355 : vector<16x256xf32>
    %357 = arith.mulf %356, %343 : vector<16x256xf32>
    %cst_187 = arith.constant 0.000000e+00 : f32
    %358 = vector.broadcast %cst_187 : f32 to vector<16x256xf32>
    %359 = arith.subf %358, %337 : vector<16x256xf32>
    %360 = arith.mulf %359, %337 : vector<16x256xf32>
    %361 = math.exp %360 : vector<16x256xf32>
    %362 = arith.mulf %357, %361 : vector<16x256xf32>
    %cst_188 = arith.constant 1.000000e+00 : f32
    %363 = vector.broadcast %cst_188 : f32 to vector<16x256xf32>
    %364 = arith.subf %363, %362 : vector<16x256xf32>
    %365 = arith.mulf %336, %364 : vector<16x256xf32>
    %cst_189 = arith.constant 1.000000e+00 : f32
    %366 = vector.broadcast %cst_189 : f32 to vector<16x256xf32>
    %367 = arith.addf %366, %365 : vector<16x256xf32>
    %368 = arith.mulf %329, %367 : vector<16x256xf32>
    %c1_190 = arith.constant 1 : index
    %c0_191 = arith.constant 0 : index
    %c0_192 = arith.constant 0 : index
    %369 = vector.load %arg18[%c1_190, %c0_191, %c0_192] : memref<2x256x64xf32, #tpu.memory_space<vmem>>, vector<1x256x64xf32>
    %370 = vector.shape_cast %369 : vector<1x256x64xf32> to vector<256x64xf32>
    %cst_193 = arith.constant dense<0.000000e+00> : vector<16x64xf32>
    %371 = tpu.matmul %368, %370, %cst_193 {dimension_numbers = #tpu.dot_dimension_numbers<[1], [0], [0], [1], [0, 0, 1, 1], [], []>} : vector<16x256xf32>, vector<256x64xf32>, vector<16x64xf32> -> vector<16x64xf32>
    %c1_194 = arith.constant 1 : index
    %c0_195 = arith.constant 0 : index
    %c0_196 = arith.constant 0 : index
    %372 = vector.load %arg19[%c1_194, %c0_195, %c0_196] : memref<2x1x64xf32, #tpu.memory_space<vmem>>, vector<1x1x64xf32>
    %373 = vector.shape_cast %372 : vector<1x1x64xf32> to vector<1x64xf32>
    %374 = vector.broadcast %373 : vector<1x64xf32> to vector<16x64xf32>
    %375 = arith.addf %371, %374 : vector<16x64xf32>
    %376 = arith.addf %294, %375 : vector<16x64xf32>
    %c0_197 = arith.constant 0 : index
    %c0_198 = arith.constant 0 : index
    %377 = vector.load %arg20[%c0_197, %c0_198] : memref<1x64xf32, #tpu.memory_space<vmem>>, vector<1x64xf32>
    %c0_199 = arith.constant 0 : index
    %c0_200 = arith.constant 0 : index
    %378 = vector.load %arg21[%c0_199, %c0_200] : memref<1x64xf32, #tpu.memory_space<vmem>>, vector<1x64xf32>
    %cst_201 = arith.constant dense<0.000000e+00> : vector<16xf32>
    %379 = vector.multi_reduction <add>, %376, %cst_201 [1] : vector<16x64xf32> to vector<16xf32>
    %380 = vector.shape_cast %379 : vector<16xf32> to vector<16x1xf32>
    %cst_202 = arith.constant 6.400000e+01 : f32
    %381 = vector.broadcast %cst_202 : f32 to vector<16x1xf32>
    %382 = arith.divf %380, %381 : vector<16x1xf32>
    %383 = vector.broadcast %382 : vector<16x1xf32> to vector<16x64xf32>
    %384 = arith.subf %376, %383 : vector<16x64xf32>
    %385 = arith.mulf %384, %384 : vector<16x64xf32>
    %cst_203 = arith.constant dense<0.000000e+00> : vector<16xf32>
    %386 = vector.multi_reduction <add>, %385, %cst_203 [1] : vector<16x64xf32> to vector<16xf32>
    %387 = vector.shape_cast %386 : vector<16xf32> to vector<16x1xf32>
    %cst_204 = arith.constant 6.400000e+01 : f32
    %388 = vector.broadcast %cst_204 : f32 to vector<16x1xf32>
    %389 = arith.divf %387, %388 : vector<16x1xf32>
    %390 = vector.broadcast %382 : vector<16x1xf32> to vector<16x64xf32>
    %391 = arith.subf %376, %390 : vector<16x64xf32>
    %cst_205 = arith.constant 9.99999997E-7 : f32
    %392 = vector.broadcast %cst_205 : f32 to vector<16x1xf32>
    %393 = arith.addf %389, %392 : vector<16x1xf32>
    %394 = math.rsqrt %393 : vector<16x1xf32>
    %395 = vector.broadcast %394 : vector<16x1xf32> to vector<16x64xf32>
    %396 = arith.mulf %391, %395 : vector<16x64xf32>
    %397 = vector.broadcast %377 : vector<1x64xf32> to vector<16x64xf32>
    %398 = arith.mulf %396, %397 : vector<16x64xf32>
    %399 = vector.broadcast %378 : vector<1x64xf32> to vector<16x64xf32>
    %400 = arith.addf %398, %399 : vector<16x64xf32>
    %c0_206 = arith.constant 0 : index
    %c0_207 = arith.constant 0 : index
    %401 = vector.load %arg22[%c0_206, %c0_207] : memref<64x64xf32, #tpu.memory_space<vmem>>, vector<64x64xf32>
    %cst_208 = arith.constant dense<0.000000e+00> : vector<16x64xf32>
    %402 = tpu.matmul %400, %401, %cst_208 {dimension_numbers = #tpu.dot_dimension_numbers<[1], [0], [0], [1], [0, 0, 1, 1], [], []>} : vector<16x64xf32>, vector<64x64xf32>, vector<16x64xf32> -> vector<16x64xf32>
    %c0_209 = arith.constant 0 : index
    %c0_210 = arith.constant 0 : index
    %403 = vector.load %arg23[%c0_209, %c0_210] : memref<1x64xf32, #tpu.memory_space<vmem>>, vector<1x64xf32>
    %404 = vector.broadcast %403 : vector<1x64xf32> to vector<16x64xf32>
    %405 = arith.addf %402, %404 : vector<16x64xf32>
    %c0_211 = arith.constant 0 : index
    %c0_212 = arith.constant 0 : index
    %406 = vector.load %arg24[%c0_211, %c0_212] : memref<16x64xf32, #tpu.memory_space<vmem>>, vector<16x64xf32>
    tpu.vector_store %arg24[%c0_211, %c0_212], %405 {strides = array<i32>} : memref<16x64xf32, #tpu.memory_space<vmem>>, vector<16x64xf32>,
    return
  }
  func.func @transform_0(%arg0: i32) -> (i32, i32) {
    %c0_i32 = arith.constant 0 : i32
    %c0_i32_0 = arith.constant 0 : i32
    %c0_i32_1 = arith.constant 0 : i32
    return %c0_i32, %c0_i32_0 : i32, i32
  }
  func.func @transform_1(%arg0: i32) -> (i32, i32) {
    %c0_i32 = arith.constant 0 : i32
    %c0_i32_0 = arith.constant 0 : i32
    %c0_i32_1 = arith.constant 0 : i32
    return %c0_i32, %c0_i32_0 : i32, i32
  }
  func.func @transform_2(%arg0: i32) -> (i32, i32) {
    %c0_i32 = arith.constant 0 : i32
    %c0_i32_0 = arith.constant 0 : i32
    %c0_i32_1 = arith.constant 0 : i32
    return %c0_i32, %c0_i32_0 : i32, i32
  }
  func.func @transform_3(%arg0: i32) -> (i32, i32) {
    %c0_i32 = arith.constant 0 : i32
    %c0_i32_0 = arith.constant 0 : i32
    %c0_i32_1 = arith.constant 0 : i32
    return %c0_i32, %c0_i32_0 : i32, i32
  }
  func.func @transform_4(%arg0: i32) -> (i32, i32) {
    %c0_i32 = arith.constant 0 : i32
    %c0_i32_0 = arith.constant 0 : i32
    %c0_i32_1 = arith.constant 0 : i32
    return %c0_i32, %c0_i32_0 : i32, i32
  }
  func.func @transform_5(%arg0: i32) -> (i32, i32) {
    %c0_i32 = arith.constant 0 : i32
    %c0_i32_0 = arith.constant 0 : i32
    %c0_i32_1 = arith.constant 0 : i32
    return %c0_i32, %c0_i32_0 : i32, i32
  }
  func.func @transform_6(%arg0: i32) -> (i32, i32) {
    %c0_i32 = arith.constant 0 : i32
    %c0_i32_0 = arith.constant 0 : i32
    %c0_i32_1 = arith.constant 0 : i32
    return %c0_i32, %c0_i32_0 : i32, i32
  }
  func.func @transform_7(%arg0: i32) -> (i32, i32, i32) {
    %c0_i32 = arith.constant 0 : i32
    %c0_i32_0 = arith.constant 0 : i32
    %c0_i32_1 = arith.constant 0 : i32
    %c0_i32_2 = arith.constant 0 : i32
    return %c0_i32, %c0_i32_0, %c0_i32_1 : i32, i32, i32
  }
  func.func @transform_8(%arg0: i32) -> (i32, i32, i32) {
    %c0_i32 = arith.constant 0 : i32
    %c0_i32_0 = arith.constant 0 : i32
    %c0_i32_1 = arith.constant 0 : i32
    %c0_i32_2 = arith.constant 0 : i32
    return %c0_i32, %c0_i32_0, %c0_i32_1 : i32, i32, i32
  }
  func.func @transform_9(%arg0: i32) -> (i32, i32, i32) {
    %c0_i32 = arith.constant 0 : i32
    %c0_i32_0 = arith.constant 0 : i32
    %c0_i32_1 = arith.constant 0 : i32
    %c0_i32_2 = arith.constant 0 : i32
    return %c0_i32, %c0_i32_0, %c0_i32_1 : i32, i32, i32
  }
  func.func @transform_10(%arg0: i32) -> (i32, i32, i32) {
    %c0_i32 = arith.constant 0 : i32
    %c0_i32_0 = arith.constant 0 : i32
    %c0_i32_1 = arith.constant 0 : i32
    %c0_i32_2 = arith.constant 0 : i32
    return %c0_i32, %c0_i32_0, %c0_i32_1 : i32, i32, i32
  }
  func.func @transform_11(%arg0: i32) -> (i32, i32, i32) {
    %c0_i32 = arith.constant 0 : i32
    %c0_i32_0 = arith.constant 0 : i32
    %c0_i32_1 = arith.constant 0 : i32
    %c0_i32_2 = arith.constant 0 : i32
    return %c0_i32, %c0_i32_0, %c0_i32_1 : i32, i32, i32
  }
  func.func @transform_12(%arg0: i32) -> (i32, i32, i32) {
    %c0_i32 = arith.constant 0 : i32
    %c0_i32_0 = arith.constant 0 : i32
    %c0_i32_1 = arith.constant 0 : i32
    %c0_i32_2 = arith.constant 0 : i32
    return %c0_i32, %c0_i32_0, %c0_i32_1 : i32, i32, i32
  }
  func.func @transform_13(%arg0: i32) -> (i32, i32, i32) {
    %c0_i32 = arith.constant 0 : i32
    %c0_i32_0 = arith.constant 0 : i32
    %c0_i32_1 = arith.constant 0 : i32
    %c0_i32_2 = arith.constant 0 : i32
    return %c0_i32, %c0_i32_0, %c0_i32_1 : i32, i32, i32
  }
  func.func @transform_14(%arg0: i32) -> (i32, i32, i32) {
    %c0_i32 = arith.constant 0 : i32
    %c0_i32_0 = arith.constant 0 : i32
    %c0_i32_1 = arith.constant 0 : i32
    %c0_i32_2 = arith.constant 0 : i32
    return %c0_i32, %c0_i32_0, %c0_i32_1 : i32, i32, i32
  }
  func.func @transform_15(%arg0: i32) -> (i32, i32, i32) {
    %c0_i32 = arith.constant 0 : i32
    %c0_i32_0 = arith.constant 0 : i32
    %c0_i32_1 = arith.constant 0 : i32
    %c0_i32_2 = arith.constant 0 : i32
    return %c0_i32, %c0_i32_0, %c0_i32_1 : i32, i32, i32
  }
  func.func @transform_16(%arg0: i32) -> (i32, i32, i32) {
    %c0_i32 = arith.constant 0 : i32
    %c0_i32_0 = arith.constant 0 : i32
    %c0_i32_1 = arith.constant 0 : i32
    %c0_i32_2 = arith.constant 0 : i32
    return %c0_i32, %c0_i32_0, %c0_i32_1 : i32, i32, i32
  }
  func.func @transform_17(%arg0: i32) -> (i32, i32, i32) {
    %c0_i32 = arith.constant 0 : i32
    %c0_i32_0 = arith.constant 0 : i32
    %c0_i32_1 = arith.constant 0 : i32
    %c0_i32_2 = arith.constant 0 : i32
    return %c0_i32, %c0_i32_0, %c0_i32_1 : i32, i32, i32
  }
  func.func @transform_18(%arg0: i32) -> (i32, i32, i32) {
    %c0_i32 = arith.constant 0 : i32
    %c0_i32_0 = arith.constant 0 : i32
    %c0_i32_1 = arith.constant 0 : i32
    %c0_i32_2 = arith.constant 0 : i32
    return %c0_i32, %c0_i32_0, %c0_i32_1 : i32, i32, i32
  }
  func.func @transform_19(%arg0: i32) -> (i32, i32) {
    %c0_i32 = arith.constant 0 : i32
    %c0_i32_0 = arith.constant 0 : i32
    %c0_i32_1 = arith.constant 0 : i32
    return %c0_i32, %c0_i32_0 : i32, i32
  }
  func.func @transform_20(%arg0: i32) -> (i32, i32) {
    %c0_i32 = arith.constant 0 : i32
    %c0_i32_0 = arith.constant 0 : i32
    %c0_i32_1 = arith.constant 0 : i32
    return %c0_i32, %c0_i32_0 : i32, i32
  }
  func.func @transform_21(%arg0: i32) -> (i32, i32) {
    %c0_i32 = arith.constant 0 : i32
    %c0_i32_0 = arith.constant 0 : i32
    %c0_i32_1 = arith.constant 0 : i32
    return %c0_i32, %c0_i32_0 : i32, i32
  }
  func.func @transform_22(%arg0: i32) -> (i32, i32) {
    %c0_i32 = arith.constant 0 : i32
    %c0_i32_0 = arith.constant 0 : i32
    %c0_i32_1 = arith.constant 0 : i32
    return %c0_i32, %c0_i32_0 : i32, i32
  }
  func.func @transform_23(%arg0: i32) -> (i32, i32) {
    %c0_i32 = arith.constant 0 : i32
    %c0_i32_0 = arith.constant 0 : i32
    %c0_i32_1 = arith.constant 0 : i32
    return %c0_i32, %c0_i32_0 : i32, i32
  }
}

</mosaic_0001>

<llo_original>
// kernel: _forward_core.1
$region0: #{_forward_core.1}
  #allocation0 [shape = 'u32[]', space=smem, size = 0x4, offset = 0x4, fixed_abs, tag = 'smem constant byte address 0x4 - core index']
  #allocation1 [shape = 'u32[144,128]{1,0:T(1,128)}', space=vmem, size = 0x12000, scoped, tag = 'internal scratch']
  #allocation2 [shape = 'f32[2,8,64]{2,1,0:T(8,128)}', space=vmem, size = 0x2000, scoped, tag = 'scratch operand']
  %s0 = inlined_call_operand.vmem [shape: f32[8,192], index: 0, kind: input, shape index: {}]
  %s1 = inlined_call_operand.vmem [shape: f32[8,1], index: 1, kind: input, shape index: {}]
  %s2 = inlined_call_operand.vmem [shape: f32[192,64], index: 2, kind: input, shape index: {}]
  %s3 = inlined_call_operand.vmem [shape: f32[1,64], index: 3, kind: input, shape index: {}]
  %s4 = inlined_call_operand.vmem [shape: f32[1,64], index: 4, kind: input, shape index: {}]
  %s5 = inlined_call_operand.vmem [shape: f32[1,64], index: 5, kind: input, shape index: {}]
  %s6 = inlined_call_operand.vmem [shape: f32[5,64], index: 6, kind: input, shape index: {}]
  %s7 = inlined_call_operand.vmem [shape: f32[2,1,64], index: 7, kind: input, shape index: {}]
  %s8 = inlined_call_operand.vmem [shape: f32[2,1,64], index: 8, kind: input, shape index: {}]
  %s9 = inlined_call_operand.vmem [shape: f32[2,64,192], index: 9, kind: input, shape index: {}]
  %s10 = inlined_call_operand.vmem [shape: f32[2,1,192], index: 10, kind: input, shape index: {}]
  %s11 = inlined_call_operand.vmem [shape: f32[2,64,64], index: 11, kind: input, shape index: {}]
  %s12 = inlined_call_operand.vmem [shape: f32[2,1,64], index: 12, kind: input, shape index: {}]
  %s13 = inlined_call_operand.vmem [shape: f32[2,1,64], index: 13, kind: input, shape index: {}]
  %s14 = inlined_call_operand.vmem [shape: f32[2,1,64], index: 14, kind: input, shape index: {}]
  %s15 = inlined_call_operand.vmem [shape: f32[2,64,256], index: 15, kind: input, shape index: {}]
  %s16 = inlined_call_operand.vmem [shape: f32[2,1,256], index: 16, kind: input, shape index: {}]
  %s17 = inlined_call_operand.vmem [shape: f32[2,256,64], index: 17, kind: input, shape index: {}]
  %s18 = inlined_call_operand.vmem [shape: f32[2,1,64], index: 18, kind: input, shape index: {}]
  %s19 = inlined_call_operand.vmem [shape: f32[1,64], index: 19, kind: input, shape index: {}]
  %s20 = inlined_call_operand.vmem [shape: f32[1,64], index: 20, kind: input, shape index: {}]
  %s21 = inlined_call_operand.vmem [shape: f32[64,64], index: 21, kind: input, shape index: {}]
  %s22 = inlined_call_operand.vmem [shape: f32[1,64], index: 22, kind: input, shape index: {}]
  %s23 = inlined_call_operand.hbm [shape: f32[16,64], index: 23, kind: output, shape index: {}]
  %s24 = sld [smem:[#allocation0]]
  $region102: #{_forward_core.1} parent=0
    _
  %s26 = ssub.s32 1, %s24
  %s27 = scalar_select 0, %s26, %s24
  $region1: #{_forward_core.1} parent=0
    #allocation3 [shape = 'u8[8192]{0}', space=vmem, size = 0x2000, scoped, tag = 'output window, operand 0, single buffered']
    #allocation4 [shape = 's32[1]{0}', space=sflag, size = 0x4, scoped, tag = 'scoped memory for _forward_core.1']
    %28 = vsyncpa [#allocation4], 0
    // Predicated region
    $region2: #{_forward_core.1} parent=1 // pred_check
      _
    $region3: #{_forward_core.1} parent=1 // pred_check_branch
      %30 = sbr.rel (0) target = $region5
    $region4: #{_forward_core.1} parent=1 // pred_region
      _
    $region5: #{_forward_core.1} parent=1 // pred_fallthru
      _
    // Predicated region
    $region6: #{_forward_core.1} parent=1 // pred_check
      _
    $region7: #{_forward_core.1} parent=1 // pred_check_branch
      %32 = sbr.rel (0) target = $region9
    $region8: #{_forward_core.1} parent=1 // pred_region
      _
    $region9: #{_forward_core.1} parent=1 // pred_fallthru
      _
    // Predicated region
    $region10: #{_forward_core.1} parent=1 // pred_check
      _
    $region11: #{_forward_core.1} parent=1 // pred_check_branch
      %34 = sbr.rel (0) target = $region13
    $region12: #{_forward_core.1} parent=1 // pred_region
      _
    $region13: #{_forward_core.1} parent=1 // pred_fallthru
      _
    // Predicated region
    $region14: #{_forward_core.1} parent=1 // pred_check
      _
    $region15: #{_forward_core.1} parent=1 // pred_check_branch
      %36 = sbr.rel (0) target = $region17
    $region16: #{_forward_core.1} parent=1 // pred_region
      _
    $region17: #{_forward_core.1} parent=1 // pred_fallthru
      _
    // Predicated region
    $region18: #{_forward_core.1} parent=1 // pred_check
      _
    $region19: #{_forward_core.1} parent=1 // pred_check_branch
      %38 = sbr.rel (0) target = $region21
    $region20: #{_forward_core.1} parent=1 // pred_region
      _
    $region21: #{_forward_core.1} parent=1 // pred_fallthru
      _
    // Predicated region
    $region22: #{_forward_core.1} parent=1 // pred_check
      _
    $region23: #{_forward_core.1} parent=1 // pred_check_branch
      %40 = sbr.rel (0) target = $region25
    $region24: #{_forward_core.1} parent=1 // pred_region
      _
    $region25: #{_forward_core.1} parent=1 // pred_fallthru
      _
    // Predicated region
    $region26: #{_forward_core.1} parent=1 // pred_check
      _
    $region27: #{_forward_core.1} parent=1 // pred_check_branch
      %42 = sbr.rel (0) target = $region29
    $region28: #{_forward_core.1} parent=1 // pred_region
      _
    $region29: #{_forward_core.1} parent=1 // pred_fallthru
      _
    // Predicated region
    $region30: #{_forward_core.1} parent=1 // pred_check
      _
    $region31: #{_forward_core.1} parent=1 // pred_check_branch
      %44 = sbr.rel (0) target = $region33
    $region32: #{_forward_core.1} parent=1 // pred_region
      _
    $region33: #{_forward_core.1} parent=1 // pred_fallthru
      _
    // Predicated region
    $region34: #{_forward_core.1} parent=1 // pred_check
      _
    $region35: #{_forward_core.1} parent=1 // pred_check_branch
      %46 = sbr.rel (0) target = $region37
    $region36: #{_forward_core.1} parent=1 // pred_region
      _
    $region37: #{_forward_core.1} parent=1 // pred_fallthru
      _
    // Predicated region
    $region38: #{_forward_core.1} parent=1 // pred_check
      _
    $region39: #{_forward_core.1} parent=1 // pred_check_branch
      %48 = sbr.rel (0) target = $region41
    $region40: #{_forward_core.1} parent=1 // pred_region
      _
    $region41: #{_forward_core.1} parent=1 // pred_fallthru
      _
    // Predicated region
    $region42: #{_forward_core.1} parent=1 // pred_check
      _
    $region43: #{_forward_core.1} parent=1 // pred_check_branch
      %50 = sbr.rel (0) target = $region45
    $region44: #{_forward_core.1} parent=1 // pred_region
      _
    $region45: #{_forward_core.1} parent=1 // pred_fallthru
      _
    // Predicated region
    $region46: #{_forward_core.1} parent=1 // pred_check
      _
    $region47: #{_forward_core.1} parent=1 // pred_check_branch
      %52 = sbr.rel (0) target = $region49
    $region48: #{_forward_core.1} parent=1 // pred_region
      _
    $region49: #{_forward_core.1} parent=1 // pred_fallthru
      _
    // Predicated region
    $region50: #{_forward_core.1} parent=1 // pred_check
      _
    $region51: #{_forward_core.1} parent=1 // pred_check_branch
      %54 = sbr.rel (0) target = $region53
    $region52: #{_forward_core.1} parent=1 // pred_region
      _
    $region53: #{_forward_core.1} parent=1 // pred_fallthru
      _
    // Predicated region
    $region54: #{_forward_core.1} parent=1 // pred_check
      _
    $region55: #{_forward_core.1} parent=1 // pred_check_branch
      %56 = sbr.rel (0) target = $region57
    $region56: #{_forward_core.1} parent=1 // pred_region
      _
    $region57: #{_forward_core.1} parent=1 // pred_fallthru
      _
    // Predicated region
    $region58: #{_forward_core.1} parent=1 // pred_check
      _
    $region59: #{_forward_core.1} parent=1 // pred_check_branch
      %58 = sbr.rel (0) target = $region61
    $region60: #{_forward_core.1} parent=1 // pred_region
      _
    $region61: #{_forward_core.1} parent=1 // pred_fallthru
      _
    // Predicated region
    $region62: #{_forward_core.1} parent=1 // pred_check
      _
    $region63: #{_forward_core.1} parent=1 // pred_check_branch
      %60 = sbr.rel (0) target = $region65
    $region64: #{_forward_core.1} parent=1 // pred_region
      _
    $region65: #{_forward_core.1} parent=1 // pred_fallthru
      _
    // Predicated region
    $region66: #{_forward_core.1} parent=1 // pred_check
      _
    $region67: #{_forward_core.1} parent=1 // pred_check_branch
      %62 = sbr.rel (0) target = $region69
    $region68: #{_forward_core.1} parent=1 // pred_region
      _
    $region69: #{_forward_core.1} parent=1 // pred_fallthru
      _
    // Predicated region
    $region70: #{_forward_core.1} parent=1 // pred_check
      _
    $region71: #{_forward_core.1} parent=1 // pred_check_branch
      %64 = sbr.rel (0) target = $region73
    $region72: #{_forward_core.1} parent=1 // pred_region
      _
    $region73: #{_forward_core.1} parent=1 // pred_fallthru
      _
    // Predicated region
    $region74: #{_forward_core.1} parent=1 // pred_check
      _
    $region75: #{_forward_core.1} parent=1 // pred_check_branch
      %66 = sbr.rel (0) target = $region77
    $region76: #{_forward_core.1} parent=1 // pred_region
      _
    $region77: #{_forward_core.1} parent=1 // pred_fallthru
      _
    // Predicated region
    $region78: #{_forward_core.1} parent=1 // pred_check
      _
    $region79: #{_forward_core.1} parent=1 // pred_check_branch
      %68 = sbr.rel (0) target = $region81
    $region80: #{_forward_core.1} parent=1 // pred_region
      _
    $region81: #{_forward_core.1} parent=1 // pred_fallthru
      _
    // Predicated region
    $region82: #{_forward_core.1} parent=1 // pred_check
      _
    $region83: #{_forward_core.1} parent=1 // pred_check_branch
      %70 = sbr.rel (0) target = $region85
    $region84: #{_forward_core.1} parent=1 // pred_region
      _
    $region85: #{_forward_core.1} parent=1 // pred_fallthru
      _
    // Predicated region
    $region86: #{_forward_core.1} parent=1 // pred_check
      _
    $region87: #{_forward_core.1} parent=1 // pred_check_branch
      %72 = sbr.rel (0) target = $region89
    $region88: #{_forward_core.1} parent=1 // pred_region
      _
    $region89: #{_forward_core.1} parent=1 // pred_fallthru
      _
    // Predicated region
    $region90: #{_forward_core.1} parent=1 // pred_check
      _
    $region91: #{_forward_core.1} parent=1 // pred_check_branch
      %74 = sbr.rel (0) target = $region93
    $region92: #{_forward_core.1} parent=1 // pred_region
      _
    $region93: #{_forward_core.1} parent=1 // pred_fallthru
      _
    %v75 = vld [vmem:[%s0] sm:$0xff]
    %v76 = vld [vmem:[%s0 + $0x8] sm:$0xff]
    %v77 = vld [vmem:[%s2] sm:$0xff]
    %v78 = vld [vmem:[%s2 + $0x8] sm:$0xff]
    %v79 = vld [vmem:[%s2 + $0x10] sm:$0xff]
    %v80 = vld [vmem:[%s2 + $0x18] sm:$0xff]
    %v81 = vld [vmem:[%s2 + $0x20] sm:$0xff]
    %v82 = vld [vmem:[%s2 + $0x28] sm:$0xff]
    %v83 = vld [vmem:[%s2 + $0x30] sm:$0xff]
    %v84 = vld [vmem:[%s2 + $0x38] sm:$0xff]
    %v85 = vld [vmem:[%s2 + $0x40] sm:$0xff]
    %v86 = vld [vmem:[%s2 + $0x48] sm:$0xff]
    %v87 = vld [vmem:[%s2 + $0x50] sm:$0xff]
    %v88 = vld [vmem:[%s2 + $0x58] sm:$0xff]
    %v89 = vld [vmem:[%s2 + $0x60] sm:$0xff]
    %v90 = vld [vmem:[%s2 + $0x68] sm:$0xff]
    %v91 = vld [vmem:[%s2 + $0x70] sm:$0xff]
    %v92 = vld [vmem:[%s2 + $0x78] sm:$0xff]
    %v93 = vld [vmem:[%s2 + $0x80] sm:$0xff]
    %v94 = vld [vmem:[%s2 + $0x88] sm:$0xff]
    %v95 = vld [vmem:[%s2 + $0x90] sm:$0xff]
    %v96 = vld [vmem:[%s2 + $0x98] sm:$0xff]
    %v97 = vld [vmem:[%s2 + $0xa0] sm:$0xff]
    %v98 = vld [vmem:[%s2 + $0xa8] sm:$0xff]
    %v99 = vld [vmem:[%s2 + $0xb0] sm:$0xff]
    %v100 = vld [vmem:[%s2 + $0xb8] sm:$0xff]
    %v101 = vld [vmem:[%s3] sm:$0x1]
    %v103 = vlaneseq
    %v104 = vshrl.u32 %v103, 7
    %v105 = vsub.s32 0, %v104
    %v106 = vrot.slane %v101, %v105
    %vm108 = vcmask 523264
    %v110 = vsel %vm108, %v76, 0
    %112 = vmatprep.subr.mxu0 0.0
    %113 = vmatpush1.msra.mxu0 %v77
    %114 = vmatprep.subr.mxu0 0.0
    %115 = vmatpush1.msra.mxu0 %v78
    %116 = vmatprep.subr.mxu0 0.0
    %117 = vmatpush1.msra.mxu0 %v79
    %118 = vmatprep.subr.mxu0 0.0
    %119 = vmatpush1.msra.mxu0 %v80
    %120 = vmatprep.subr.mxu0 0.0
    %121 = vmatpush1.msra.mxu0 %v81
    %122 = vmatprep.subr.mxu0 0.0
    %123 = vmatpush1.msra.mxu0 %v82
    %124 = vmatprep.subr.mxu0 0.0
    %125 = vmatpush1.msra.mxu0 %v83
    %126 = vmatprep.subr.mxu0 0.0
    %127 = vmatpush1.msra.mxu0 %v84
    %128 = vmatprep.subr.mxu0 0.0
    %129 = vmatpush1.msra.mxu0 %v85
    %130 = vmatprep.subr.mxu0 0.0
    %131 = vmatpush1.msra.mxu0 %v86
    %132 = vmatprep.subr.mxu0 0.0
    %133 = vmatpush1.msra.mxu0 %v87
    %134 = vmatprep.subr.mxu0 0.0
    %135 = vmatpush1.msra.mxu0 %v88
    %136 = vmatprep.subr.mxu0 0.0
    %137 = vmatpush1.msra.mxu0 %v89
    %138 = vmatprep.subr.mxu0 0.0
    %139 = vmatpush1.msra.mxu0 %v90
    %140 = vmatprep.subr.mxu0 0.0
    %141 = vmatpush1.msra.mxu0 %v91
    %142 = vmatprep.subr.mxu0 0.0
    %143 = vmatpush1.msra.mxu0 %v92
    %144 = vmatprep.subr.mxu0 0.0
    %145 = vmatpush1.msra.mxu0 %v93
    %146 = vmatprep.subr.mxu0 0.0
    %147 = vmatpush1.msra.mxu0 %v94
    %148 = vmatprep.subr.mxu0 0.0
    %149 = vmatpush1.msra.mxu0 %v95
    %150 = vmatprep.subr.mxu0 0.0
    %151 = vmatpush1.msra.mxu0 %v96
    %152 = vmatprep.subr.mxu0 0.0
    %153 = vmatpush1.msra.mxu0 %v97
    %154 = vmatprep.subr.mxu0 0.0
    %155 = vmatpush1.msra.mxu0 %v98
    %156 = vmatprep.subr.mxu0 0.0
    %157 = vmatpush1.msra.mxu0 %v99
    %158 = vmatprep.subr.mxu0 0.0
    %159 = vmatpush1.msra.mxu0 %v100
    %160 = vmatprep.subr.mxu0 0.0
    %161 = vmatpush1.msra.mxu0 0.0
    %162 = vmatprep.subr.mxu0 0.0
    %163 = vmatpush1.msra.mxu0 0.0
    %164 = vmatprep.subr.mxu0 0.0
    %165 = vmatpush1.msra.mxu0 0.0
    %166 = vmatprep.subr.mxu0 0.0
    %167 = vmatpush1.msra.mxu0 0.0
    %168 = vmatprep.subr.mxu0 0.0
    %169 = vmatpush1.msra.mxu0 0.0
    %170 = vmatprep.subr.mxu0 0.0
    %171 = vmatpush1.msra.mxu0 0.0
    %172 = vmatprep.subr.mxu0 0.0
    %173 = vmatpush1.msra.mxu0 0.0
    %174 = vmatprep.subr.mxu0 0.0
    %175 = vmatpush1.msra.mxu0 0.0
    %176 = vmatprep.mubr.f32.mxu0 %v110
    %177 = vmatmul.mubr.f32.gmra.mrb[0].mxu0 %v75
    %v178 = vpop.f32.mrb[0].mxu0
    %v179 = vadd.f32 %v106, %v178
    %v180 = vpop.f32.mrb[0].mxu0
    %181 = vdwg.mxu0
    %v182 = vld [vmem:[%s1] sm:$0xff]
    %v183 = vsub.f32 1.0, %v182
    %185 = vset.pattern.permute.xlu0 0
    %186 = vperm.xlu0 %185, %v183
    %v187 = vpop.permute.xlu0 %186
    %v189 = vmul.f32 %v179, %v187
    %v190 = vld [vmem:[%s4] sm:$0x1]
    %v192 = vlaneseq
    %v193 = vshrl.u32 %v192, 7
    %v194 = vsub.s32 0, %v193
    %v195 = vrot.slane %v190, %v194
    %198 = vset.pattern.permute.xlu0 0
    %199 = vperm.xlu0 %198, %v182
    %v200 = vpop.permute.xlu0 %199
    %v202 = vmul.f32 %v195, %v200
    %v203 = vadd.f32 %v189, %v202
    %204 = vst.msk [vmem:[#allocation2] sm:$0xff] %vm108, 0.0
    %205 = vst.msk [vmem:[#allocation2 + $0x8] sm:$0xff] %vm108, 0.0
    %v206 = vld [vmem:[%s5] sm:$0x1]
    %v207 = vld [vmem:[%s6] sm:$0x1]
    %v208 = vadd.f32 %v206, %v207
    %vm209 = vcmask 516096
    %210 = vst.msk [vmem:[#allocation2] sm:$0x1] %vm209, %v208
    %211 = vst.msk [vmem:[#allocation2 + $0x8] sm:$0x1] %vm209, %v208
    %v213 = vcombine.high %v203, %v203
    %v215 = vld [vmem:[%s6 + $0x1] sm:$0xf]
    %v216 = vadd.f32 %v203, %v215
    %v217 = vadd.f32 %v213, %v215
    %vm218 = vcmask 519168
    %219 = vst.msk [vmem:[#allocation2 + $0x1] sm:$0xf] %vm218, %v216
    %220 = vst.msk [vmem:[#allocation2 + $0x9] sm:$0xf] %vm218, %v217
    %v221 = vld [vmem:[#allocation2] sm:$0xff]
    %v222 = vld [vmem:[#allocation2 + $0x8] sm:$0xff]
    %v223 = vlaneseq
    %v224 = vand.u32 %v223, 127
    %vm225 = vcmp.lt.s32.totalorder %v224, 5
    %v226 = vsel %vm225, 0.0, -1e+30
    %v227 = vld [vmem:[%s7] sm:$0x1]
    %v228 = vld [vmem:[%s8] sm:$0x1]
    %v229 = vsel %vm108, %v221, 0.0
    %230 = vadd.xlane.f32.xlu0 %v229
    %v231 = vpop.xlane.xlu0 %230
    %v232 = vsel %vm108, %v222, 0.0
    %233 = vadd.xlane.f32.xlu0 %v232
    %v234 = vpop.xlane.xlu0 %233
    %v235 = vrcp.pop 64.0
    %v236 = vmul.f32 %v231, %v235
    %v237 = vmul.f32 %v234, %v235
    %v238 = vsub.f32 %v221, %v236
    %v239 = vsub.f32 %v222, %v237
    %v240 = vmul.f32 %v238, %v238
    %v241 = vmul.f32 %v239, %v239
    %v242 = vsel %vm108, %v240, 0.0
    %243 = vadd.xlane.f32.xlu0 %v242
    %v244 = vpop.xlane.xlu0 %243
    %v245 = vsel %vm108, %v241, 0.0
    %246 = vadd.xlane.f32.xlu0 %v245
    %v247 = vpop.xlane.xlu0 %246
    %v248 = vmul.f32 %v244, %v235
    %v249 = vmul.f32 %v247, %v235
    %v250 = vadd.f32 %v248, 1e-06
    %v251 = vadd.f32 %v249, 1e-06
    %v252 = vrsqrt.pop %v250
    %v253 = vrsqrt.pop %v251
    %v254 = vmul.f32 %v238, %v252
    %v255 = vmul.f32 %v239, %v253
    %v257 = vlaneseq
    %v258 = vshrl.u32 %v257, 7
    %v259 = vsub.s32 0, %v258
    %v260 = vrot.slane %v227, %v259
    %v262 = vmul.f32 %v254, %v260
    %v263 = vmul.f32 %v255, %v260
    %v265 = vlaneseq
    %v266 = vshrl.u32 %v265, 7
    %v267 = vsub.s32 0, %v266
    %v268 = vrot.slane %v228, %v267
    %v270 = vadd.f32 %v262, %v268
    %v271 = vadd.f32 %v263, %v268
    %v272 = vld [vmem:[%s9] sm:$0xff]
    %v273 = vld [vmem:[%s9 + $0x8] sm:$0xff]
    %v274 = vld [vmem:[%s9 + $0x10] sm:$0xff]
    %v275 = vld [vmem:[%s9 + $0x18] sm:$0xff]
    %v276 = vld [vmem:[%s9 + $0x20] sm:$0xff]
    %v277 = vld [vmem:[%s9 + $0x28] sm:$0xff]
    %v278 = vld [vmem:[%s9 + $0x30] sm:$0xff]
    %v279 = vld [vmem:[%s9 + $0x38] sm:$0xff]
    %v280 = vld [vmem:[%s9 + $0x40] sm:$0xff]
    %v281 = vld [vmem:[%s9 + $0x48] sm:$0xff]
    %v282 = vld [vmem:[%s9 + $0x50] sm:$0xff]
    %v283 = vld [vmem:[%s9 + $0x58] sm:$0xff]
    %v284 = vld [vmem:[%s9 + $0x60] sm:$0xff]
    %v285 = vld [vmem:[%s9 + $0x68] sm:$0xff]
    %v286 = vld [vmem:[%s9 + $0x70] sm:$0xff]
    %v287 = vld [vmem:[%s9 + $0x78] sm:$0xff]
    %v288 = vld [vmem:[%s10] sm:$0x3]
    %v290 = vlaneseq
    %v291 = vshrl.u32 %v290, 7
    %v292 = vsub.s32 0, %v291
    %v293 = vrot.slane %v288, %v292
    %v294 = vlaneseq
    %v295 = vshrl.u32 %v294, 7
    %v296 = vsub.s32 1, %v295
    %v297 = vrot.slane %v288, %v296
    %v301 = vsel %vm108, %v270, 0
    %v304 = vsel %vm108, %v271, 0
    %306 = vmatprep.subr.mxu0 %v273
    %307 = vmatpush1.msra.mxu0 %v272
    %308 = vmatprep.subr.mxu0 %v275
    %309 = vmatpush1.msra.mxu0 %v274
    %310 = vmatprep.subr.mxu0 %v277
    %311 = vmatpush1.msra.mxu0 %v276
    %312 = vmatprep.subr.mxu0 %v279
    %313 = vmatpush1.msra.mxu0 %v278
    %314 = vmatprep.subr.mxu0 %v281
    %315 = vmatpush1.msra.mxu0 %v280
    %316 = vmatprep.subr.mxu0 %v283
    %317 = vmatpush1.msra.mxu0 %v282
    %318 = vmatprep.subr.mxu0 %v285
    %319 = vmatpush1.msra.mxu0 %v284
    %320 = vmatprep.subr.mxu0 %v287
    %321 = vmatpush1.msra.mxu0 %v286
    %322 = vmatprep.subr.mxu0 0.0
    %323 = vmatpush1.msra.mxu0 0.0
    %324 = vmatprep.subr.mxu0 0.0
    %325 = vmatpush1.msra.mxu0 0.0
    %326 = vmatprep.subr.mxu0 0.0
    %327 = vmatpush1.msra.mxu0 0.0
    %328 = vmatprep.subr.mxu0 0.0
    %329 = vmatpush1.msra.mxu0 0.0
    %330 = vmatprep.subr.mxu0 0.0
    %331 = vmatpush1.msra.mxu0 0.0
    %332 = vmatprep.subr.mxu0 0.0
    %333 = vmatpush1.msra.mxu0 0.0
    %334 = vmatprep.subr.mxu0 0.0
    %335 = vmatpush1.msra.mxu0 0.0
    %336 = vmatprep.subr.mxu0 0.0
    %337 = vmatpush1.msra.mxu0 0.0
    %338 = vmatprep.subr.mxu0 0.0
    %339 = vmatpush1.msra.mxu0 0.0
    %340 = vmatprep.subr.mxu0 0.0
    %341 = vmatpush1.msra.mxu0 0.0
    %342 = vmatprep.subr.mxu0 0.0
    %343 = vmatpush1.msra.mxu0 0.0
    %344 = vmatprep.subr.mxu0 0.0
    %345 = vmatpush1.msra.mxu0 0.0
    %346 = vmatprep.subr.mxu0 0.0
    %347 = vmatpush1.msra.mxu0 0.0
    %348 = vmatprep.subr.mxu0 0.0
    %349 = vmatpush1.msra.mxu0 0.0
    %350 = vmatprep.subr.mxu0 0.0
    %351 = vmatpush1.msra.mxu0 0.0
    %352 = vmatprep.subr.mxu0 0.0
    %353 = vmatpush1.msra.mxu0 0.0
    %354 = vmatprep.subr.mxu0 0.0
    %355 = vmatpush1.msra.mxu0 0.0
    %356 = vmatprep.subr.mxu0 0.0
    %357 = vmatpush1.msra.mxu0 0.0
    %358 = vmatprep.subr.mxu0 0.0
    %359 = vmatpush1.msra.mxu0 0.0
    %360 = vmatprep.subr.mxu0 0.0
    %361 = vmatpush1.msra.mxu0 0.0
    %362 = vmatprep.subr.mxu0 0.0
    %363 = vmatpush1.msra.mxu0 0.0
    %364 = vmatprep.subr.mxu0 0.0
    %365 = vmatpush1.msra.mxu0 0.0
    %366 = vmatprep.subr.mxu0 0.0
    %367 = vmatpush1.msra.mxu0 0.0
    %368 = vmatprep.subr.mxu0 0.0
    %369 = vmatpush1.msra.mxu0 0.0
    %370 = vmatprep.mubr.f32.mxu0 0.0
    %371 = vmatmul.mubr.f32.gmra.mrb[0].mxu0 %v301
    %v372 = vpop.f32.mrb[0].mxu0
    %v373 = vadd.f32 %v293, %v372
    %v374 = vpop.f32.mrb[0].mxu0
    %v375 = vadd.f32 %v297, %v374
    %376 = vmatprep.mubr.f32.mxu0 0.0
    %377 = vmatmul.mubr.f32.gmra.mrb[0].mxu0 %v304
    %v378 = vpop.f32.mrb[0].mxu0
    %v379 = vadd.f32 %v293, %v378
    %v380 = vpop.f32.mrb[0].mxu0
    %v381 = vadd.f32 %v297, %v380
    %382 = vdwg.mxu0
    %v383 = vmul.f32 %v373, 0.17677669
    %v384 = vmul.f32 %v379, 0.17677669
    %386 = vrot.lane.b32.xlu0 %v373, 64
    %v387 = vpop.permute.xlu0 %386
    %vm388 = vcmask 261120
    %v390 = vsel %vm388, %v383, 0
    %v392 = vsel %vm388, %v387, 0
    %394 = vmatprep.subr.mxu0 0.0
    %395 = vmatpush1.xpose.msra.mxu0 %v392
    %396 = vmatprep.subr.mxu0 0.0
    %397 = vmatpush1.xpose.msra.mxu0 0.0
    %398 = vmatprep.subr.mxu0 0.0
    %399 = vmatpush1.xpose.msra.mxu0 0.0
    %400 = vmatprep.subr.mxu0 0.0
    %401 = vmatpush1.xpose.msra.mxu0 0.0
    %402 = vmatprep.subr.mxu0 0.0
    %403 = vmatpush1.xpose.msra.mxu0 0.0
    %404 = vmatprep.subr.mxu0 0.0
    %405 = vmatpush1.xpose.msra.mxu0 0.0
    %406 = vmatprep.subr.mxu0 0.0
    %407 = vmatpush1.xpose.msra.mxu0 0.0
    %408 = vmatprep.subr.mxu0 0.0
    %409 = vmatpush1.xpose.msra.mxu0 0.0
    %410 = vmatprep.subr.mxu0 0.0
    %411 = vmatpush1.xpose.msra.mxu0 0.0
    %412 = vmatprep.subr.mxu0 0.0
    %413 = vmatpush1.xpose.msra.mxu0 0.0
    %414 = vmatprep.subr.mxu0 0.0
    %415 = vmatpush1.xpose.msra.mxu0 0.0
    %416 = vmatprep.subr.mxu0 0.0
    %417 = vmatpush1.xpose.msra.mxu0 0.0
    %418 = vmatprep.subr.mxu0 0.0
    %419 = vmatpush1.xpose.msra.mxu0 0.0
    %420 = vmatprep.subr.mxu0 0.0
    %421 = vmatpush1.xpose.msra.mxu0 0.0
    %422 = vmatprep.subr.mxu0 0.0
    %423 = vmatpush1.xpose.msra.mxu0 0.0
    %424 = vmatprep.subr.mxu0 0.0
    %425 = vmatpush1.xpose.msra.mxu0 0.0
    %426 = vmatprep.subr.mxu0 0.0
    %427 = vmatpush1.xpose.msra.mxu0 0.0
    %428 = vmatprep.subr.mxu0 0.0
    %429 = vmatpush1.xpose.msra.mxu0 0.0
    %430 = vmatprep.subr.mxu0 0.0
    %431 = vmatpush1.xpose.msra.mxu0 0.0
    %432 = vmatprep.subr.mxu0 0.0
    %433 = vmatpush1.xpose.msra.mxu0 0.0
    %434 = vmatprep.subr.mxu0 0.0
    %435 = vmatpush1.xpose.msra.mxu0 0.0
    %436 = vmatprep.subr.mxu0 0.0
    %437 = vmatpush1.xpose.msra.mxu0 0.0
    %438 = vmatprep.subr.mxu0 0.0
    %439 = vmatpush1.xpose.msra.mxu0 0.0
    %440 = vmatprep.subr.mxu0 0.0
    %441 = vmatpush1.xpose.msra.mxu0 0.0
    %442 = vmatprep.subr.mxu0 0.0
    %443 = vmatpush1.xpose.msra.mxu0 0.0
    %444 = vmatprep.subr.mxu0 0.0
    %445 = vmatpush1.xpose.msra.mxu0 0.0
    %446 = vmatprep.subr.mxu0 0.0
    %447 = vmatpush1.xpose.msra.mxu0 0.0
    %448 = vmatprep.subr.mxu0 0.0
    %449 = vmatpush1.xpose.msra.mxu0 0.0
    %450 = vmatprep.subr.mxu0 0.0
    %451 = vmatpush1.xpose.msra.mxu0 0.0
    %452 = vmatprep.subr.mxu0 0.0
    %453 = vmatpush1.xpose.msra.mxu0 0.0
    %454 = vmatprep.subr.mxu0 0.0
    %455 = vmatpush1.xpose.msra.mxu0 0.0
    %456 = vmatprep.subr.mxu0 0.0
    %457 = vmatpush1.xpose.msra.mxu0 0.0
    %458 = vmatprep.mubr.f32.mxu0 0.0
    %459 = vmatmul.mubr.f32.gmra.mrb[0].mxu0 %v390
    %v460 = vpop.f32.mrb[0].mxu0
    %v461 = vadd.f32 %v226, %v460
    %v462 = vpop.f32.mrb[0].mxu0
    %463 = vdwg.mxu0
    %465 = vrot.lane.b32.xlu0 %v379, 64
    %v466 = vpop.permute.xlu0 %465
    %v468 = vsel %vm388, %v384, 0
    %v470 = vsel %vm388, %v466, 0
    %472 = vmatprep.subr.mxu0 0.0
    %473 = vmatpush1.xpose.msra.mxu0 %v470
    %474 = vmatprep.subr.mxu0 0.0
    %475 = vmatpush1.xpose.msra.mxu0 0.0
    %476 = vmatprep.subr.mxu0 0.0
    %477 = vmatpush1.xpose.msra.mxu0 0.0
    %478 = vmatprep.subr.mxu0 0.0
    %479 = vmatpush1.xpose.msra.mxu0 0.0
    %480 = vmatprep.subr.mxu0 0.0
    %481 = vmatpush1.xpose.msra.mxu0 0.0
    %482 = vmatprep.subr.mxu0 0.0
    %483 = vmatpush1.xpose.msra.mxu0 0.0
    %484 = vmatprep.subr.mxu0 0.0
    %485 = vmatpush1.xpose.msra.mxu0 0.0
    %486 = vmatprep.subr.mxu0 0.0
    %487 = vmatpush1.xpose.msra.mxu0 0.0
    %488 = vmatprep.subr.mxu0 0.0
    %489 = vmatpush1.xpose.msra.mxu0 0.0
    %490 = vmatprep.subr.mxu0 0.0
    %491 = vmatpush1.xpose.msra.mxu0 0.0
    %492 = vmatprep.subr.mxu0 0.0
    %493 = vmatpush1.xpose.msra.mxu0 0.0
    %494 = vmatprep.subr.mxu0 0.0
    %495 = vmatpush1.xpose.msra.mxu0 0.0
    %496 = vmatprep.subr.mxu0 0.0
    %497 = vmatpush1.xpose.msra.mxu0 0.0
    %498 = vmatprep.subr.mxu0 0.0
    %499 = vmatpush1.xpose.msra.mxu0 0.0
    %500 = vmatprep.subr.mxu0 0.0
    %501 = vmatpush1.xpose.msra.mxu0 0.0
    %502 = vmatprep.subr.mxu0 0.0
    %503 = vmatpush1.xpose.msra.mxu0 0.0
    %504 = vmatprep.subr.mxu0 0.0
    %505 = vmatpush1.xpose.msra.mxu0 0.0
    %506 = vmatprep.subr.mxu0 0.0
    %507 = vmatpush1.xpose.msra.mxu0 0.0
    %508 = vmatprep.subr.mxu0 0.0
    %509 = vmatpush1.xpose.msra.mxu0 0.0
    %510 = vmatprep.subr.mxu0 0.0
    %511 = vmatpush1.xpose.msra.mxu0 0.0
    %512 = vmatprep.subr.mxu0 0.0
    %513 = vmatpush1.xpose.msra.mxu0 0.0
    %514 = vmatprep.subr.mxu0 0.0
    %515 = vmatpush1.xpose.msra.mxu0 0.0
    %516 = vmatprep.subr.mxu0 0.0
    %517 = vmatpush1.xpose.msra.mxu0 0.0
    %518 = vmatprep.subr.mxu0 0.0
    %519 = vmatpush1.xpose.msra.mxu0 0.0
    %520 = vmatprep.subr.mxu0 0.0
    %521 = vmatpush1.xpose.msra.mxu0 0.0
    %522 = vmatprep.subr.mxu0 0.0
    %523 = vmatpush1.xpose.msra.mxu0 0.0
    %524 = vmatprep.subr.mxu0 0.0
    %525 = vmatpush1.xpose.msra.mxu0 0.0
    %526 = vmatprep.subr.mxu0 0.0
    %527 = vmatpush1.xpose.msra.mxu0 0.0
    %528 = vmatprep.subr.mxu0 0.0
    %529 = vmatpush1.xpose.msra.mxu0 0.0
    %530 = vmatprep.subr.mxu0 0.0
    %531 = vmatpush1.xpose.msra.mxu0 0.0
    %532 = vmatprep.subr.mxu0 0.0
    %533 = vmatpush1.xpose.msra.mxu0 0.0
    %534 = vmatprep.subr.mxu0 0.0
    %535 = vmatpush1.xpose.msra.mxu0 0.0
    %536 = vmatprep.mubr.f32.mxu0 0.0
    %537 = vmatmul.mubr.f32.gmra.mrb[0].mxu0 %v468
    %v538 = vpop.f32.mrb[0].mxu0
    %v539 = vadd.f32 %v226, %v538
    %v540 = vpop.f32.mrb[0].mxu0
    %541 = vdwg.mxu0
    %vm542 = vcmask 64512
    %v543 = vsel %vm542, %v461, -inf
    %544 = vmax.xlane.f32.xlu0 %v543
    %v545 = vpop.xlane.xlu0 %544
    %v546 = vsel %vm542, %v539, -inf
    %547 = vmax.xlane.f32.xlu0 %v546
    %v548 = vpop.xlane.xlu0 %547
    %v549 = vsub.f32 %v461, %v545
    %v550 = vsub.f32 %v539, %v548
    %v551 = vmul.f32 %v549, 1.442695
    %v552 = vpow.pop %v551
    %v553 = vmul.f32 %v550, 1.442695
    %v554 = vpow.pop %v553
    %v555 = vsel %vm542, %v552, 0.0
    %556 = vadd.xlane.f32.xlu0 %v555
    %v557 = vpop.xlane.xlu0 %556
    %v558 = vsel %vm542, %v554, 0.0
    %559 = vadd.xlane.f32.xlu0 %v558
    %v560 = vpop.xlane.xlu0 %559
    %v561 = vrcp.pop %v557
    %v562 = vrcp.pop %v560
    %v563 = vmul.f32 %v552, %v561
    %v564 = vmul.f32 %v554, %v562
    %v566 = vsel %vm542, %v563, 0
    %568 = vmatprep.subr.mxu0 0.0
    %569 = vmatpush1.msra.mxu0 %v375
    %570 = vmatprep.subr.mxu0 0.0
    %571 = vmatpush1.msra.mxu0 0.0
    %572 = vmatprep.subr.mxu0 0.0
    %573 = vmatpush1.msra.mxu0 0.0
    %574 = vmatprep.subr.mxu0 0.0
    %575 = vmatpush1.msra.mxu0 0.0
    %576 = vmatprep.subr.mxu0 0.0
    %577 = vmatpush1.msra.mxu0 0.0
    %578 = vmatprep.subr.mxu0 0.0
    %579 = vmatpush1.msra.mxu0 0.0
    %580 = vmatprep.subr.mxu0 0.0
    %581 = vmatpush1.msra.mxu0 0.0
    %582 = vmatprep.subr.mxu0 0.0
    %583 = vmatpush1.msra.mxu0 0.0
    %584 = vmatprep.subr.mxu0 0.0
    %585 = vmatpush1.msra.mxu0 0.0
    %586 = vmatprep.subr.mxu0 0.0
    %587 = vmatpush1.msra.mxu0 0.0
    %588 = vmatprep.subr.mxu0 0.0
    %589 = vmatpush1.msra.mxu0 0.0
    %590 = vmatprep.subr.mxu0 0.0
    %591 = vmatpush1.msra.mxu0 0.0
    %592 = vmatprep.subr.mxu0 0.0
    %593 = vmatpush1.msra.mxu0 0.0
    %594 = vmatprep.subr.mxu0 0.0
    %595 = vmatpush1.msra.mxu0 0.0
    %596 = vmatprep.subr.mxu0 0.0
    %597 = vmatpush1.msra.mxu0 0.0
    %598 = vmatprep.subr.mxu0 0.0
    %599 = vmatpush1.msra.mxu0 0.0
    %600 = vmatprep.subr.mxu0 0.0
    %601 = vmatpush1.msra.mxu0 0.0
    %602 = vmatprep.subr.mxu0 0.0
    %603 = vmatpush1.msra.mxu0 0.0
    %604 = vmatprep.subr.mxu0 0.0
    %605 = vmatpush1.msra.mxu0 0.0
    %606 = vmatprep.subr.mxu0 0.0
    %607 = vmatpush1.msra.mxu0 0.0
    %608 = vmatprep.subr.mxu0 0.0
    %609 = vmatpush1.msra.mxu0 0.0
    %610 = vmatprep.subr.mxu0 0.0
    %611 = vmatpush1.msra.mxu0 0.0
    %612 = vmatprep.subr.mxu0 0.0
    %613 = vmatpush1.msra.mxu0 0.0
    %614 = vmatprep.subr.mxu0 0.0
    %615 = vmatpush1.msra.mxu0 0.0
    %616 = vmatprep.subr.mxu0 0.0
    %617 = vmatpush1.msra.mxu0 0.0
    %618 = vmatprep.subr.mxu0 0.0
    %619 = vmatpush1.msra.mxu0 0.0
    %620 = vmatprep.subr.mxu0 0.0
    %621 = vmatpush1.msra.mxu0 0.0
    %622 = vmatprep.subr.mxu0 0.0
    %623 = vmatpush1.msra.mxu0 0.0
    %624 = vmatprep.subr.mxu0 0.0
    %625 = vmatpush1.msra.mxu0 0.0
    %626 = vmatprep.subr.mxu0 0.0
    %627 = vmatpush1.msra.mxu0 0.0
    %628 = vmatprep.subr.mxu0 0.0
    %629 = vmatpush1.msra.mxu0 0.0
    %630 = vmatprep.subr.mxu0 0.0
    %631 = vmatpush1.msra.mxu0 0.0
    %632 = vmatprep.mubr.f32.mxu0 0.0
    %633 = vmatmul.mubr.f32.gmra.mrb[0].mxu0 %v566
    %v634 = vpop.f32.mrb[0].mxu0
    %v635 = vadd.f32 0.0, %v634
    %v636 = vpop.f32.mrb[0].mxu0
    %637 = vdwg.mxu0
    %v639 = vsel %vm542, %v564, 0
    %641 = vmatprep.subr.mxu0 0.0
    %642 = vmatpush1.msra.mxu0 %v381
    %643 = vmatprep.subr.mxu0 0.0
    %644 = vmatpush1.msra.mxu0 0.0
    %645 = vmatprep.subr.mxu0 0.0
    %646 = vmatpush1.msra.mxu0 0.0
    %647 = vmatprep.subr.mxu0 0.0
    %648 = vmatpush1.msra.mxu0 0.0
    %649 = vmatprep.subr.mxu0 0.0
    %650 = vmatpush1.msra.mxu0 0.0
    %651 = vmatprep.subr.mxu0 0.0
    %652 = vmatpush1.msra.mxu0 0.0
    %653 = vmatprep.subr.mxu0 0.0
    %654 = vmatpush1.msra.mxu0 0.0
    %655 = vmatprep.subr.mxu0 0.0
    %656 = vmatpush1.msra.mxu0 0.0
    %657 = vmatprep.subr.mxu0 0.0
    %658 = vmatpush1.msra.mxu0 0.0
    %659 = vmatprep.subr.mxu0 0.0
    %660 = vmatpush1.msra.mxu0 0.0
    %661 = vmatprep.subr.mxu0 0.0
    %662 = vmatpush1.msra.mxu0 0.0
    %663 = vmatprep.subr.mxu0 0.0
    %664 = vmatpush1.msra.mxu0 0.0
    %665 = vmatprep.subr.mxu0 0.0
    %666 = vmatpush1.msra.mxu0 0.0
    %667 = vmatprep.subr.mxu0 0.0
    %668 = vmatpush1.msra.mxu0 0.0
    %669 = vmatprep.subr.mxu0 0.0
    %670 = vmatpush1.msra.mxu0 0.0
    %671 = vmatprep.subr.mxu0 0.0
    %672 = vmatpush1.msra.mxu0 0.0
    %673 = vmatprep.subr.mxu0 0.0
    %674 = vmatpush1.msra.mxu0 0.0
    %675 = vmatprep.subr.mxu0 0.0
    %676 = vmatpush1.msra.mxu0 0.0
    %677 = vmatprep.subr.mxu0 0.0
    %678 = vmatpush1.msra.mxu0 0.0
    %679 = vmatprep.subr.mxu0 0.0
    %680 = vmatpush1.msra.mxu0 0.0
    %681 = vmatprep.subr.mxu0 0.0
    %682 = vmatpush1.msra.mxu0 0.0
    %683 = vmatprep.subr.mxu0 0.0
    %684 = vmatpush1.msra.mxu0 0.0
    %685 = vmatprep.subr.mxu0 0.0
    %686 = vmatpush1.msra.mxu0 0.0
    %687 = vmatprep.subr.mxu0 0.0
    %688 = vmatpush1.msra.mxu0 0.0
    %689 = vmatprep.subr.mxu0 0.0
    %690 = vmatpush1.msra.mxu0 0.0
    %691 = vmatprep.subr.mxu0 0.0
    %692 = vmatpush1.msra.mxu0 0.0
    %693 = vmatprep.subr.mxu0 0.0
    %694 = vmatpush1.msra.mxu0 0.0
    %695 = vmatprep.subr.mxu0 0.0
    %696 = vmatpush1.msra.mxu0 0.0
    %697 = vmatprep.subr.mxu0 0.0
    %698 = vmatpush1.msra.mxu0 0.0
    %699 = vmatprep.subr.mxu0 0.0
    %700 = vmatpush1.msra.mxu0 0.0
    %701 = vmatprep.subr.mxu0 0.0
    %702 = vmatpush1.msra.mxu0 0.0
    %703 = vmatprep.subr.mxu0 0.0
    %704 = vmatpush1.msra.mxu0 0.0
    %705 = vmatprep.mubr.f32.mxu0 0.0
    %706 = vmatmul.mubr.f32.gmra.mrb[0].mxu0 %v639
    %v707 = vpop.f32.mrb[0].mxu0
    %v708 = vadd.f32 0.0, %v707
    %v709 = vpop.f32.mrb[0].mxu0
    %710 = vdwg.mxu0
    %711 = vst.msk [vmem:[#allocation2] sm:$0xff] %vm388, %v635
    %712 = vst.msk [vmem:[#allocation2 + $0x8] sm:$0xff] %vm388, %v708
    %713 = vrot.lane.b32.xlu0 %v383, 96
    %v714 = vpop.permute.xlu0 %713
    %715 = vrot.lane.b32.xlu0 %v373, 32
    %v716 = vpop.permute.xlu0 %715
    %v717 = vsel %vm388, %v714, 0
    %v719 = vsel %vm388, %v716, 0
    %721 = vmatprep.subr.mxu0 0.0
    %722 = vmatpush1.xpose.msra.mxu0 %v719
    %723 = vmatprep.subr.mxu0 0.0
    %724 = vmatpush1.xpose.msra.mxu0 0.0
    %725 = vmatprep.subr.mxu0 0.0
    %726 = vmatpush1.xpose.msra.mxu0 0.0
    %727 = vmatprep.subr.mxu0 0.0
    %728 = vmatpush1.xpose.msra.mxu0 0.0
    %729 = vmatprep.subr.mxu0 0.0
    %730 = vmatpush1.xpose.msra.mxu0 0.0
    %731 = vmatprep.subr.mxu0 0.0
    %732 = vmatpush1.xpose.msra.mxu0 0.0
    %733 = vmatprep.subr.mxu0 0.0
    %734 = vmatpush1.xpose.msra.mxu0 0.0
    %735 = vmatprep.subr.mxu0 0.0
    %736 = vmatpush1.xpose.msra.mxu0 0.0
    %737 = vmatprep.subr.mxu0 0.0
    %738 = vmatpush1.xpose.msra.mxu0 0.0
    %739 = vmatprep.subr.mxu0 0.0
    %740 = vmatpush1.xpose.msra.mxu0 0.0
    %741 = vmatprep.subr.mxu0 0.0
    %742 = vmatpush1.xpose.msra.mxu0 0.0
    %743 = vmatprep.subr.mxu0 0.0
    %744 = vmatpush1.xpose.msra.mxu0 0.0
    %745 = vmatprep.subr.mxu0 0.0
    %746 = vmatpush1.xpose.msra.mxu0 0.0
    %747 = vmatprep.subr.mxu0 0.0
    %748 = vmatpush1.xpose.msra.mxu0 0.0
    %749 = vmatprep.subr.mxu0 0.0
    %750 = vmatpush1.xpose.msra.mxu0 0.0
    %751 = vmatprep.subr.mxu0 0.0
    %752 = vmatpush1.xpose.msra.mxu0 0.0
    %753 = vmatprep.subr.mxu0 0.0
    %754 = vmatpush1.xpose.msra.mxu0 0.0
    %755 = vmatprep.subr.mxu0 0.0
    %756 = vmatpush1.xpose.msra.mxu0 0.0
    %757 = vmatprep.subr.mxu0 0.0
    %758 = vmatpush1.xpose.msra.mxu0 0.0
    %759 = vmatprep.subr.mxu0 0.0
    %760 = vmatpush1.xpose.msra.mxu0 0.0
    %761 = vmatprep.subr.mxu0 0.0
    %762 = vmatpush1.xpose.msra.mxu0 0.0
    %763 = vmatprep.subr.mxu0 0.0
    %764 = vmatpush1.xpose.msra.mxu0 0.0
    %765 = vmatprep.subr.mxu0 0.0
    %766 = vmatpush1.xpose.msra.mxu0 0.0
    %767 = vmatprep.subr.mxu0 0.0
    %768 = vmatpush1.xpose.msra.mxu0 0.0
    %769 = vmatprep.subr.mxu0 0.0
    %770 = vmatpush1.xpose.msra.mxu0 0.0
    %771 = vmatprep.subr.mxu0 0.0
    %772 = vmatpush1.xpose.msra.mxu0 0.0
    %773 = vmatprep.subr.mxu0 0.0
    %774 = vmatpush1.xpose.msra.mxu0 0.0
    %775 = vmatprep.subr.mxu0 0.0
    %776 = vmatpush1.xpose.msra.mxu0 0.0
    %777 = vmatprep.subr.mxu0 0.0
    %778 = vmatpush1.xpose.msra.mxu0 0.0
    %779 = vmatprep.subr.mxu0 0.0
    %780 = vmatpush1.xpose.msra.mxu0 0.0
    %781 = vmatprep.subr.mxu0 0.0
    %782 = vmatpush1.xpose.msra.mxu0 0.0
    %783 = vmatprep.subr.mxu0 0.0
    %784 = vmatpush1.xpose.msra.mxu0 0.0
    %785 = vmatprep.mubr.f32.mxu0 0.0
    %786 = vmatmul.mubr.f32.gmra.mrb[0].mxu0 %v717
    %v787 = vpop.f32.mrb[0].mxu0
    %v788 = vadd.f32 %v226, %v787
    %v789 = vpop.f32.mrb[0].mxu0
    %790 = vdwg.mxu0
    %791 = vrot.lane.b32.xlu0 %v384, 96
    %v792 = vpop.permute.xlu0 %791
    %793 = vrot.lane.b32.xlu0 %v379, 32
    %v794 = vpop.permute.xlu0 %793
    %v795 = vsel %vm388, %v792, 0
    %v797 = vsel %vm388, %v794, 0
    %799 = vmatprep.subr.mxu0 0.0
    %800 = vmatpush1.xpose.msra.mxu0 %v797
    %801 = vmatprep.subr.mxu0 0.0
    %802 = vmatpush1.xpose.msra.mxu0 0.0
    %803 = vmatprep.subr.mxu0 0.0
    %804 = vmatpush1.xpose.msra.mxu0 0.0
    %805 = vmatprep.subr.mxu0 0.0
    %806 = vmatpush1.xpose.msra.mxu0 0.0
    %807 = vmatprep.subr.mxu0 0.0
    %808 = vmatpush1.xpose.msra.mxu0 0.0
    %809 = vmatprep.subr.mxu0 0.0
    %810 = vmatpush1.xpose.msra.mxu0 0.0
    %811 = vmatprep.subr.mxu0 0.0
    %812 = vmatpush1.xpose.msra.mxu0 0.0
    %813 = vmatprep.subr.mxu0 0.0
    %814 = vmatpush1.xpose.msra.mxu0 0.0
    %815 = vmatprep.subr.mxu0 0.0
    %816 = vmatpush1.xpose.msra.mxu0 0.0
    %817 = vmatprep.subr.mxu0 0.0
    %818 = vmatpush1.xpose.msra.mxu0 0.0
    %819 = vmatprep.subr.mxu0 0.0
    %820 = vmatpush1.xpose.msra.mxu0 0.0
    %821 = vmatprep.subr.mxu0 0.0
    %822 = vmatpush1.xpose.msra.mxu0 0.0
    %823 = vmatprep.subr.mxu0 0.0
    %824 = vmatpush1.xpose.msra.mxu0 0.0
    %825 = vmatprep.subr.mxu0 0.0
    %826 = vmatpush1.xpose.msra.mxu0 0.0
    %827 = vmatprep.subr.mxu0 0.0
    %828 = vmatpush1.xpose.msra.mxu0 0.0
    %829 = vmatprep.subr.mxu0 0.0
    %830 = vmatpush1.xpose.msra.mxu0 0.0
    %831 = vmatprep.subr.mxu0 0.0
    %832 = vmatpush1.xpose.msra.mxu0 0.0
    %833 = vmatprep.subr.mxu0 0.0
    %834 = vmatpush1.xpose.msra.mxu0 0.0
    %835 = vmatprep.subr.mxu0 0.0
    %836 = vmatpush1.xpose.msra.mxu0 0.0
    %837 = vmatprep.subr.mxu0 0.0
    %838 = vmatpush1.xpose.msra.mxu0 0.0
    %839 = vmatprep.subr.mxu0 0.0
    %840 = vmatpush1.xpose.msra.mxu0 0.0
    %841 = vmatprep.subr.mxu0 0.0
    %842 = vmatpush1.xpose.msra.mxu0 0.0
    %843 = vmatprep.subr.mxu0 0.0
    %844 = vmatpush1.xpose.msra.mxu0 0.0
    %845 = vmatprep.subr.mxu0 0.0
    %846 = vmatpush1.xpose.msra.mxu0 0.0
    %847 = vmatprep.subr.mxu0 0.0
    %848 = vmatpush1.xpose.msra.mxu0 0.0
    %849 = vmatprep.subr.mxu0 0.0
    %850 = vmatpush1.xpose.msra.mxu0 0.0
    %851 = vmatprep.subr.mxu0 0.0
    %852 = vmatpush1.xpose.msra.mxu0 0.0
    %853 = vmatprep.subr.mxu0 0.0
    %854 = vmatpush1.xpose.msra.mxu0 0.0
    %855 = vmatprep.subr.mxu0 0.0
    %856 = vmatpush1.xpose.msra.mxu0 0.0
    %857 = vmatprep.subr.mxu0 0.0
    %858 = vmatpush1.xpose.msra.mxu0 0.0
    %859 = vmatprep.subr.mxu0 0.0
    %860 = vmatpush1.xpose.msra.mxu0 0.0
    %861 = vmatprep.subr.mxu0 0.0
    %862 = vmatpush1.xpose.msra.mxu0 0.0
    %863 = vmatprep.mubr.f32.mxu0 0.0
    %864 = vmatmul.mubr.f32.gmra.mrb[0].mxu0 %v795
    %v865 = vpop.f32.mrb[0].mxu0
    %v866 = vadd.f32 %v226, %v865
    %v867 = vpop.f32.mrb[0].mxu0
    %868 = vdwg.mxu0
    %v869 = vsel %vm542, %v788, -inf
    %870 = vmax.xlane.f32.xlu0 %v869
    %v871 = vpop.xlane.xlu0 %870
    %v872 = vsel %vm542, %v866, -inf
    %873 = vmax.xlane.f32.xlu0 %v872
    %v874 = vpop.xlane.xlu0 %873
    %v875 = vsub.f32 %v788, %v871
    %v876 = vsub.f32 %v866, %v874
    %v877 = vmul.f32 %v875, 1.442695
    %v878 = vpow.pop %v877
    %v879 = vmul.f32 %v876, 1.442695
    %v880 = vpow.pop %v879
    %v881 = vsel %vm542, %v878, 0.0
    %882 = vadd.xlane.f32.xlu0 %v881
    %v883 = vpop.xlane.xlu0 %882
    %v884 = vsel %vm542, %v880, 0.0
    %885 = vadd.xlane.f32.xlu0 %v884
    %v886 = vpop.xlane.xlu0 %885
    %v887 = vrcp.pop %v883
    %v888 = vrcp.pop %v886
    %v889 = vmul.f32 %v878, %v887
    %v890 = vmul.f32 %v880, %v888
    %892 = vrot.lane.b32.xlu0 %v375, 96
    %v893 = vpop.permute.xlu0 %892
    %v896 = vsel %vm542, %v889, 0
    %898 = vmatprep.subr.mxu0 0.0
    %899 = vmatpush1.msra.mxu0 %v893
    %900 = vmatprep.subr.mxu0 0.0
    %901 = vmatpush1.msra.mxu0 0.0
    %902 = vmatprep.subr.mxu0 0.0
    %903 = vmatpush1.msra.mxu0 0.0
    %904 = vmatprep.subr.mxu0 0.0
    %905 = vmatpush1.msra.mxu0 0.0
    %906 = vmatprep.subr.mxu0 0.0
    %907 = vmatpush1.msra.mxu0 0.0
    %908 = vmatprep.subr.mxu0 0.0
    %909 = vmatpush1.msra.mxu0 0.0
    %910 = vmatprep.subr.mxu0 0.0
    %911 = vmatpush1.msra.mxu0 0.0
    %912 = vmatprep.subr.mxu0 0.0
    %913 = vmatpush1.msra.mxu0 0.0
    %914 = vmatprep.subr.mxu0 0.0
    %915 = vmatpush1.msra.mxu0 0.0
    %916 = vmatprep.subr.mxu0 0.0
    %917 = vmatpush1.msra.mxu0 0.0
    %918 = vmatprep.subr.mxu0 0.0
    %919 = vmatpush1.msra.mxu0 0.0
    %920 = vmatprep.subr.mxu0 0.0
    %921 = vmatpush1.msra.mxu0 0.0
    %922 = vmatprep.subr.mxu0 0.0
    %923 = vmatpush1.msra.mxu0 0.0
    %924 = vmatprep.subr.mxu0 0.0
    %925 = vmatpush1.msra.mxu0 0.0
    %926 = vmatprep.subr.mxu0 0.0
    %927 = vmatpush1.msra.mxu0 0.0
    %928 = vmatprep.subr.mxu0 0.0
    %929 = vmatpush1.msra.mxu0 0.0
    %930 = vmatprep.subr.mxu0 0.0
    %931 = vmatpush1.msra.mxu0 0.0
    %932 = vmatprep.subr.mxu0 0.0
    %933 = vmatpush1.msra.mxu0 0.0
    %934 = vmatprep.subr.mxu0 0.0
    %935 = vmatpush1.msra.mxu0 0.0
    %936 = vmatprep.subr.mxu0 0.0
    %937 = vmatpush1.msra.mxu0 0.0
    %938 = vmatprep.subr.mxu0 0.0
    %939 = vmatpush1.msra.mxu0 0.0
    %940 = vmatprep.subr.mxu0 0.0
    %941 = vmatpush1.msra.mxu0 0.0
    %942 = vmatprep.subr.mxu0 0.0
    %943 = vmatpush1.msra.mxu0 0.0
    %944 = vmatprep.subr.mxu0 0.0
    %945 = vmatpush1.msra.mxu0 0.0
    %946 = vmatprep.subr.mxu0 0.0
    %947 = vmatpush1.msra.mxu0 0.0
    %948 = vmatprep.subr.mxu0 0.0
    %949 = vmatpush1.msra.mxu0 0.0
    %950 = vmatprep.subr.mxu0 0.0
    %951 = vmatpush1.msra.mxu0 0.0
    %952 = vmatprep.subr.mxu0 0.0
    %953 = vmatpush1.msra.mxu0 0.0
    %954 = vmatprep.subr.mxu0 0.0
    %955 = vmatpush1.msra.mxu0 0.0
    %956 = vmatprep.subr.mxu0 0.0
    %957 = vmatpush1.msra.mxu0 0.0
    %958 = vmatprep.subr.mxu0 0.0
    %959 = vmatpush1.msra.mxu0 0.0
    %960 = vmatprep.subr.mxu0 0.0
    %961 = vmatpush1.msra.mxu0 0.0
    %962 = vmatprep.mubr.f32.mxu0 0.0
    %963 = vmatmul.mubr.f32.gmra.mrb[0].mxu0 %v896
    %v964 = vpop.f32.mrb[0].mxu0
    %v965 = vadd.f32 0.0, %v964
    %v966 = vpop.f32.mrb[0].mxu0
    %967 = vdwg.mxu0
    %969 = vrot.lane.b32.xlu0 %v381, 96
    %v970 = vpop.permute.xlu0 %969
    %v973 = vsel %vm542, %v890, 0
    %975 = vmatprep.subr.mxu0 0.0
    %976 = vmatpush1.msra.mxu0 %v970
    %977 = vmatprep.subr.mxu0 0.0
    %978 = vmatpush1.msra.mxu0 0.0
    %979 = vmatprep.subr.mxu0 0.0
    %980 = vmatpush1.msra.mxu0 0.0
    %981 = vmatprep.subr.mxu0 0.0
    %982 = vmatpush1.msra.mxu0 0.0
    %983 = vmatprep.subr.mxu0 0.0
    %984 = vmatpush1.msra.mxu0 0.0
    %985 = vmatprep.subr.mxu0 0.0
    %986 = vmatpush1.msra.mxu0 0.0
    %987 = vmatprep.subr.mxu0 0.0
    %988 = vmatpush1.msra.mxu0 0.0
    %989 = vmatprep.subr.mxu0 0.0
    %990 = vmatpush1.msra.mxu0 0.0
    %991 = vmatprep.subr.mxu0 0.0
    %992 = vmatpush1.msra.mxu0 0.0
    %993 = vmatprep.subr.mxu0 0.0
    %994 = vmatpush1.msra.mxu0 0.0
    %995 = vmatprep.subr.mxu0 0.0
    %996 = vmatpush1.msra.mxu0 0.0
    %997 = vmatprep.subr.mxu0 0.0
    %998 = vmatpush1.msra.mxu0 0.0
    %999 = vmatprep.subr.mxu0 0.0
    %1000 = vmatpush1.msra.mxu0 0.0
    %1001 = vmatprep.subr.mxu0 0.0
    %1002 = vmatpush1.msra.mxu0 0.0
    %1003 = vmatprep.subr.mxu0 0.0
    %1004 = vmatpush1.msra.mxu0 0.0
    %1005 = vmatprep.subr.mxu0 0.0
    %1006 = vmatpush1.msra.mxu0 0.0
    %1007 = vmatprep.subr.mxu0 0.0
    %1008 = vmatpush1.msra.mxu0 0.0
    %1009 = vmatprep.subr.mxu0 0.0
    %1010 = vmatpush1.msra.mxu0 0.0
    %1011 = vmatprep.subr.mxu0 0.0
    %1012 = vmatpush1.msra.mxu0 0.0
    %1013 = vmatprep.subr.mxu0 0.0
    %1014 = vmatpush1.msra.mxu0 0.0
    %1015 = vmatprep.subr.mxu0 0.0
    %1016 = vmatpush1.msra.mxu0 0.0
    %1017 = vmatprep.subr.mxu0 0.0
    %1018 = vmatpush1.msra.mxu0 0.0
    %1019 = vmatprep.subr.mxu0 0.0
    %1020 = vmatpush1.msra.mxu0 0.0
    %1021 = vmatprep.subr.mxu0 0.0
    %1022 = vmatpush1.msra.mxu0 0.0
    %1023 = vmatprep.subr.mxu0 0.0
    %1024 = vmatpush1.msra.mxu0 0.0
    %1025 = vmatprep.subr.mxu0 0.0
    %1026 = vmatpush1.msra.mxu0 0.0
    %1027 = vmatprep.subr.mxu0 0.0
    %1028 = vmatpush1.msra.mxu0 0.0
    %1029 = vmatprep.subr.mxu0 0.0
    %1030 = vmatpush1.msra.mxu0 0.0
    %1031 = vmatprep.subr.mxu0 0.0
    %1032 = vmatpush1.msra.mxu0 0.0
    %1033 = vmatprep.subr.mxu0 0.0
    %1034 = vmatpush1.msra.mxu0 0.0
    %1035 = vmatprep.subr.mxu0 0.0
    %1036 = vmatpush1.msra.mxu0 0.0
    %1037 = vmatprep.subr.mxu0 0.0
    %1038 = vmatpush1.msra.mxu0 0.0
    %1039 = vmatprep.mubr.f32.mxu0 0.0
    %1040 = vmatmul.mubr.f32.gmra.mrb[0].mxu0 %v973
    %v1041 = vpop.f32.mrb[0].mxu0
    %v1042 = vadd.f32 0.0, %v1041
    %v1043 = vpop.f32.mrb[0].mxu0
    %1044 = vdwg.mxu0
    %1047 = vrot.lane.b32.xlu0 %v965, 32
    %v1048 = vpop.permute.xlu0 %1047
    %1049 = vrot.lane.b32.xlu0 %v1042, 32
    %v1050 = vpop.permute.xlu0 %1049
    %vm1053 = vcmask 523520
    %1054 = vst.msk [vmem:[#allocation2] sm:$0xff] %vm1053, %v1048
    %1055 = vst.msk [vmem:[#allocation2 + $0x8] sm:$0xff] %vm1053, %v1050
    %v1056 = vld [vmem:[#allocation2] sm:$0xff]
    %v1057 = vld [vmem:[#allocation2 + $0x8] sm:$0xff]
    %v1058 = vld [vmem:[%s11] sm:$0xff]
    %v1059 = vld [vmem:[%s11 + $0x8] sm:$0xff]
    %v1060 = vld [vmem:[%s11 + $0x10] sm:$0xff]
    %v1061 = vld [vmem:[%s11 + $0x18] sm:$0xff]
    %v1062 = vld [vmem:[%s11 + $0x20] sm:$0xff]
    %v1063 = vld [vmem:[%s11 + $0x28] sm:$0xff]
    %v1064 = vld [vmem:[%s11 + $0x30] sm:$0xff]
    %v1065 = vld [vmem:[%s11 + $0x38] sm:$0xff]
    %v1066 = vld [vmem:[%s12] sm:$0x1]
    %v1068 = vlaneseq
    %v1069 = vshrl.u32 %v1068, 7
    %v1070 = vsub.s32 0, %v1069
    %v1071 = vrot.slane %v1066, %v1070
    %v1074 = vsel %vm108, %v1056, 0
    %v1077 = vsel %vm108, %v1057, 0
    %1079 = vmatprep.subr.mxu0 0.0
    %1080 = vmatpush1.msra.mxu0 %v1058
    %1081 = vmatprep.subr.mxu0 0.0
    %1082 = vmatpush1.msra.mxu0 %v1059
    %1083 = vmatprep.subr.mxu0 0.0
    %1084 = vmatpush1.msra.mxu0 %v1060
    %1085 = vmatprep.subr.mxu0 0.0
    %1086 = vmatpush1.msra.mxu0 %v1061
    %1087 = vmatprep.subr.mxu0 0.0
    %1088 = vmatpush1.msra.mxu0 %v1062
    %1089 = vmatprep.subr.mxu0 0.0
    %1090 = vmatpush1.msra.mxu0 %v1063
    %1091 = vmatprep.subr.mxu0 0.0
    %1092 = vmatpush1.msra.mxu0 %v1064
    %1093 = vmatprep.subr.mxu0 0.0
    %1094 = vmatpush1.msra.mxu0 %v1065
    %1095 = vmatprep.subr.mxu0 0.0
    %1096 = vmatpush1.msra.mxu0 0.0
    %1097 = vmatprep.subr.mxu0 0.0
    %1098 = vmatpush1.msra.mxu0 0.0
    %1099 = vmatprep.subr.mxu0 0.0
    %1100 = vmatpush1.msra.mxu0 0.0
    %1101 = vmatprep.subr.mxu0 0.0
    %1102 = vmatpush1.msra.mxu0 0.0
    %1103 = vmatprep.subr.mxu0 0.0
    %1104 = vmatpush1.msra.mxu0 0.0
    %1105 = vmatprep.subr.mxu0 0.0
    %1106 = vmatpush1.msra.mxu0 0.0
    %1107 = vmatprep.subr.mxu0 0.0
    %1108 = vmatpush1.msra.mxu0 0.0
    %1109 = vmatprep.subr.mxu0 0.0
    %1110 = vmatpush1.msra.mxu0 0.0
    %1111 = vmatprep.subr.mxu0 0.0
    %1112 = vmatpush1.msra.mxu0 0.0
    %1113 = vmatprep.subr.mxu0 0.0
    %1114 = vmatpush1.msra.mxu0 0.0
    %1115 = vmatprep.subr.mxu0 0.0
    %1116 = vmatpush1.msra.mxu0 0.0
    %1117 = vmatprep.subr.mxu0 0.0
    %1118 = vmatpush1.msra.mxu0 0.0
    %1119 = vmatprep.subr.mxu0 0.0
    %1120 = vmatpush1.msra.mxu0 0.0
    %1121 = vmatprep.subr.mxu0 0.0
    %1122 = vmatpush1.msra.mxu0 0.0
    %1123 = vmatprep.subr.mxu0 0.0
    %1124 = vmatpush1.msra.mxu0 0.0
    %1125 = vmatprep.subr.mxu0 0.0
    %1126 = vmatpush1.msra.mxu0 0.0
    %1127 = vmatprep.subr.mxu0 0.0
    %1128 = vmatpush1.msra.mxu0 0.0
    %1129 = vmatprep.subr.mxu0 0.0
    %1130 = vmatpush1.msra.mxu0 0.0
    %1131 = vmatprep.subr.mxu0 0.0
    %1132 = vmatpush1.msra.mxu0 0.0
    %1133 = vmatprep.subr.mxu0 0.0
    %1134 = vmatpush1.msra.mxu0 0.0
    %1135 = vmatprep.subr.mxu0 0.0
    %1136 = vmatpush1.msra.mxu0 0.0
    %1137 = vmatprep.subr.mxu0 0.0
    %1138 = vmatpush1.msra.mxu0 0.0
    %1139 = vmatprep.subr.mxu0 0.0
    %1140 = vmatpush1.msra.mxu0 0.0
    %1141 = vmatprep.subr.mxu0 0.0
    %1142 = vmatpush1.msra.mxu0 0.0
    %1143 = vmatprep.mubr.f32.mxu0 0.0
    %1144 = vmatmul.mubr.f32.gmra.mrb[0].mxu0 %v1074
    %v1145 = vpop.f32.mrb[0].mxu0
    %v1146 = vadd.f32 %v1071, %v1145
    %v1147 = vpop.f32.mrb[0].mxu0
    %1148 = vmatprep.mubr.f32.mxu0 0.0
    %1149 = vmatmul.mubr.f32.gmra.mrb[0].mxu0 %v1077
    %v1150 = vpop.f32.mrb[0].mxu0
    %v1151 = vadd.f32 %v1071, %v1150
    %v1152 = vpop.f32.mrb[0].mxu0
    %1153 = vdwg.mxu0
    %v1154 = vadd.f32 %v221, %v1146
    %v1155 = vadd.f32 %v222, %v1151
    %v1156 = vld [vmem:[%s13] sm:$0x1]
    %v1157 = vld [vmem:[%s14] sm:$0x1]
    %v1158 = vsel %vm108, %v1154, 0.0
    %1159 = vadd.xlane.f32.xlu0 %v1158
    %v1160 = vpop.xlane.xlu0 %1159
    %v1161 = vsel %vm108, %v1155, 0.0
    %1162 = vadd.xlane.f32.xlu0 %v1161
    %v1163 = vpop.xlane.xlu0 %1162
    %v1164 = vmul.f32 %v1160, %v235
    %v1165 = vmul.f32 %v1163, %v235
    %v1166 = vsub.f32 %v1154, %v1164
    %v1167 = vsub.f32 %v1155, %v1165
    %v1168 = vmul.f32 %v1166, %v1166
    %v1169 = vmul.f32 %v1167, %v1167
    %v1170 = vsel %vm108, %v1168, 0.0
    %1171 = vadd.xlane.f32.xlu0 %v1170
    %v1172 = vpop.xlane.xlu0 %1171
    %v1173 = vsel %vm108, %v1169, 0.0
    %1174 = vadd.xlane.f32.xlu0 %v1173
    %v1175 = vpop.xlane.xlu0 %1174
    %v1176 = vmul.f32 %v1172, %v235
    %v1177 = vmul.f32 %v1175, %v235
    %v1178 = vadd.f32 %v1176, 1e-06
    %v1179 = vadd.f32 %v1177, 1e-06
    %v1180 = vrsqrt.pop %v1178
    %v1181 = vrsqrt.pop %v1179
    %v1182 = vmul.f32 %v1166, %v1180
    %v1183 = vmul.f32 %v1167, %v1181
    %v1185 = vlaneseq
    %v1186 = vshrl.u32 %v1185, 7
    %v1187 = vsub.s32 0, %v1186
    %v1188 = vrot.slane %v1156, %v1187
    %v1190 = vmul.f32 %v1182, %v1188
    %v1191 = vmul.f32 %v1183, %v1188
    %v1193 = vlaneseq
    %v1194 = vshrl.u32 %v1193, 7
    %v1195 = vsub.s32 0, %v1194
    %v1196 = vrot.slane %v1157, %v1195
    %v1198 = vadd.f32 %v1190, %v1196
    %v1199 = vadd.f32 %v1191, %v1196
    %v1200 = vld [vmem:[%s15] sm:$0xff]
    %v1201 = vld [vmem:[%s15 + $0x8] sm:$0xff]
    %v1202 = vld [vmem:[%s15 + $0x10] sm:$0xff]
    %v1203 = vld [vmem:[%s15 + $0x18] sm:$0xff]
    %v1204 = vld [vmem:[%s15 + $0x20] sm:$0xff]
    %v1205 = vld [vmem:[%s15 + $0x28] sm:$0xff]
    %v1206 = vld [vmem:[%s15 + $0x30] sm:$0xff]
    %v1207 = vld [vmem:[%s15 + $0x38] sm:$0xff]
    %v1208 = vld [vmem:[%s15 + $0x40] sm:$0xff]
    %v1209 = vld [vmem:[%s15 + $0x48] sm:$0xff]
    %v1210 = vld [vmem:[%s15 + $0x50] sm:$0xff]
    %v1211 = vld [vmem:[%s15 + $0x58] sm:$0xff]
    %v1212 = vld [vmem:[%s15 + $0x60] sm:$0xff]
    %v1213 = vld [vmem:[%s15 + $0x68] sm:$0xff]
    %v1214 = vld [vmem:[%s15 + $0x70] sm:$0xff]
    %v1215 = vld [vmem:[%s15 + $0x78] sm:$0xff]
    %v1216 = vld [vmem:[%s16] sm:$0x3]
    %v1218 = vlaneseq
    %v1219 = vshrl.u32 %v1218, 7
    %v1220 = vsub.s32 0, %v1219
    %v1221 = vrot.slane %v1216, %v1220
    %v1222 = vlaneseq
    %v1223 = vshrl.u32 %v1222, 7
    %v1224 = vsub.s32 1, %v1223
    %v1225 = vrot.slane %v1216, %v1224
    %v1229 = vsel %vm108, %v1198, 0
    %v1232 = vsel %vm108, %v1199, 0
    %1234 = vmatprep.subr.mxu0 %v1201
    %1235 = vmatpush1.msra.mxu0 %v1200
    %1236 = vmatprep.subr.mxu0 %v1203
    %1237 = vmatpush1.msra.mxu0 %v1202
    %1238 = vmatprep.subr.mxu0 %v1205
    %1239 = vmatpush1.msra.mxu0 %v1204
    %1240 = vmatprep.subr.mxu0 %v1207
    %1241 = vmatpush1.msra.mxu0 %v1206
    %1242 = vmatprep.subr.mxu0 %v1209
    %1243 = vmatpush1.msra.mxu0 %v1208
    %1244 = vmatprep.subr.mxu0 %v1211
    %1245 = vmatpush1.msra.mxu0 %v1210
    %1246 = vmatprep.subr.mxu0 %v1213
    %1247 = vmatpush1.msra.mxu0 %v1212
    %1248 = vmatprep.subr.mxu0 %v1215
    %1249 = vmatpush1.msra.mxu0 %v1214
    %1250 = vmatprep.subr.mxu0 0.0
    %1251 = vmatpush1.msra.mxu0 0.0
    %1252 = vmatprep.subr.mxu0 0.0
    %1253 = vmatpush1.msra.mxu0 0.0
    %1254 = vmatprep.subr.mxu0 0.0
    %1255 = vmatpush1.msra.mxu0 0.0
    %1256 = vmatprep.subr.mxu0 0.0
    %1257 = vmatpush1.msra.mxu0 0.0
    %1258 = vmatprep.subr.mxu0 0.0
    %1259 = vmatpush1.msra.mxu0 0.0
    %1260 = vmatprep.subr.mxu0 0.0
    %1261 = vmatpush1.msra.mxu0 0.0
    %1262 = vmatprep.subr.mxu0 0.0
    %1263 = vmatpush1.msra.mxu0 0.0
    %1264 = vmatprep.subr.mxu0 0.0
    %1265 = vmatpush1.msra.mxu0 0.0
    %1266 = vmatprep.subr.mxu0 0.0
    %1267 = vmatpush1.msra.mxu0 0.0
    %1268 = vmatprep.subr.mxu0 0.0
    %1269 = vmatpush1.msra.mxu0 0.0
    %1270 = vmatprep.subr.mxu0 0.0
    %1271 = vmatpush1.msra.mxu0 0.0
    %1272 = vmatprep.subr.mxu0 0.0
    %1273 = vmatpush1.msra.mxu0 0.0
    %1274 = vmatprep.subr.mxu0 0.0
    %1275 = vmatpush1.msra.mxu0 0.0
    %1276 = vmatprep.subr.mxu0 0.0
    %1277 = vmatpush1.msra.mxu0 0.0
    %1278 = vmatprep.subr.mxu0 0.0
    %1279 = vmatpush1.msra.mxu0 0.0
    %1280 = vmatprep.subr.mxu0 0.0
    %1281 = vmatpush1.msra.mxu0 0.0
    %1282 = vmatprep.subr.mxu0 0.0
    %1283 = vmatpush1.msra.mxu0 0.0
    %1284 = vmatprep.subr.mxu0 0.0
    %1285 = vmatpush1.msra.mxu0 0.0
    %1286 = vmatprep.subr.mxu0 0.0
    %1287 = vmatpush1.msra.mxu0 0.0
    %1288 = vmatprep.subr.mxu0 0.0
    %1289 = vmatpush1.msra.mxu0 0.0
    %1290 = vmatprep.subr.mxu0 0.0
    %1291 = vmatpush1.msra.mxu0 0.0
    %1292 = vmatprep.subr.mxu0 0.0
    %1293 = vmatpush1.msra.mxu0 0.0
    %1294 = vmatprep.subr.mxu0 0.0
    %1295 = vmatpush1.msra.mxu0 0.0
    %1296 = vmatprep.subr.mxu0 0.0
    %1297 = vmatpush1.msra.mxu0 0.0
    %1298 = vmatprep.mubr.f32.mxu0 0.0
    %1299 = vmatmul.mubr.f32.gmra.mrb[0].mxu0 %v1229
    %v1300 = vpop.f32.mrb[0].mxu0
    %v1301 = vadd.f32 %v1221, %v1300
    %v1302 = vpop.f32.mrb[0].mxu0
    %v1303 = vadd.f32 %v1225, %v1302
    %1304 = vmatprep.mubr.f32.mxu0 0.0
    %1305 = vmatmul.mubr.f32.gmra.mrb[0].mxu0 %v1232
    %v1306 = vpop.f32.mrb[0].mxu0
    %v1307 = vadd.f32 %v1221, %v1306
    %v1308 = vpop.f32.mrb[0].mxu0
    %v1309 = vadd.f32 %v1225, %v1308
    %1310 = vdwg.mxu0
    %v1311 = vmul.f32 %v1301, 0.5
    %v1312 = vmul.f32 %v1303, 0.5
    %v1313 = vmul.f32 %v1307, 0.5
    %v1314 = vmul.f32 %v1309, 0.5
    %v1315 = vmul.f32 %v1301, 0.70710677
    %v1316 = vmul.f32 %v1303, 0.70710677
    %v1317 = vmul.f32 %v1307, 0.70710677
    %v1318 = vmul.f32 %v1309, 0.70710677
    %vm1319 = vcmp.ge.f32.partialorder %v1315, 0.0
    %vm1320 = vcmp.ge.f32.partialorder %v1316, 0.0
    %vm1321 = vcmp.ge.f32.partialorder %v1317, 0.0
    %vm1322 = vcmp.ge.f32.partialorder %v1318, 0.0
    %v1323 = vsel %vm1319, 1.0, -1.0
    %v1324 = vsel %vm1320, 1.0, -1.0
    %v1325 = vsel %vm1321, 1.0, -1.0
    %v1326 = vsel %vm1322, 1.0, -1.0
    %v1327 = vand.u32 2147483647, %v1315
    %v1328 = vand.u32 2147483647, %v1316
    %v1329 = vand.u32 2147483647, %v1317
    %v1330 = vand.u32 2147483647, %v1318
    %v1331 = vmul.f32 %v1327, 0.3275911
    %v1332 = vmul.f32 %v1328, 0.3275911
    %v1333 = vmul.f32 %v1329, 0.3275911
    %v1334 = vmul.f32 %v1330, 0.3275911
    %v1335 = vadd.f32 %v1331, 1.0
    %v1336 = vadd.f32 %v1332, 1.0
    %v1337 = vadd.f32 %v1333, 1.0
    %v1338 = vadd.f32 %v1334, 1.0
    %v1339 = vrcp.pop %v1335
    %v1340 = vmul.f32 1.0, %v1339
    %v1341 = vrcp.pop %v1336
    %v1342 = vmul.f32 1.0, %v1341
    %v1343 = vrcp.pop %v1337
    %v1344 = vmul.f32 1.0, %v1343
    %v1345 = vrcp.pop %v1338
    %v1346 = vmul.f32 1.0, %v1345
    %v1347 = vmul.f32 %v1340, 1.0614054
    %v1348 = vmul.f32 %v1342, 1.0614054
    %v1349 = vmul.f32 %v1344, 1.0614054
    %v1350 = vmul.f32 %v1346, 1.0614054
    %v1351 = vadd.f32 %v1347, -1.4531521
    %v1352 = vadd.f32 %v1348, -1.4531521
    %v1353 = vadd.f32 %v1349, -1.4531521
    %v1354 = vadd.f32 %v1350, -1.4531521
    %v1355 = vmul.f32 %v1351, %v1340
    %v1356 = vmul.f32 %v1352, %v1342
    %v1357 = vmul.f32 %v1353, %v1344
    %v1358 = vmul.f32 %v1354, %v1346
    %v1359 = vadd.f32 %v1355, 1.4214138
    %v1360 = vadd.f32 %v1356, 1.4214138
    %v1361 = vadd.f32 %v1357, 1.4214138
    %v1362 = vadd.f32 %v1358, 1.4214138
    %v1363 = vmul.f32 %v1359, %v1340
    %v1364 = vmul.f32 %v1360, %v1342
    %v1365 = vmul.f32 %v1361, %v1344
    %v1366 = vmul.f32 %v1362, %v1346
    %v1367 = vadd.f32 %v1363, -0.28449672
    %v1368 = vadd.f32 %v1364, -0.28449672
    %v1369 = vadd.f32 %v1365, -0.28449672
    %v1370 = vadd.f32 %v1366, -0.28449672
    %v1371 = vmul.f32 %v1367, %v1340
    %v1372 = vmul.f32 %v1368, %v1342
    %v1373 = vmul.f32 %v1369, %v1344
    %v1374 = vmul.f32 %v1370, %v1346
    %v1375 = vadd.f32 %v1371, 0.2548296
    %v1376 = vadd.f32 %v1372, 0.2548296
    %v1377 = vadd.f32 %v1373, 0.2548296
    %v1378 = vadd.f32 %v1374, 0.2548296
    %v1379 = vmul.f32 %v1375, %v1340
    %v1380 = vmul.f32 %v1376, %v1342
    %v1381 = vmul.f32 %v1377, %v1344
    %v1382 = vmul.f32 %v1378, %v1346
    %v1383 = vsub.f32 0.0, %v1327
    %v1384 = vsub.f32 0.0, %v1328
    %v1385 = vsub.f32 0.0, %v1329
    %v1386 = vsub.f32 0.0, %v1330
    %v1387 = vmul.f32 %v1383, %v1327
    %v1388 = vmul.f32 %v1384, %v1328
    %v1389 = vmul.f32 %v1385, %v1329
    %v1390 = vmul.f32 %v1386, %v1330
    %v1391 = vmul.f32 %v1387, 1.442695
    %v1392 = vpow.pop %v1391
    %v1393 = vmul.f32 %v1388, 1.442695
    %v1394 = vpow.pop %v1393
    %v1395 = vmul.f32 %v1389, 1.442695
    %v1396 = vpow.pop %v1395
    %v1397 = vmul.f32 %v1390, 1.442695
    %v1398 = vpow.pop %v1397
    %v1399 = vmul.f32 %v1379, %v1392
    %v1400 = vmul.f32 %v1380, %v1394
    %v1401 = vmul.f32 %v1381, %v1396
    %v1402 = vmul.f32 %v1382, %v1398
    %v1403 = vsub.f32 1.0, %v1399
    %v1404 = vsub.f32 1.0, %v1400
    %v1405 = vsub.f32 1.0, %v1401
    %v1406 = vsub.f32 1.0, %v1402
    %v1407 = vmul.f32 %v1323, %v1403
    %v1408 = vmul.f32 %v1324, %v1404
    %v1409 = vmul.f32 %v1325, %v1405
    %v1410 = vmul.f32 %v1326, %v1406
    %v1411 = vadd.f32 %v1407, 1.0
    %v1412 = vadd.f32 %v1408, 1.0
    %v1413 = vadd.f32 %v1409, 1.0
    %v1414 = vadd.f32 %v1410, 1.0
    %v1415 = vmul.f32 %v1311, %v1411
    %v1416 = vmul.f32 %v1312, %v1412
    %v1417 = vmul.f32 %v1313, %v1413
    %v1418 = vmul.f32 %v1314, %v1414
    %v1419 = vld [vmem:[%s17] sm:$0xff]
    %v1420 = vld [vmem:[%s17 + $0x8] sm:$0xff]
    %v1421 = vld [vmem:[%s17 + $0x10] sm:$0xff]
    %v1422 = vld [vmem:[%s17 + $0x18] sm:$0xff]
    %v1423 = vld [vmem:[%s17 + $0x20] sm:$0xff]
    %v1424 = vld [vmem:[%s17 + $0x28] sm:$0xff]
    %v1425 = vld [vmem:[%s17 + $0x30] sm:$0xff]
    %v1426 = vld [vmem:[%s17 + $0x38] sm:$0xff]
    %v1427 = vld [vmem:[%s17 + $0x40] sm:$0xff]
    %v1428 = vld [vmem:[%s17 + $0x48] sm:$0xff]
    %v1429 = vld [vmem:[%s17 + $0x50] sm:$0xff]
    %v1430 = vld [vmem:[%s17 + $0x58] sm:$0xff]
    %v1431 = vld [vmem:[%s17 + $0x60] sm:$0xff]
    %v1432 = vld [vmem:[%s17 + $0x68] sm:$0xff]
    %v1433 = vld [vmem:[%s17 + $0x70] sm:$0xff]
    %v1434 = vld [vmem:[%s17 + $0x78] sm:$0xff]
    %v1435 = vld [vmem:[%s17 + $0x80] sm:$0xff]
    %v1436 = vld [vmem:[%s17 + $0x88] sm:$0xff]
    %v1437 = vld [vmem:[%s17 + $0x90] sm:$0xff]
    %v1438 = vld [vmem:[%s17 + $0x98] sm:$0xff]
    %v1439 = vld [vmem:[%s17 + $0xa0] sm:$0xff]
    %v1440 = vld [vmem:[%s17 + $0xa8] sm:$0xff]
    %v1441 = vld [vmem:[%s17 + $0xb0] sm:$0xff]
    %v1442 = vld [vmem:[%s17 + $0xb8] sm:$0xff]
    %v1443 = vld [vmem:[%s17 + $0xc0] sm:$0xff]
    %v1444 = vld [vmem:[%s17 + $0xc8] sm:$0xff]
    %v1445 = vld [vmem:[%s17 + $0xd0] sm:$0xff]
    %v1446 = vld [vmem:[%s17 + $0xd8] sm:$0xff]
    %v1447 = vld [vmem:[%s17 + $0xe0] sm:$0xff]
    %v1448 = vld [vmem:[%s17 + $0xe8] sm:$0xff]
    %v1449 = vld [vmem:[%s17 + $0xf0] sm:$0xff]
    %v1450 = vld [vmem:[%s17 + $0xf8] sm:$0xff]
    %v1451 = vld [vmem:[%s18] sm:$0x1]
    %v1453 = vlaneseq
    %v1454 = vshrl.u32 %v1453, 7
    %v1455 = vsub.s32 0, %v1454
    %v1456 = vrot.slane %v1451, %v1455
    %1458 = vmatprep.subr.mxu0 0.0
    %1459 = vmatpush1.msra.mxu0 %v1419
    %1460 = vmatprep.subr.mxu0 0.0
    %1461 = vmatpush1.msra.mxu0 %v1420
    %1462 = vmatprep.subr.mxu0 0.0
    %1463 = vmatpush1.msra.mxu0 %v1421
    %1464 = vmatprep.subr.mxu0 0.0
    %1465 = vmatpush1.msra.mxu0 %v1422
    %1466 = vmatprep.subr.mxu0 0.0
    %1467 = vmatpush1.msra.mxu0 %v1423
    %1468 = vmatprep.subr.mxu0 0.0
    %1469 = vmatpush1.msra.mxu0 %v1424
    %1470 = vmatprep.subr.mxu0 0.0
    %1471 = vmatpush1.msra.mxu0 %v1425
    %1472 = vmatprep.subr.mxu0 0.0
    %1473 = vmatpush1.msra.mxu0 %v1426
    %1474 = vmatprep.subr.mxu0 0.0
    %1475 = vmatpush1.msra.mxu0 %v1427
    %1476 = vmatprep.subr.mxu0 0.0
    %1477 = vmatpush1.msra.mxu0 %v1428
    %1478 = vmatprep.subr.mxu0 0.0
    %1479 = vmatpush1.msra.mxu0 %v1429
    %1480 = vmatprep.subr.mxu0 0.0
    %1481 = vmatpush1.msra.mxu0 %v1430
    %1482 = vmatprep.subr.mxu0 0.0
    %1483 = vmatpush1.msra.mxu0 %v1431
    %1484 = vmatprep.subr.mxu0 0.0
    %1485 = vmatpush1.msra.mxu0 %v1432
    %1486 = vmatprep.subr.mxu0 0.0
    %1487 = vmatpush1.msra.mxu0 %v1433
    %1488 = vmatprep.subr.mxu0 0.0
    %1489 = vmatpush1.msra.mxu0 %v1434
    %1490 = vmatprep.subr.mxu0 0.0
    %1491 = vmatpush1.msra.mxu0 %v1435
    %1492 = vmatprep.subr.mxu0 0.0
    %1493 = vmatpush1.msra.mxu0 %v1436
    %1494 = vmatprep.subr.mxu0 0.0
    %1495 = vmatpush1.msra.mxu0 %v1437
    %1496 = vmatprep.subr.mxu0 0.0
    %1497 = vmatpush1.msra.mxu0 %v1438
    %1498 = vmatprep.subr.mxu0 0.0
    %1499 = vmatpush1.msra.mxu0 %v1439
    %1500 = vmatprep.subr.mxu0 0.0
    %1501 = vmatpush1.msra.mxu0 %v1440
    %1502 = vmatprep.subr.mxu0 0.0
    %1503 = vmatpush1.msra.mxu0 %v1441
    %1504 = vmatprep.subr.mxu0 0.0
    %1505 = vmatpush1.msra.mxu0 %v1442
    %1506 = vmatprep.subr.mxu0 0.0
    %1507 = vmatpush1.msra.mxu0 %v1443
    %1508 = vmatprep.subr.mxu0 0.0
    %1509 = vmatpush1.msra.mxu0 %v1444
    %1510 = vmatprep.subr.mxu0 0.0
    %1511 = vmatpush1.msra.mxu0 %v1445
    %1512 = vmatprep.subr.mxu0 0.0
    %1513 = vmatpush1.msra.mxu0 %v1446
    %1514 = vmatprep.subr.mxu0 0.0
    %1515 = vmatpush1.msra.mxu0 %v1447
    %1516 = vmatprep.subr.mxu0 0.0
    %1517 = vmatpush1.msra.mxu0 %v1448
    %1518 = vmatprep.subr.mxu0 0.0
    %1519 = vmatpush1.msra.mxu0 %v1449
    %1520 = vmatprep.subr.mxu0 0.0
    %1521 = vmatpush1.msra.mxu0 %v1450
    %1522 = vmatprep.mubr.f32.mxu0 %v1416
    %1523 = vmatmul.mubr.f32.gmra.mrb[0].mxu0 %v1415
    %v1524 = vpop.f32.mrb[0].mxu0
    %v1525 = vadd.f32 %v1456, %v1524
    %v1526 = vpop.f32.mrb[0].mxu0
    %1527 = vmatprep.mubr.f32.mxu0 %v1418
    %1528 = vmatmul.mubr.f32.gmra.mrb[0].mxu0 %v1417
    %v1529 = vpop.f32.mrb[0].mxu0
    %v1530 = vadd.f32 %v1456, %v1529
    %v1531 = vpop.f32.mrb[0].mxu0
    %1532 = vdwg.mxu0
    %v1533 = vadd.f32 %v1154, %v1525
    %v1534 = vadd.f32 %v1155, %v1530
    %s1535 = scalar_lea.vmem %s7, 1
    %v1536 = vld [vmem:[%s1535] sm:$0x1]
    %s1537 = scalar_lea.vmem %s8, 1
    %v1538 = vld [vmem:[%s1537] sm:$0x1]
    %v1539 = vsel %vm108, %v1533, 0.0
    %1540 = vadd.xlane.f32.xlu0 %v1539
    %v1541 = vpop.xlane.xlu0 %1540
    %v1542 = vsel %vm108, %v1534, 0.0
    %1543 = vadd.xlane.f32.xlu0 %v1542
    %v1544 = vpop.xlane.xlu0 %1543
    %v1545 = vmul.f32 %v1541, %v235
    %v1546 = vmul.f32 %v1544, %v235
    %v1547 = vsub.f32 %v1533, %v1545
    %v1548 = vsub.f32 %v1534, %v1546
    %v1549 = vmul.f32 %v1547, %v1547
    %v1550 = vmul.f32 %v1548, %v1548
    %v1551 = vsel %vm108, %v1549, 0.0
    %1552 = vadd.xlane.f32.xlu0 %v1551
    %v1553 = vpop.xlane.xlu0 %1552
    %v1554 = vsel %vm108, %v1550, 0.0
    %1555 = vadd.xlane.f32.xlu0 %v1554
    %v1556 = vpop.xlane.xlu0 %1555
    %v1557 = vmul.f32 %v1553, %v235
    %v1558 = vmul.f32 %v1556, %v235
    %v1559 = vadd.f32 %v1557, 1e-06
    %v1560 = vadd.f32 %v1558, 1e-06
    %v1561 = vrsqrt.pop %v1559
    %v1562 = vrsqrt.pop %v1560
    %v1563 = vmul.f32 %v1547, %v1561
    %v1564 = vmul.f32 %v1548, %v1562
    %v1566 = vlaneseq
    %v1567 = vshrl.u32 %v1566, 7
    %v1568 = vsub.s32 0, %v1567
    %v1569 = vrot.slane %v1536, %v1568
    %v1571 = vmul.f32 %v1563, %v1569
    %v1572 = vmul.f32 %v1564, %v1569
    %v1574 = vlaneseq
    %v1575 = vshrl.u32 %v1574, 7
    %v1576 = vsub.s32 0, %v1575
    %v1577 = vrot.slane %v1538, %v1576
    %v1579 = vadd.f32 %v1571, %v1577
    %v1580 = vadd.f32 %v1572, %v1577
    %s1581 = scalar_lea.vmem %s9, 128
    %v1582 = vld [vmem:[%s1581] sm:$0xff]
    %v1583 = vld [vmem:[%s1581 + $0x8] sm:$0xff]
    %v1584 = vld [vmem:[%s1581 + $0x10] sm:$0xff]
    %v1585 = vld [vmem:[%s1581 + $0x18] sm:$0xff]
    %v1586 = vld [vmem:[%s1581 + $0x20] sm:$0xff]
    %v1587 = vld [vmem:[%s1581 + $0x28] sm:$0xff]
    %v1588 = vld [vmem:[%s1581 + $0x30] sm:$0xff]
    %v1589 = vld [vmem:[%s1581 + $0x38] sm:$0xff]
    %v1590 = vld [vmem:[%s1581 + $0x40] sm:$0xff]
    %v1591 = vld [vmem:[%s1581 + $0x48] sm:$0xff]
    %v1592 = vld [vmem:[%s1581 + $0x50] sm:$0xff]
    %v1593 = vld [vmem:[%s1581 + $0x58] sm:$0xff]
    %v1594 = vld [vmem:[%s1581 + $0x60] sm:$0xff]
    %v1595 = vld [vmem:[%s1581 + $0x68] sm:$0xff]
    %v1596 = vld [vmem:[%s1581 + $0x70] sm:$0xff]
    %v1597 = vld [vmem:[%s1581 + $0x78] sm:$0xff]
    %s1598 = scalar_lea.vmem %s10, 2
    %v1599 = vld [vmem:[%s1598] sm:$0x3]
    %v1601 = vlaneseq
    %v1602 = vshrl.u32 %v1601, 7
    %v1603 = vsub.s32 0, %v1602
    %v1604 = vrot.slane %v1599, %v1603
    %v1605 = vlaneseq
    %v1606 = vshrl.u32 %v1605, 7
    %v1607 = vsub.s32 1, %v1606
    %v1608 = vrot.slane %v1599, %v1607
    %v1612 = vsel %vm108, %v1579, 0
    %v1615 = vsel %vm108, %v1580, 0
    %1617 = vmatprep.subr.mxu0 %v1583
    %1618 = vmatpush1.msra.mxu0 %v1582
    %1619 = vmatprep.subr.mxu0 %v1585
    %1620 = vmatpush1.msra.mxu0 %v1584
    %1621 = vmatprep.subr.mxu0 %v1587
    %1622 = vmatpush1.msra.mxu0 %v1586
    %1623 = vmatprep.subr.mxu0 %v1589
    %1624 = vmatpush1.msra.mxu0 %v1588
    %1625 = vmatprep.subr.mxu0 %v1591
    %1626 = vmatpush1.msra.mxu0 %v1590
    %1627 = vmatprep.subr.mxu0 %v1593
    %1628 = vmatpush1.msra.mxu0 %v1592
    %1629 = vmatprep.subr.mxu0 %v1595
    %1630 = vmatpush1.msra.mxu0 %v1594
    %1631 = vmatprep.subr.mxu0 %v1597
    %1632 = vmatpush1.msra.mxu0 %v1596
    %1633 = vmatprep.subr.mxu0 0.0
    %1634 = vmatpush1.msra.mxu0 0.0
    %1635 = vmatprep.subr.mxu0 0.0
    %1636 = vmatpush1.msra.mxu0 0.0
    %1637 = vmatprep.subr.mxu0 0.0
    %1638 = vmatpush1.msra.mxu0 0.0
    %1639 = vmatprep.subr.mxu0 0.0
    %1640 = vmatpush1.msra.mxu0 0.0
    %1641 = vmatprep.subr.mxu0 0.0
    %1642 = vmatpush1.msra.mxu0 0.0
    %1643 = vmatprep.subr.mxu0 0.0
    %1644 = vmatpush1.msra.mxu0 0.0
    %1645 = vmatprep.subr.mxu0 0.0
    %1646 = vmatpush1.msra.mxu0 0.0
    %1647 = vmatprep.subr.mxu0 0.0
    %1648 = vmatpush1.msra.mxu0 0.0
    %1649 = vmatprep.subr.mxu0 0.0
    %1650 = vmatpush1.msra.mxu0 0.0
    %1651 = vmatprep.subr.mxu0 0.0
    %1652 = vmatpush1.msra.mxu0 0.0
    %1653 = vmatprep.subr.mxu0 0.0
    %1654 = vmatpush1.msra.mxu0 0.0
    %1655 = vmatprep.subr.mxu0 0.0
    %1656 = vmatpush1.msra.mxu0 0.0
    %1657 = vmatprep.subr.mxu0 0.0
    %1658 = vmatpush1.msra.mxu0 0.0
    %1659 = vmatprep.subr.mxu0 0.0
    %1660 = vmatpush1.msra.mxu0 0.0
    %1661 = vmatprep.subr.mxu0 0.0
    %1662 = vmatpush1.msra.mxu0 0.0
    %1663 = vmatprep.subr.mxu0 0.0
    %1664 = vmatpush1.msra.mxu0 0.0
    %1665 = vmatprep.subr.mxu0 0.0
    %1666 = vmatpush1.msra.mxu0 0.0
    %1667 = vmatprep.subr.mxu0 0.0
    %1668 = vmatpush1.msra.mxu0 0.0
    %1669 = vmatprep.subr.mxu0 0.0
    %1670 = vmatpush1.msra.mxu0 0.0
    %1671 = vmatprep.subr.mxu0 0.0
    %1672 = vmatpush1.msra.mxu0 0.0
    %1673 = vmatprep.subr.mxu0 0.0
    %1674 = vmatpush1.msra.mxu0 0.0
    %1675 = vmatprep.subr.mxu0 0.0
    %1676 = vmatpush1.msra.mxu0 0.0
    %1677 = vmatprep.subr.mxu0 0.0
    %1678 = vmatpush1.msra.mxu0 0.0
    %1679 = vmatprep.subr.mxu0 0.0
    %1680 = vmatpush1.msra.mxu0 0.0
    %1681 = vmatprep.mubr.f32.mxu0 0.0
    %1682 = vmatmul.mubr.f32.gmra.mrb[0].mxu0 %v1612
    %v1683 = vpop.f32.mrb[0].mxu0
    %v1684 = vadd.f32 %v1604, %v1683
    %v1685 = vpop.f32.mrb[0].mxu0
    %v1686 = vadd.f32 %v1608, %v1685
    %1687 = vmatprep.mubr.f32.mxu0 0.0
    %1688 = vmatmul.mubr.f32.gmra.mrb[0].mxu0 %v1615
    %v1689 = vpop.f32.mrb[0].mxu0
    %v1690 = vadd.f32 %v1604, %v1689
    %v1691 = vpop.f32.mrb[0].mxu0
    %v1692 = vadd.f32 %v1608, %v1691
    %1693 = vdwg.mxu0
    %v1694 = vmul.f32 %v1684, 0.17677669
    %v1695 = vmul.f32 %v1690, 0.17677669
    %1697 = vrot.lane.b32.xlu0 %v1684, 64
    %v1698 = vpop.permute.xlu0 %1697
    %v1700 = vsel %vm388, %v1694, 0
    %v1702 = vsel %vm388, %v1698, 0
    %1704 = vmatprep.subr.mxu0 0.0
    %1705 = vmatpush1.xpose.msra.mxu0 %v1702
    %1706 = vmatprep.subr.mxu0 0.0
    %1707 = vmatpush1.xpose.msra.mxu0 0.0
    %1708 = vmatprep.subr.mxu0 0.0
    %1709 = vmatpush1.xpose.msra.mxu0 0.0
    %1710 = vmatprep.subr.mxu0 0.0
    %1711 = vmatpush1.xpose.msra.mxu0 0.0
    %1712 = vmatprep.subr.mxu0 0.0
    %1713 = vmatpush1.xpose.msra.mxu0 0.0
    %1714 = vmatprep.subr.mxu0 0.0
    %1715 = vmatpush1.xpose.msra.mxu0 0.0
    %1716 = vmatprep.subr.mxu0 0.0
    %1717 = vmatpush1.xpose.msra.mxu0 0.0
    %1718 = vmatprep.subr.mxu0 0.0
    %1719 = vmatpush1.xpose.msra.mxu0 0.0
    %1720 = vmatprep.subr.mxu0 0.0
    %1721 = vmatpush1.xpose.msra.mxu0 0.0
    %1722 = vmatprep.subr.mxu0 0.0
    %1723 = vmatpush1.xpose.msra.mxu0 0.0
    %1724 = vmatprep.subr.mxu0 0.0
    %1725 = vmatpush1.xpose.msra.mxu0 0.0
    %1726 = vmatprep.subr.mxu0 0.0
    %1727 = vmatpush1.xpose.msra.mxu0 0.0
    %1728 = vmatprep.subr.mxu0 0.0
    %1729 = vmatpush1.xpose.msra.mxu0 0.0
    %1730 = vmatprep.subr.mxu0 0.0
    %1731 = vmatpush1.xpose.msra.mxu0 0.0
    %1732 = vmatprep.subr.mxu0 0.0
    %1733 = vmatpush1.xpose.msra.mxu0 0.0
    %1734 = vmatprep.subr.mxu0 0.0
    %1735 = vmatpush1.xpose.msra.mxu0 0.0
    %1736 = vmatprep.subr.mxu0 0.0
    %1737 = vmatpush1.xpose.msra.mxu0 0.0
    %1738 = vmatprep.subr.mxu0 0.0
    %1739 = vmatpush1.xpose.msra.mxu0 0.0
    %1740 = vmatprep.subr.mxu0 0.0
    %1741 = vmatpush1.xpose.msra.mxu0 0.0
    %1742 = vmatprep.subr.mxu0 0.0
    %1743 = vmatpush1.xpose.msra.mxu0 0.0
    %1744 = vmatprep.subr.mxu0 0.0
    %1745 = vmatpush1.xpose.msra.mxu0 0.0
    %1746 = vmatprep.subr.mxu0 0.0
    %1747 = vmatpush1.xpose.msra.mxu0 0.0
    %1748 = vmatprep.subr.mxu0 0.0
    %1749 = vmatpush1.xpose.msra.mxu0 0.0
    %1750 = vmatprep.subr.mxu0 0.0
    %1751 = vmatpush1.xpose.msra.mxu0 0.0
    %1752 = vmatprep.subr.mxu0 0.0
    %1753 = vmatpush1.xpose.msra.mxu0 0.0
    %1754 = vmatprep.subr.mxu0 0.0
    %1755 = vmatpush1.xpose.msra.mxu0 0.0
    %1756 = vmatprep.subr.mxu0 0.0
    %1757 = vmatpush1.xpose.msra.mxu0 0.0
    %1758 = vmatprep.subr.mxu0 0.0
    %1759 = vmatpush1.xpose.msra.mxu0 0.0
    %1760 = vmatprep.subr.mxu0 0.0
    %1761 = vmatpush1.xpose.msra.mxu0 0.0
    %1762 = vmatprep.subr.mxu0 0.0
    %1763 = vmatpush1.xpose.msra.mxu0 0.0
    %1764 = vmatprep.subr.mxu0 0.0
    %1765 = vmatpush1.xpose.msra.mxu0 0.0
    %1766 = vmatprep.subr.mxu0 0.0
    %1767 = vmatpush1.xpose.msra.mxu0 0.0
    %1768 = vmatprep.mubr.f32.mxu0 0.0
    %1769 = vmatmul.mubr.f32.gmra.mrb[0].mxu0 %v1700
    %v1770 = vpop.f32.mrb[0].mxu0
    %v1771 = vadd.f32 %v226, %v1770
    %v1772 = vpop.f32.mrb[0].mxu0
    %1773 = vdwg.mxu0
    %1775 = vrot.lane.b32.xlu0 %v1690, 64
    %v1776 = vpop.permute.xlu0 %1775
    %v1778 = vsel %vm388, %v1695, 0
    %v1780 = vsel %vm388, %v1776, 0
    %1782 = vmatprep.subr.mxu0 0.0
    %1783 = vmatpush1.xpose.msra.mxu0 %v1780
    %1784 = vmatprep.subr.mxu0 0.0
    %1785 = vmatpush1.xpose.msra.mxu0 0.0
    %1786 = vmatprep.subr.mxu0 0.0
    %1787 = vmatpush1.xpose.msra.mxu0 0.0
    %1788 = vmatprep.subr.mxu0 0.0
    %1789 = vmatpush1.xpose.msra.mxu0 0.0
    %1790 = vmatprep.subr.mxu0 0.0
    %1791 = vmatpush1.xpose.msra.mxu0 0.0
    %1792 = vmatprep.subr.mxu0 0.0
    %1793 = vmatpush1.xpose.msra.mxu0 0.0
    %1794 = vmatprep.subr.mxu0 0.0
    %1795 = vmatpush1.xpose.msra.mxu0 0.0
    %1796 = vmatprep.subr.mxu0 0.0
    %1797 = vmatpush1.xpose.msra.mxu0 0.0
    %1798 = vmatprep.subr.mxu0 0.0
    %1799 = vmatpush1.xpose.msra.mxu0 0.0
    %1800 = vmatprep.subr.mxu0 0.0
    %1801 = vmatpush1.xpose.msra.mxu0 0.0
    %1802 = vmatprep.subr.mxu0 0.0
    %1803 = vmatpush1.xpose.msra.mxu0 0.0
    %1804 = vmatprep.subr.mxu0 0.0
    %1805 = vmatpush1.xpose.msra.mxu0 0.0
    %1806 = vmatprep.subr.mxu0 0.0
    %1807 = vmatpush1.xpose.msra.mxu0 0.0
    %1808 = vmatprep.subr.mxu0 0.0
    %1809 = vmatpush1.xpose.msra.mxu0 0.0
    %1810 = vmatprep.subr.mxu0 0.0
    %1811 = vmatpush1.xpose.msra.mxu0 0.0
    %1812 = vmatprep.subr.mxu0 0.0
    %1813 = vmatpush1.xpose.msra.mxu0 0.0
    %1814 = vmatprep.subr.mxu0 0.0
    %1815 = vmatpush1.xpose.msra.mxu0 0.0
    %1816 = vmatprep.subr.mxu0 0.0
    %1817 = vmatpush1.xpose.msra.mxu0 0.0
    %1818 = vmatprep.subr.mxu0 0.0
    %1819 = vmatpush1.xpose.msra.mxu0 0.0
    %1820 = vmatprep.subr.mxu0 0.0
    %1821 = vmatpush1.xpose.msra.mxu0 0.0
    %1822 = vmatprep.subr.mxu0 0.0
    %1823 = vmatpush1.xpose.msra.mxu0 0.0
    %1824 = vmatprep.subr.mxu0 0.0
    %1825 = vmatpush1.xpose.msra.mxu0 0.0
    %1826 = vmatprep.subr.mxu0 0.0
    %1827 = vmatpush1.xpose.msra.mxu0 0.0
    %1828 = vmatprep.subr.mxu0 0.0
    %1829 = vmatpush1.xpose.msra.mxu0 0.0
    %1830 = vmatprep.subr.mxu0 0.0
    %1831 = vmatpush1.xpose.msra.mxu0 0.0
    %1832 = vmatprep.subr.mxu0 0.0
    %1833 = vmatpush1.xpose.msra.mxu0 0.0
    %1834 = vmatprep.subr.mxu0 0.0
    %1835 = vmatpush1.xpose.msra.mxu0 0.0
    %1836 = vmatprep.subr.mxu0 0.0
    %1837 = vmatpush1.xpose.msra.mxu0 0.0
    %1838 = vmatprep.subr.mxu0 0.0
    %1839 = vmatpush1.xpose.msra.mxu0 0.0
    %1840 = vmatprep.subr.mxu0 0.0
    %1841 = vmatpush1.xpose.msra.mxu0 0.0
    %1842 = vmatprep.subr.mxu0 0.0
    %1843 = vmatpush1.xpose.msra.mxu0 0.0
    %1844 = vmatprep.subr.mxu0 0.0
    %1845 = vmatpush1.xpose.msra.mxu0 0.0
    %1846 = vmatprep.mubr.f32.mxu0 0.0
    %1847 = vmatmul.mubr.f32.gmra.mrb[0].mxu0 %v1778
    %v1848 = vpop.f32.mrb[0].mxu0
    %v1849 = vadd.f32 %v226, %v1848
    %v1850 = vpop.f32.mrb[0].mxu0
    %1851 = vdwg.mxu0
    %v1852 = vsel %vm542, %v1771, -inf
    %1853 = vmax.xlane.f32.xlu0 %v1852
    %v1854 = vpop.xlane.xlu0 %1853
    %v1855 = vsel %vm542, %v1849, -inf
    %1856 = vmax.xlane.f32.xlu0 %v1855
    %v1857 = vpop.xlane.xlu0 %1856
    %v1858 = vsub.f32 %v1771, %v1854
    %v1859 = vsub.f32 %v1849, %v1857
    %v1860 = vmul.f32 %v1858, 1.442695
    %v1861 = vpow.pop %v1860
    %v1862 = vmul.f32 %v1859, 1.442695
    %v1863 = vpow.pop %v1862
    %v1864 = vsel %vm542, %v1861, 0.0
    %1865 = vadd.xlane.f32.xlu0 %v1864
    %v1866 = vpop.xlane.xlu0 %1865
    %v1867 = vsel %vm542, %v1863, 0.0
    %1868 = vadd.xlane.f32.xlu0 %v1867
    %v1869 = vpop.xlane.xlu0 %1868
    %v1870 = vrcp.pop %v1866
    %v1871 = vrcp.pop %v1869
    %v1872 = vmul.f32 %v1861, %v1870
    %v1873 = vmul.f32 %v1863, %v1871
    %v1875 = vsel %vm542, %v1872, 0
    %1877 = vmatprep.subr.mxu0 0.0
    %1878 = vmatpush1.msra.mxu0 %v1686
    %1879 = vmatprep.subr.mxu0 0.0
    %1880 = vmatpush1.msra.mxu0 0.0
    %1881 = vmatprep.subr.mxu0 0.0
    %1882 = vmatpush1.msra.mxu0 0.0
    %1883 = vmatprep.subr.mxu0 0.0
    %1884 = vmatpush1.msra.mxu0 0.0
    %1885 = vmatprep.subr.mxu0 0.0
    %1886 = vmatpush1.msra.mxu0 0.0
    %1887 = vmatprep.subr.mxu0 0.0
    %1888 = vmatpush1.msra.mxu0 0.0
    %1889 = vmatprep.subr.mxu0 0.0
    %1890 = vmatpush1.msra.mxu0 0.0
    %1891 = vmatprep.subr.mxu0 0.0
    %1892 = vmatpush1.msra.mxu0 0.0
    %1893 = vmatprep.subr.mxu0 0.0
    %1894 = vmatpush1.msra.mxu0 0.0
    %1895 = vmatprep.subr.mxu0 0.0
    %1896 = vmatpush1.msra.mxu0 0.0
    %1897 = vmatprep.subr.mxu0 0.0
    %1898 = vmatpush1.msra.mxu0 0.0
    %1899 = vmatprep.subr.mxu0 0.0
    %1900 = vmatpush1.msra.mxu0 0.0
    %1901 = vmatprep.subr.mxu0 0.0
    %1902 = vmatpush1.msra.mxu0 0.0
    %1903 = vmatprep.subr.mxu0 0.0
    %1904 = vmatpush1.msra.mxu0 0.0
    %1905 = vmatprep.subr.mxu0 0.0
    %1906 = vmatpush1.msra.mxu0 0.0
    %1907 = vmatprep.subr.mxu0 0.0
    %1908 = vmatpush1.msra.mxu0 0.0
    %1909 = vmatprep.subr.mxu0 0.0
    %1910 = vmatpush1.msra.mxu0 0.0
    %1911 = vmatprep.subr.mxu0 0.0
    %1912 = vmatpush1.msra.mxu0 0.0
    %1913 = vmatprep.subr.mxu0 0.0
    %1914 = vmatpush1.msra.mxu0 0.0
    %1915 = vmatprep.subr.mxu0 0.0
    %1916 = vmatpush1.msra.mxu0 0.0
    %1917 = vmatprep.subr.mxu0 0.0
    %1918 = vmatpush1.msra.mxu0 0.0
    %1919 = vmatprep.subr.mxu0 0.0
    %1920 = vmatpush1.msra.mxu0 0.0
    %1921 = vmatprep.subr.mxu0 0.0
    %1922 = vmatpush1.msra.mxu0 0.0
    %1923 = vmatprep.subr.mxu0 0.0
    %1924 = vmatpush1.msra.mxu0 0.0
    %1925 = vmatprep.subr.mxu0 0.0
    %1926 = vmatpush1.msra.mxu0 0.0
    %1927 = vmatprep.subr.mxu0 0.0
    %1928 = vmatpush1.msra.mxu0 0.0
    %1929 = vmatprep.subr.mxu0 0.0
    %1930 = vmatpush1.msra.mxu0 0.0
    %1931 = vmatprep.subr.mxu0 0.0
    %1932 = vmatpush1.msra.mxu0 0.0
    %1933 = vmatprep.subr.mxu0 0.0
    %1934 = vmatpush1.msra.mxu0 0.0
    %1935 = vmatprep.subr.mxu0 0.0
    %1936 = vmatpush1.msra.mxu0 0.0
    %1937 = vmatprep.subr.mxu0 0.0
    %1938 = vmatpush1.msra.mxu0 0.0
    %1939 = vmatprep.subr.mxu0 0.0
    %1940 = vmatpush1.msra.mxu0 0.0
    %1941 = vmatprep.mubr.f32.mxu0 0.0
    %1942 = vmatmul.mubr.f32.gmra.mrb[0].mxu0 %v1875
    %v1943 = vpop.f32.mrb[0].mxu0
    %v1944 = vadd.f32 0.0, %v1943
    %v1945 = vpop.f32.mrb[0].mxu0
    %1946 = vdwg.mxu0
    %v1948 = vsel %vm542, %v1873, 0
    %1950 = vmatprep.subr.mxu0 0.0
    %1951 = vmatpush1.msra.mxu0 %v1692
    %1952 = vmatprep.subr.mxu0 0.0
    %1953 = vmatpush1.msra.mxu0 0.0
    %1954 = vmatprep.subr.mxu0 0.0
    %1955 = vmatpush1.msra.mxu0 0.0
    %1956 = vmatprep.subr.mxu0 0.0
    %1957 = vmatpush1.msra.mxu0 0.0
    %1958 = vmatprep.subr.mxu0 0.0
    %1959 = vmatpush1.msra.mxu0 0.0
    %1960 = vmatprep.subr.mxu0 0.0
    %1961 = vmatpush1.msra.mxu0 0.0
    %1962 = vmatprep.subr.mxu0 0.0
    %1963 = vmatpush1.msra.mxu0 0.0
    %1964 = vmatprep.subr.mxu0 0.0
    %1965 = vmatpush1.msra.mxu0 0.0
    %1966 = vmatprep.subr.mxu0 0.0
    %1967 = vmatpush1.msra.mxu0 0.0
    %1968 = vmatprep.subr.mxu0 0.0
    %1969 = vmatpush1.msra.mxu0 0.0
    %1970 = vmatprep.subr.mxu0 0.0
    %1971 = vmatpush1.msra.mxu0 0.0
    %1972 = vmatprep.subr.mxu0 0.0
    %1973 = vmatpush1.msra.mxu0 0.0
    %1974 = vmatprep.subr.mxu0 0.0
    %1975 = vmatpush1.msra.mxu0 0.0
    %1976 = vmatprep.subr.mxu0 0.0
    %1977 = vmatpush1.msra.mxu0 0.0
    %1978 = vmatprep.subr.mxu0 0.0
    %1979 = vmatpush1.msra.mxu0 0.0
    %1980 = vmatprep.subr.mxu0 0.0
    %1981 = vmatpush1.msra.mxu0 0.0
    %1982 = vmatprep.subr.mxu0 0.0
    %1983 = vmatpush1.msra.mxu0 0.0
    %1984 = vmatprep.subr.mxu0 0.0
    %1985 = vmatpush1.msra.mxu0 0.0
    %1986 = vmatprep.subr.mxu0 0.0
    %1987 = vmatpush1.msra.mxu0 0.0
    %1988 = vmatprep.subr.mxu0 0.0
    %1989 = vmatpush1.msra.mxu0 0.0
    %1990 = vmatprep.subr.mxu0 0.0
    %1991 = vmatpush1.msra.mxu0 0.0
    %1992 = vmatprep.subr.mxu0 0.0
    %1993 = vmatpush1.msra.mxu0 0.0
    %1994 = vmatprep.subr.mxu0 0.0
    %1995 = vmatpush1.msra.mxu0 0.0
    %1996 = vmatprep.subr.mxu0 0.0
    %1997 = vmatpush1.msra.mxu0 0.0
    %1998 = vmatprep.subr.mxu0 0.0
    %1999 = vmatpush1.msra.mxu0 0.0
    %2000 = vmatprep.subr.mxu0 0.0
    %2001 = vmatpush1.msra.mxu0 0.0
    %2002 = vmatprep.subr.mxu0 0.0
    %2003 = vmatpush1.msra.mxu0 0.0
    %2004 = vmatprep.subr.mxu0 0.0
    %2005 = vmatpush1.msra.mxu0 0.0
    %2006 = vmatprep.subr.mxu0 0.0
    %2007 = vmatpush1.msra.mxu0 0.0
    %2008 = vmatprep.subr.mxu0 0.0
    %2009 = vmatpush1.msra.mxu0 0.0
    %2010 = vmatprep.subr.mxu0 0.0
    %2011 = vmatpush1.msra.mxu0 0.0
    %2012 = vmatprep.subr.mxu0 0.0
    %2013 = vmatpush1.msra.mxu0 0.0
    %2014 = vmatprep.mubr.f32.mxu0 0.0
    %2015 = vmatmul.mubr.f32.gmra.mrb[0].mxu0 %v1948
    %v2016 = vpop.f32.mrb[0].mxu0
    %v2017 = vadd.f32 0.0, %v2016
    %v2018 = vpop.f32.mrb[0].mxu0
    %2019 = vdwg.mxu0
    %2020 = vst.msk [vmem:[#allocation2] sm:$0xff] %vm388, %v1944
    %2021 = vst.msk [vmem:[#allocation2 + $0x8] sm:$0xff] %vm388, %v2017
    %2022 = vrot.lane.b32.xlu0 %v1694, 96
    %v2023 = vpop.permute.xlu0 %2022
    %2024 = vrot.lane.b32.xlu0 %v1684, 32
    %v2025 = vpop.permute.xlu0 %2024
    %v2026 = vsel %vm388, %v2023, 0
    %v2028 = vsel %vm388, %v2025, 0
    %2030 = vmatprep.subr.mxu0 0.0
    %2031 = vmatpush1.xpose.msra.mxu0 %v2028
    %2032 = vmatprep.subr.mxu0 0.0
    %2033 = vmatpush1.xpose.msra.mxu0 0.0
    %2034 = vmatprep.subr.mxu0 0.0
    %2035 = vmatpush1.xpose.msra.mxu0 0.0
    %2036 = vmatprep.subr.mxu0 0.0
    %2037 = vmatpush1.xpose.msra.mxu0 0.0
    %2038 = vmatprep.subr.mxu0 0.0
    %2039 = vmatpush1.xpose.msra.mxu0 0.0
    %2040 = vmatprep.subr.mxu0 0.0
    %2041 = vmatpush1.xpose.msra.mxu0 0.0
    %2042 = vmatprep.subr.mxu0 0.0
    %2043 = vmatpush1.xpose.msra.mxu0 0.0
    %2044 = vmatprep.subr.mxu0 0.0
    %2045 = vmatpush1.xpose.msra.mxu0 0.0
    %2046 = vmatprep.subr.mxu0 0.0
    %2047 = vmatpush1.xpose.msra.mxu0 0.0
    %2048 = vmatprep.subr.mxu0 0.0
    %2049 = vmatpush1.xpose.msra.mxu0 0.0
    %2050 = vmatprep.subr.mxu0 0.0
    %2051 = vmatpush1.xpose.msra.mxu0 0.0
    %2052 = vmatprep.subr.mxu0 0.0
    %2053 = vmatpush1.xpose.msra.mxu0 0.0
    %2054 = vmatprep.subr.mxu0 0.0
    %2055 = vmatpush1.xpose.msra.mxu0 0.0
    %2056 = vmatprep.subr.mxu0 0.0
    %2057 = vmatpush1.xpose.msra.mxu0 0.0
    %2058 = vmatprep.subr.mxu0 0.0
    %2059 = vmatpush1.xpose.msra.mxu0 0.0
    %2060 = vmatprep.subr.mxu0 0.0
    %2061 = vmatpush1.xpose.msra.mxu0 0.0
    %2062 = vmatprep.subr.mxu0 0.0
    %2063 = vmatpush1.xpose.msra.mxu0 0.0
    %2064 = vmatprep.subr.mxu0 0.0
    %2065 = vmatpush1.xpose.msra.mxu0 0.0
    %2066 = vmatprep.subr.mxu0 0.0
    %2067 = vmatpush1.xpose.msra.mxu0 0.0
    %2068 = vmatprep.subr.mxu0 0.0
    %2069 = vmatpush1.xpose.msra.mxu0 0.0
    %2070 = vmatprep.subr.mxu0 0.0
    %2071 = vmatpush1.xpose.msra.mxu0 0.0
    %2072 = vmatprep.subr.mxu0 0.0
    %2073 = vmatpush1.xpose.msra.mxu0 0.0
    %2074 = vmatprep.subr.mxu0 0.0
    %2075 = vmatpush1.xpose.msra.mxu0 0.0
    %2076 = vmatprep.subr.mxu0 0.0
    %2077 = vmatpush1.xpose.msra.mxu0 0.0
    %2078 = vmatprep.subr.mxu0 0.0
    %2079 = vmatpush1.xpose.msra.mxu0 0.0
    %2080 = vmatprep.subr.mxu0 0.0
    %2081 = vmatpush1.xpose.msra.mxu0 0.0
    %2082 = vmatprep.subr.mxu0 0.0
    %2083 = vmatpush1.xpose.msra.mxu0 0.0
    %2084 = vmatprep.subr.mxu0 0.0
    %2085 = vmatpush1.xpose.msra.mxu0 0.0
    %2086 = vmatprep.subr.mxu0 0.0
    %2087 = vmatpush1.xpose.msra.mxu0 0.0
    %2088 = vmatprep.subr.mxu0 0.0
    %2089 = vmatpush1.xpose.msra.mxu0 0.0
    %2090 = vmatprep.subr.mxu0 0.0
    %2091 = vmatpush1.xpose.msra.mxu0 0.0
    %2092 = vmatprep.subr.mxu0 0.0
    %2093 = vmatpush1.xpose.msra.mxu0 0.0
    %2094 = vmatprep.mubr.f32.mxu0 0.0
    %2095 = vmatmul.mubr.f32.gmra.mrb[0].mxu0 %v2026
    %v2096 = vpop.f32.mrb[0].mxu0
    %v2097 = vadd.f32 %v226, %v2096
    %v2098 = vpop.f32.mrb[0].mxu0
    %2099 = vdwg.mxu0
    %2100 = vrot.lane.b32.xlu0 %v1695, 96
    %v2101 = vpop.permute.xlu0 %2100
    %2102 = vrot.lane.b32.xlu0 %v1690, 32
    %v2103 = vpop.permute.xlu0 %2102
    %v2104 = vsel %vm388, %v2101, 0
    %v2106 = vsel %vm388, %v2103, 0
    %2108 = vmatprep.subr.mxu0 0.0
    %2109 = vmatpush1.xpose.msra.mxu0 %v2106
    %2110 = vmatprep.subr.mxu0 0.0
    %2111 = vmatpush1.xpose.msra.mxu0 0.0
    %2112 = vmatprep.subr.mxu0 0.0
    %2113 = vmatpush1.xpose.msra.mxu0 0.0
    %2114 = vmatprep.subr.mxu0 0.0
    %2115 = vmatpush1.xpose.msra.mxu0 0.0
    %2116 = vmatprep.subr.mxu0 0.0
    %2117 = vmatpush1.xpose.msra.mxu0 0.0
    %2118 = vmatprep.subr.mxu0 0.0
    %2119 = vmatpush1.xpose.msra.mxu0 0.0
    %2120 = vmatprep.subr.mxu0 0.0
    %2121 = vmatpush1.xpose.msra.mxu0 0.0
    %2122 = vmatprep.subr.mxu0 0.0
    %2123 = vmatpush1.xpose.msra.mxu0 0.0
    %2124 = vmatprep.subr.mxu0 0.0
    %2125 = vmatpush1.xpose.msra.mxu0 0.0
    %2126 = vmatprep.subr.mxu0 0.0
    %2127 = vmatpush1.xpose.msra.mxu0 0.0
    %2128 = vmatprep.subr.mxu0 0.0
    %2129 = vmatpush1.xpose.msra.mxu0 0.0
    %2130 = vmatprep.subr.mxu0 0.0
    %2131 = vmatpush1.xpose.msra.mxu0 0.0
    %2132 = vmatprep.subr.mxu0 0.0
    %2133 = vmatpush1.xpose.msra.mxu0 0.0
    %2134 = vmatprep.subr.mxu0 0.0
    %2135 = vmatpush1.xpose.msra.mxu0 0.0
    %2136 = vmatprep.subr.mxu0 0.0
    %2137 = vmatpush1.xpose.msra.mxu0 0.0
    %2138 = vmatprep.subr.mxu0 0.0
    %2139 = vmatpush1.xpose.msra.mxu0 0.0
    %2140 = vmatprep.subr.mxu0 0.0
    %2141 = vmatpush1.xpose.msra.mxu0 0.0
    %2142 = vmatprep.subr.mxu0 0.0
    %2143 = vmatpush1.xpose.msra.mxu0 0.0
    %2144 = vmatprep.subr.mxu0 0.0
    %2145 = vmatpush1.xpose.msra.mxu0 0.0
    %2146 = vmatprep.subr.mxu0 0.0
    %2147 = vmatpush1.xpose.msra.mxu0 0.0
    %2148 = vmatprep.subr.mxu0 0.0
    %2149 = vmatpush1.xpose.msra.mxu0 0.0
    %2150 = vmatprep.subr.mxu0 0.0
    %2151 = vmatpush1.xpose.msra.mxu0 0.0
    %2152 = vmatprep.subr.mxu0 0.0
    %2153 = vmatpush1.xpose.msra.mxu0 0.0
    %2154 = vmatprep.subr.mxu0 0.0
    %2155 = vmatpush1.xpose.msra.mxu0 0.0
    %2156 = vmatprep.subr.mxu0 0.0
    %2157 = vmatpush1.xpose.msra.mxu0 0.0
    %2158 = vmatprep.subr.mxu0 0.0
    %2159 = vmatpush1.xpose.msra.mxu0 0.0
    %2160 = vmatprep.subr.mxu0 0.0
    %2161 = vmatpush1.xpose.msra.mxu0 0.0
    %2162 = vmatprep.subr.mxu0 0.0
    %2163 = vmatpush1.xpose.msra.mxu0 0.0
    %2164 = vmatprep.subr.mxu0 0.0
    %2165 = vmatpush1.xpose.msra.mxu0 0.0
    %2166 = vmatprep.subr.mxu0 0.0
    %2167 = vmatpush1.xpose.msra.mxu0 0.0
    %2168 = vmatprep.subr.mxu0 0.0
    %2169 = vmatpush1.xpose.msra.mxu0 0.0
    %2170 = vmatprep.subr.mxu0 0.0
    %2171 = vmatpush1.xpose.msra.mxu0 0.0
    %2172 = vmatprep.mubr.f32.mxu0 0.0
    %2173 = vmatmul.mubr.f32.gmra.mrb[0].mxu0 %v2104
    %v2174 = vpop.f32.mrb[0].mxu0
    %v2175 = vadd.f32 %v226, %v2174
    %v2176 = vpop.f32.mrb[0].mxu0
    %2177 = vdwg.mxu0
    %v2178 = vsel %vm542, %v2097, -inf
    %2179 = vmax.xlane.f32.xlu0 %v2178
    %v2180 = vpop.xlane.xlu0 %2179
    %v2181 = vsel %vm542, %v2175, -inf
    %2182 = vmax.xlane.f32.xlu0 %v2181
    %v2183 = vpop.xlane.xlu0 %2182
    %v2184 = vsub.f32 %v2097, %v2180
    %v2185 = vsub.f32 %v2175, %v2183
    %v2186 = vmul.f32 %v2184, 1.442695
    %v2187 = vpow.pop %v2186
    %v2188 = vmul.f32 %v2185, 1.442695
    %v2189 = vpow.pop %v2188
    %v2190 = vsel %vm542, %v2187, 0.0
    %2191 = vadd.xlane.f32.xlu0 %v2190
    %v2192 = vpop.xlane.xlu0 %2191
    %v2193 = vsel %vm542, %v2189, 0.0
    %2194 = vadd.xlane.f32.xlu0 %v2193
    %v2195 = vpop.xlane.xlu0 %2194
    %v2196 = vrcp.pop %v2192
    %v2197 = vrcp.pop %v2195
    %v2198 = vmul.f32 %v2187, %v2196
    %v2199 = vmul.f32 %v2189, %v2197
    %2201 = vrot.lane.b32.xlu0 %v1686, 96
    %v2202 = vpop.permute.xlu0 %2201
    %v2205 = vsel %vm542, %v2198, 0
    %2207 = vmatprep.subr.mxu0 0.0
    %2208 = vmatpush1.msra.mxu0 %v2202
    %2209 = vmatprep.subr.mxu0 0.0
    %2210 = vmatpush1.msra.mxu0 0.0
    %2211 = vmatprep.subr.mxu0 0.0
    %2212 = vmatpush1.msra.mxu0 0.0
    %2213 = vmatprep.subr.mxu0 0.0
    %2214 = vmatpush1.msra.mxu0 0.0
    %2215 = vmatprep.subr.mxu0 0.0
    %2216 = vmatpush1.msra.mxu0 0.0
    %2217 = vmatprep.subr.mxu0 0.0
    %2218 = vmatpush1.msra.mxu0 0.0
    %2219 = vmatprep.subr.mxu0 0.0
    %2220 = vmatpush1.msra.mxu0 0.0
    %2221 = vmatprep.subr.mxu0 0.0
    %2222 = vmatpush1.msra.mxu0 0.0
    %2223 = vmatprep.subr.mxu0 0.0
    %2224 = vmatpush1.msra.mxu0 0.0
    %2225 = vmatprep.subr.mxu0 0.0
    %2226 = vmatpush1.msra.mxu0 0.0
    %2227 = vmatprep.subr.mxu0 0.0
    %2228 = vmatpush1.msra.mxu0 0.0
    %2229 = vmatprep.subr.mxu0 0.0
    %2230 = vmatpush1.msra.mxu0 0.0
    %2231 = vmatprep.subr.mxu0 0.0
    %2232 = vmatpush1.msra.mxu0 0.0
    %2233 = vmatprep.subr.mxu0 0.0
    %2234 = vmatpush1.msra.mxu0 0.0
    %2235 = vmatprep.subr.mxu0 0.0
    %2236 = vmatpush1.msra.mxu0 0.0
    %2237 = vmatprep.subr.mxu0 0.0
    %2238 = vmatpush1.msra.mxu0 0.0
    %2239 = vmatprep.subr.mxu0 0.0
    %2240 = vmatpush1.msra.mxu0 0.0
    %2241 = vmatprep.subr.mxu0 0.0
    %2242 = vmatpush1.msra.mxu0 0.0
    %2243 = vmatprep.subr.mxu0 0.0
    %2244 = vmatpush1.msra.mxu0 0.0
    %2245 = vmatprep.subr.mxu0 0.0
    %2246 = vmatpush1.msra.mxu0 0.0
    %2247 = vmatprep.subr.mxu0 0.0
    %2248 = vmatpush1.msra.mxu0 0.0
    %2249 = vmatprep.subr.mxu0 0.0
    %2250 = vmatpush1.msra.mxu0 0.0
    %2251 = vmatprep.subr.mxu0 0.0
    %2252 = vmatpush1.msra.mxu0 0.0
    %2253 = vmatprep.subr.mxu0 0.0
    %2254 = vmatpush1.msra.mxu0 0.0
    %2255 = vmatprep.subr.mxu0 0.0
    %2256 = vmatpush1.msra.mxu0 0.0
    %2257 = vmatprep.subr.mxu0 0.0
    %2258 = vmatpush1.msra.mxu0 0.0
    %2259 = vmatprep.subr.mxu0 0.0
    %2260 = vmatpush1.msra.mxu0 0.0
    %2261 = vmatprep.subr.mxu0 0.0
    %2262 = vmatpush1.msra.mxu0 0.0
    %2263 = vmatprep.subr.mxu0 0.0
    %2264 = vmatpush1.msra.mxu0 0.0
    %2265 = vmatprep.subr.mxu0 0.0
    %2266 = vmatpush1.msra.mxu0 0.0
    %2267 = vmatprep.subr.mxu0 0.0
    %2268 = vmatpush1.msra.mxu0 0.0
    %2269 = vmatprep.subr.mxu0 0.0
    %2270 = vmatpush1.msra.mxu0 0.0
    %2271 = vmatprep.mubr.f32.mxu0 0.0
    %2272 = vmatmul.mubr.f32.gmra.mrb[0].mxu0 %v2205
    %v2273 = vpop.f32.mrb[0].mxu0
    %v2274 = vadd.f32 0.0, %v2273
    %v2275 = vpop.f32.mrb[0].mxu0
    %2276 = vdwg.mxu0
    %2278 = vrot.lane.b32.xlu0 %v1692, 96
    %v2279 = vpop.permute.xlu0 %2278
    %v2282 = vsel %vm542, %v2199, 0
    %2284 = vmatprep.subr.mxu0 0.0
    %2285 = vmatpush1.msra.mxu0 %v2279
    %2286 = vmatprep.subr.mxu0 0.0
    %2287 = vmatpush1.msra.mxu0 0.0
    %2288 = vmatprep.subr.mxu0 0.0
    %2289 = vmatpush1.msra.mxu0 0.0
    %2290 = vmatprep.subr.mxu0 0.0
    %2291 = vmatpush1.msra.mxu0 0.0
    %2292 = vmatprep.subr.mxu0 0.0
    %2293 = vmatpush1.msra.mxu0 0.0
    %2294 = vmatprep.subr.mxu0 0.0
    %2295 = vmatpush1.msra.mxu0 0.0
    %2296 = vmatprep.subr.mxu0 0.0
    %2297 = vmatpush1.msra.mxu0 0.0
    %2298 = vmatprep.subr.mxu0 0.0
    %2299 = vmatpush1.msra.mxu0 0.0
    %2300 = vmatprep.subr.mxu0 0.0
    %2301 = vmatpush1.msra.mxu0 0.0
    %2302 = vmatprep.subr.mxu0 0.0
    %2303 = vmatpush1.msra.mxu0 0.0
    %2304 = vmatprep.subr.mxu0 0.0
    %2305 = vmatpush1.msra.mxu0 0.0
    %2306 = vmatprep.subr.mxu0 0.0
    %2307 = vmatpush1.msra.mxu0 0.0
    %2308 = vmatprep.subr.mxu0 0.0
    %2309 = vmatpush1.msra.mxu0 0.0
    %2310 = vmatprep.subr.mxu0 0.0
    %2311 = vmatpush1.msra.mxu0 0.0
    %2312 = vmatprep.subr.mxu0 0.0
    %2313 = vmatpush1.msra.mxu0 0.0
    %2314 = vmatprep.subr.mxu0 0.0
    %2315 = vmatpush1.msra.mxu0 0.0
    %2316 = vmatprep.subr.mxu0 0.0
    %2317 = vmatpush1.msra.mxu0 0.0
    %2318 = vmatprep.subr.mxu0 0.0
    %2319 = vmatpush1.msra.mxu0 0.0
    %2320 = vmatprep.subr.mxu0 0.0
    %2321 = vmatpush1.msra.mxu0 0.0
    %2322 = vmatprep.subr.mxu0 0.0
    %2323 = vmatpush1.msra.mxu0 0.0
    %2324 = vmatprep.subr.mxu0 0.0
    %2325 = vmatpush1.msra.mxu0 0.0
    %2326 = vmatprep.subr.mxu0 0.0
    %2327 = vmatpush1.msra.mxu0 0.0
    %2328 = vmatprep.subr.mxu0 0.0
    %2329 = vmatpush1.msra.mxu0 0.0
    %2330 = vmatprep.subr.mxu0 0.0
    %2331 = vmatpush1.msra.mxu0 0.0
    %2332 = vmatprep.subr.mxu0 0.0
    %2333 = vmatpush1.msra.mxu0 0.0
    %2334 = vmatprep.subr.mxu0 0.0
    %2335 = vmatpush1.msra.mxu0 0.0
    %2336 = vmatprep.subr.mxu0 0.0
    %2337 = vmatpush1.msra.mxu0 0.0
    %2338 = vmatprep.subr.mxu0 0.0
    %2339 = vmatpush1.msra.mxu0 0.0
    %2340 = vmatprep.subr.mxu0 0.0
    %2341 = vmatpush1.msra.mxu0 0.0
    %2342 = vmatprep.subr.mxu0 0.0
    %2343 = vmatpush1.msra.mxu0 0.0
    %2344 = vmatprep.subr.mxu0 0.0
    %2345 = vmatpush1.msra.mxu0 0.0
    %2346 = vmatprep.subr.mxu0 0.0
    %2347 = vmatpush1.msra.mxu0 0.0
    %2348 = vmatprep.mubr.f32.mxu0 0.0
    %2349 = vmatmul.mubr.f32.gmra.mrb[0].mxu0 %v2282
    %v2350 = vpop.f32.mrb[0].mxu0
    %v2351 = vadd.f32 0.0, %v2350
    %v2352 = vpop.f32.mrb[0].mxu0
    %2353 = vdwg.mxu0
    %2356 = vrot.lane.b32.xlu0 %v2274, 32
    %v2357 = vpop.permute.xlu0 %2356
    %2358 = vrot.lane.b32.xlu0 %v2351, 32
    %v2359 = vpop.permute.xlu0 %2358
    %2362 = vst.msk [vmem:[#allocation2] sm:$0xff] %vm1053, %v2357
    %2363 = vst.msk [vmem:[#allocation2 + $0x8] sm:$0xff] %vm1053, %v2359
    %v2364 = vld [vmem:[#allocation2] sm:$0xff]
    %v2365 = vld [vmem:[#allocation2 + $0x8] sm:$0xff]
    %s2366 = scalar_lea.vmem %s11, 64
    %v2367 = vld [vmem:[%s2366] sm:$0xff]
    %v2368 = vld [vmem:[%s2366 + $0x8] sm:$0xff]
    %v2369 = vld [vmem:[%s2366 + $0x10] sm:$0xff]
    %v2370 = vld [vmem:[%s2366 + $0x18] sm:$0xff]
    %v2371 = vld [vmem:[%s2366 + $0x20] sm:$0xff]
    %v2372 = vld [vmem:[%s2366 + $0x28] sm:$0xff]
    %v2373 = vld [vmem:[%s2366 + $0x30] sm:$0xff]
    %v2374 = vld [vmem:[%s2366 + $0x38] sm:$0xff]
    %s2375 = scalar_lea.vmem %s12, 1
    %v2376 = vld [vmem:[%s2375] sm:$0x1]
    %v2378 = vlaneseq
    %v2379 = vshrl.u32 %v2378, 7
    %v2380 = vsub.s32 0, %v2379
    %v2381 = vrot.slane %v2376, %v2380
    %v2384 = vsel %vm108, %v2364, 0
    %v2387 = vsel %vm108, %v2365, 0
    %2389 = vmatprep.subr.mxu0 0.0
    %2390 = vmatpush1.msra.mxu0 %v2367
    %2391 = vmatprep.subr.mxu0 0.0
    %2392 = vmatpush1.msra.mxu0 %v2368
    %2393 = vmatprep.subr.mxu0 0.0
    %2394 = vmatpush1.msra.mxu0 %v2369
    %2395 = vmatprep.subr.mxu0 0.0
    %2396 = vmatpush1.msra.mxu0 %v2370
    %2397 = vmatprep.subr.mxu0 0.0
    %2398 = vmatpush1.msra.mxu0 %v2371
    %2399 = vmatprep.subr.mxu0 0.0
    %2400 = vmatpush1.msra.mxu0 %v2372
    %2401 = vmatprep.subr.mxu0 0.0
    %2402 = vmatpush1.msra.mxu0 %v2373
    %2403 = vmatprep.subr.mxu0 0.0
    %2404 = vmatpush1.msra.mxu0 %v2374
    %2405 = vmatprep.subr.mxu0 0.0
    %2406 = vmatpush1.msra.mxu0 0.0
    %2407 = vmatprep.subr.mxu0 0.0
    %2408 = vmatpush1.msra.mxu0 0.0
    %2409 = vmatprep.subr.mxu0 0.0
    %2410 = vmatpush1.msra.mxu0 0.0
    %2411 = vmatprep.subr.mxu0 0.0
    %2412 = vmatpush1.msra.mxu0 0.0
    %2413 = vmatprep.subr.mxu0 0.0
    %2414 = vmatpush1.msra.mxu0 0.0
    %2415 = vmatprep.subr.mxu0 0.0
    %2416 = vmatpush1.msra.mxu0 0.0
    %2417 = vmatprep.subr.mxu0 0.0
    %2418 = vmatpush1.msra.mxu0 0.0
    %2419 = vmatprep.subr.mxu0 0.0
    %2420 = vmatpush1.msra.mxu0 0.0
    %2421 = vmatprep.subr.mxu0 0.0
    %2422 = vmatpush1.msra.mxu0 0.0
    %2423 = vmatprep.subr.mxu0 0.0
    %2424 = vmatpush1.msra.mxu0 0.0
    %2425 = vmatprep.subr.mxu0 0.0
    %2426 = vmatpush1.msra.mxu0 0.0
    %2427 = vmatprep.subr.mxu0 0.0
    %2428 = vmatpush1.msra.mxu0 0.0
    %2429 = vmatprep.subr.mxu0 0.0
    %2430 = vmatpush1.msra.mxu0 0.0
    %2431 = vmatprep.subr.mxu0 0.0
    %2432 = vmatpush1.msra.mxu0 0.0
    %2433 = vmatprep.subr.mxu0 0.0
    %2434 = vmatpush1.msra.mxu0 0.0
    %2435 = vmatprep.subr.mxu0 0.0
    %2436 = vmatpush1.msra.mxu0 0.0
    %2437 = vmatprep.subr.mxu0 0.0
    %2438 = vmatpush1.msra.mxu0 0.0
    %2439 = vmatprep.subr.mxu0 0.0
    %2440 = vmatpush1.msra.mxu0 0.0
    %2441 = vmatprep.subr.mxu0 0.0
    %2442 = vmatpush1.msra.mxu0 0.0
    %2443 = vmatprep.subr.mxu0 0.0
    %2444 = vmatpush1.msra.mxu0 0.0
    %2445 = vmatprep.subr.mxu0 0.0
    %2446 = vmatpush1.msra.mxu0 0.0
    %2447 = vmatprep.subr.mxu0 0.0
    %2448 = vmatpush1.msra.mxu0 0.0
    %2449 = vmatprep.subr.mxu0 0.0
    %2450 = vmatpush1.msra.mxu0 0.0
    %2451 = vmatprep.subr.mxu0 0.0
    %2452 = vmatpush1.msra.mxu0 0.0
    %2453 = vmatprep.mubr.f32.mxu0 0.0
    %2454 = vmatmul.mubr.f32.gmra.mrb[0].mxu0 %v2384
    %v2455 = vpop.f32.mrb[0].mxu0
    %v2456 = vadd.f32 %v2381, %v2455
    %v2457 = vpop.f32.mrb[0].mxu0
    %2458 = vmatprep.mubr.f32.mxu0 0.0
    %2459 = vmatmul.mubr.f32.gmra.mrb[0].mxu0 %v2387
    %v2460 = vpop.f32.mrb[0].mxu0
    %v2461 = vadd.f32 %v2381, %v2460
    %v2462 = vpop.f32.mrb[0].mxu0
    %2463 = vdwg.mxu0
    %v2464 = vadd.f32 %v1533, %v2456
    %v2465 = vadd.f32 %v1534, %v2461
    %s2466 = scalar_lea.vmem %s13, 1
    %v2467 = vld [vmem:[%s2466] sm:$0x1]
    %s2468 = scalar_lea.vmem %s14, 1
    %v2469 = vld [vmem:[%s2468] sm:$0x1]
    %v2470 = vsel %vm108, %v2464, 0.0
    %2471 = vadd.xlane.f32.xlu0 %v2470
    %v2472 = vpop.xlane.xlu0 %2471
    %v2473 = vsel %vm108, %v2465, 0.0
    %2474 = vadd.xlane.f32.xlu0 %v2473
    %v2475 = vpop.xlane.xlu0 %2474
    %v2476 = vmul.f32 %v2472, %v235
    %v2477 = vmul.f32 %v2475, %v235
    %v2478 = vsub.f32 %v2464, %v2476
    %v2479 = vsub.f32 %v2465, %v2477
    %v2480 = vmul.f32 %v2478, %v2478
    %v2481 = vmul.f32 %v2479, %v2479
    %v2482 = vsel %vm108, %v2480, 0.0
    %2483 = vadd.xlane.f32.xlu0 %v2482
    %v2484 = vpop.xlane.xlu0 %2483
    %v2485 = vsel %vm108, %v2481, 0.0
    %2486 = vadd.xlane.f32.xlu0 %v2485
    %v2487 = vpop.xlane.xlu0 %2486
    %v2488 = vmul.f32 %v2484, %v235
    %v2489 = vmul.f32 %v2487, %v235
    %v2490 = vadd.f32 %v2488, 1e-06
    %v2491 = vadd.f32 %v2489, 1e-06
    %v2492 = vrsqrt.pop %v2490
    %v2493 = vrsqrt.pop %v2491
    %v2494 = vmul.f32 %v2478, %v2492
    %v2495 = vmul.f32 %v2479, %v2493
    %v2497 = vlaneseq
    %v2498 = vshrl.u32 %v2497, 7
    %v2499 = vsub.s32 0, %v2498
    %v2500 = vrot.slane %v2467, %v2499
    %v2502 = vmul.f32 %v2494, %v2500
    %v2503 = vmul.f32 %v2495, %v2500
    %v2505 = vlaneseq
    %v2506 = vshrl.u32 %v2505, 7
    %v2507 = vsub.s32 0, %v2506
    %v2508 = vrot.slane %v2469, %v2507
    %v2510 = vadd.f32 %v2502, %v2508
    %v2511 = vadd.f32 %v2503, %v2508
    %s2512 = scalar_lea.vmem %s15, 128
    %v2513 = vld [vmem:[%s2512] sm:$0xff]
    %v2514 = vld [vmem:[%s2512 + $0x8] sm:$0xff]
    %v2515 = vld [vmem:[%s2512 + $0x10] sm:$0xff]
    %v2516 = vld [vmem:[%s2512 + $0x18] sm:$0xff]
    %v2517 = vld [vmem:[%s2512 + $0x20] sm:$0xff]
    %v2518 = vld [vmem:[%s2512 + $0x28] sm:$0xff]
    %v2519 = vld [vmem:[%s2512 + $0x30] sm:$0xff]
    %v2520 = vld [vmem:[%s2512 + $0x38] sm:$0xff]
    %v2521 = vld [vmem:[%s2512 + $0x40] sm:$0xff]
    %v2522 = vld [vmem:[%s2512 + $0x48] sm:$0xff]
    %v2523 = vld [vmem:[%s2512 + $0x50] sm:$0xff]
    %v2524 = vld [vmem:[%s2512 + $0x58] sm:$0xff]
    %v2525 = vld [vmem:[%s2512 + $0x60] sm:$0xff]
    %v2526 = vld [vmem:[%s2512 + $0x68] sm:$0xff]
    %v2527 = vld [vmem:[%s2512 + $0x70] sm:$0xff]
    %v2528 = vld [vmem:[%s2512 + $0x78] sm:$0xff]
    %s2529 = scalar_lea.vmem %s16, 2
    %v2530 = vld [vmem:[%s2529] sm:$0x3]
    %v2532 = vlaneseq
    %v2533 = vshrl.u32 %v2532, 7
    %v2534 = vsub.s32 0, %v2533
    %v2535 = vrot.slane %v2530, %v2534
    %v2536 = vlaneseq
    %v2537 = vshrl.u32 %v2536, 7
    %v2538 = vsub.s32 1, %v2537
    %v2539 = vrot.slane %v2530, %v2538
    %v2543 = vsel %vm108, %v2510, 0
    %v2546 = vsel %vm108, %v2511, 0
    %2548 = vmatprep.subr.mxu0 %v2514
    %2549 = vmatpush1.msra.mxu0 %v2513
    %2550 = vmatprep.subr.mxu0 %v2516
    %2551 = vmatpush1.msra.mxu0 %v2515
    %2552 = vmatprep.subr.mxu0 %v2518
    %2553 = vmatpush1.msra.mxu0 %v2517
    %2554 = vmatprep.subr.mxu0 %v2520
    %2555 = vmatpush1.msra.mxu0 %v2519
    %2556 = vmatprep.subr.mxu0 %v2522
    %2557 = vmatpush1.msra.mxu0 %v2521
    %2558 = vmatprep.subr.mxu0 %v2524
    %2559 = vmatpush1.msra.mxu0 %v2523
    %2560 = vmatprep.subr.mxu0 %v2526
    %2561 = vmatpush1.msra.mxu0 %v2525
    %2562 = vmatprep.subr.mxu0 %v2528
    %2563 = vmatpush1.msra.mxu0 %v2527
    %2564 = vmatprep.subr.mxu0 0.0
    %2565 = vmatpush1.msra.mxu0 0.0
    %2566 = vmatprep.subr.mxu0 0.0
    %2567 = vmatpush1.msra.mxu0 0.0
    %2568 = vmatprep.subr.mxu0 0.0
    %2569 = vmatpush1.msra.mxu0 0.0
    %2570 = vmatprep.subr.mxu0 0.0
    %2571 = vmatpush1.msra.mxu0 0.0
    %2572 = vmatprep.subr.mxu0 0.0
    %2573 = vmatpush1.msra.mxu0 0.0
    %2574 = vmatprep.subr.mxu0 0.0
    %2575 = vmatpush1.msra.mxu0 0.0
    %2576 = vmatprep.subr.mxu0 0.0
    %2577 = vmatpush1.msra.mxu0 0.0
    %2578 = vmatprep.subr.mxu0 0.0
    %2579 = vmatpush1.msra.mxu0 0.0
    %2580 = vmatprep.subr.mxu0 0.0
    %2581 = vmatpush1.msra.mxu0 0.0
    %2582 = vmatprep.subr.mxu0 0.0
    %2583 = vmatpush1.msra.mxu0 0.0
    %2584 = vmatprep.subr.mxu0 0.0
    %2585 = vmatpush1.msra.mxu0 0.0
    %2586 = vmatprep.subr.mxu0 0.0
    %2587 = vmatpush1.msra.mxu0 0.0
    %2588 = vmatprep.subr.mxu0 0.0
    %2589 = vmatpush1.msra.mxu0 0.0
    %2590 = vmatprep.subr.mxu0 0.0
    %2591 = vmatpush1.msra.mxu0 0.0
    %2592 = vmatprep.subr.mxu0 0.0
    %2593 = vmatpush1.msra.mxu0 0.0
    %2594 = vmatprep.subr.mxu0 0.0
    %2595 = vmatpush1.msra.mxu0 0.0
    %2596 = vmatprep.subr.mxu0 0.0
    %2597 = vmatpush1.msra.mxu0 0.0
    %2598 = vmatprep.subr.mxu0 0.0
    %2599 = vmatpush1.msra.mxu0 0.0
    %2600 = vmatprep.subr.mxu0 0.0
    %2601 = vmatpush1.msra.mxu0 0.0
    %2602 = vmatprep.subr.mxu0 0.0
    %2603 = vmatpush1.msra.mxu0 0.0
    %2604 = vmatprep.subr.mxu0 0.0
    %2605 = vmatpush1.msra.mxu0 0.0
    %2606 = vmatprep.subr.mxu0 0.0
    %2607 = vmatpush1.msra.mxu0 0.0
    %2608 = vmatprep.subr.mxu0 0.0
    %2609 = vmatpush1.msra.mxu0 0.0
    %2610 = vmatprep.subr.mxu0 0.0
    %2611 = vmatpush1.msra.mxu0 0.0
    %2612 = vmatprep.mubr.f32.mxu0 0.0
    %2613 = vmatmul.mubr.f32.gmra.mrb[0].mxu0 %v2543
    %v2614 = vpop.f32.mrb[0].mxu0
    %v2615 = vadd.f32 %v2535, %v2614
    %v2616 = vpop.f32.mrb[0].mxu0
    %v2617 = vadd.f32 %v2539, %v2616
    %2618 = vmatprep.mubr.f32.mxu0 0.0
    %2619 = vmatmul.mubr.f32.gmra.mrb[0].mxu0 %v2546
    %v2620 = vpop.f32.mrb[0].mxu0
    %v2621 = vadd.f32 %v2535, %v2620
    %v2622 = vpop.f32.mrb[0].mxu0
    %v2623 = vadd.f32 %v2539, %v2622
    %2624 = vdwg.mxu0
    %v2625 = vmul.f32 %v2615, 0.5
    %v2626 = vmul.f32 %v2617, 0.5
    %v2627 = vmul.f32 %v2621, 0.5
    %v2628 = vmul.f32 %v2623, 0.5
    %v2629 = vmul.f32 %v2615, 0.70710677
    %v2630 = vmul.f32 %v2617, 0.70710677
    %v2631 = vmul.f32 %v2621, 0.70710677
    %v2632 = vmul.f32 %v2623, 0.70710677
    %vm2633 = vcmp.ge.f32.partialorder %v2629, 0.0
    %vm2634 = vcmp.ge.f32.partialorder %v2630, 0.0
    %vm2635 = vcmp.ge.f32.partialorder %v2631, 0.0
    %vm2636 = vcmp.ge.f32.partialorder %v2632, 0.0
    %v2637 = vsel %vm2633, 1.0, -1.0
    %v2638 = vsel %vm2634, 1.0, -1.0
    %v2639 = vsel %vm2635, 1.0, -1.0
    %v2640 = vsel %vm2636, 1.0, -1.0
    %v2641 = vand.u32 2147483647, %v2629
    %v2642 = vand.u32 2147483647, %v2630
    %v2643 = vand.u32 2147483647, %v2631
    %v2644 = vand.u32 2147483647, %v2632
    %v2645 = vmul.f32 %v2641, 0.3275911
    %v2646 = vmul.f32 %v2642, 0.3275911
    %v2647 = vmul.f32 %v2643, 0.3275911
    %v2648 = vmul.f32 %v2644, 0.3275911
    %v2649 = vadd.f32 %v2645, 1.0
    %v2650 = vadd.f32 %v2646, 1.0
    %v2651 = vadd.f32 %v2647, 1.0
    %v2652 = vadd.f32 %v2648, 1.0
    %v2653 = vrcp.pop %v2649
    %v2654 = vmul.f32 1.0, %v2653
    %v2655 = vrcp.pop %v2650
    %v2656 = vmul.f32 1.0, %v2655
    %v2657 = vrcp.pop %v2651
    %v2658 = vmul.f32 1.0, %v2657
    %v2659 = vrcp.pop %v2652
    %v2660 = vmul.f32 1.0, %v2659
    %v2661 = vmul.f32 %v2654, 1.0614054
    %v2662 = vmul.f32 %v2656, 1.0614054
    %v2663 = vmul.f32 %v2658, 1.0614054
    %v2664 = vmul.f32 %v2660, 1.0614054
    %v2665 = vadd.f32 %v2661, -1.4531521
    %v2666 = vadd.f32 %v2662, -1.4531521
    %v2667 = vadd.f32 %v2663, -1.4531521
    %v2668 = vadd.f32 %v2664, -1.4531521
    %v2669 = vmul.f32 %v2665, %v2654
    %v2670 = vmul.f32 %v2666, %v2656
    %v2671 = vmul.f32 %v2667, %v2658
    %v2672 = vmul.f32 %v2668, %v2660
    %v2673 = vadd.f32 %v2669, 1.4214138
    %v2674 = vadd.f32 %v2670, 1.4214138
    %v2675 = vadd.f32 %v2671, 1.4214138
    %v2676 = vadd.f32 %v2672, 1.4214138
    %v2677 = vmul.f32 %v2673, %v2654
    %v2678 = vmul.f32 %v2674, %v2656
    %v2679 = vmul.f32 %v2675, %v2658
    %v2680 = vmul.f32 %v2676, %v2660
    %v2681 = vadd.f32 %v2677, -0.28449672
    %v2682 = vadd.f32 %v2678, -0.28449672
    %v2683 = vadd.f32 %v2679, -0.28449672
    %v2684 = vadd.f32 %v2680, -0.28449672
    %v2685 = vmul.f32 %v2681, %v2654
    %v2686 = vmul.f32 %v2682, %v2656
    %v2687 = vmul.f32 %v2683, %v2658
    %v2688 = vmul.f32 %v2684, %v2660
    %v2689 = vadd.f32 %v2685, 0.2548296
    %v2690 = vadd.f32 %v2686, 0.2548296
    %v2691 = vadd.f32 %v2687, 0.2548296
    %v2692 = vadd.f32 %v2688, 0.2548296
    %v2693 = vmul.f32 %v2689, %v2654
    %v2694 = vmul.f32 %v2690, %v2656
    %v2695 = vmul.f32 %v2691, %v2658
    %v2696 = vmul.f32 %v2692, %v2660
    %v2697 = vsub.f32 0.0, %v2641
    %v2698 = vsub.f32 0.0, %v2642
    %v2699 = vsub.f32 0.0, %v2643
    %v2700 = vsub.f32 0.0, %v2644
    %v2701 = vmul.f32 %v2697, %v2641
    %v2702 = vmul.f32 %v2698, %v2642
    %v2703 = vmul.f32 %v2699, %v2643
    %v2704 = vmul.f32 %v2700, %v2644
    %v2705 = vmul.f32 %v2701, 1.442695
    %v2706 = vpow.pop %v2705
    %v2707 = vmul.f32 %v2702, 1.442695
    %v2708 = vpow.pop %v2707
    %v2709 = vmul.f32 %v2703, 1.442695
    %v2710 = vpow.pop %v2709
    %v2711 = vmul.f32 %v2704, 1.442695
    %v2712 = vpow.pop %v2711
    %v2713 = vmul.f32 %v2693, %v2706
    %v2714 = vmul.f32 %v2694, %v2708
    %v2715 = vmul.f32 %v2695, %v2710
    %v2716 = vmul.f32 %v2696, %v2712
    %v2717 = vsub.f32 1.0, %v2713
    %v2718 = vsub.f32 1.0, %v2714
    %v2719 = vsub.f32 1.0, %v2715
    %v2720 = vsub.f32 1.0, %v2716
    %v2721 = vmul.f32 %v2637, %v2717
    %v2722 = vmul.f32 %v2638, %v2718
    %v2723 = vmul.f32 %v2639, %v2719
    %v2724 = vmul.f32 %v2640, %v2720
    %v2725 = vadd.f32 %v2721, 1.0
    %v2726 = vadd.f32 %v2722, 1.0
    %v2727 = vadd.f32 %v2723, 1.0
    %v2728 = vadd.f32 %v2724, 1.0
    %v2729 = vmul.f32 %v2625, %v2725
    %v2730 = vmul.f32 %v2626, %v2726
    %v2731 = vmul.f32 %v2627, %v2727
    %v2732 = vmul.f32 %v2628, %v2728
    %s2733 = scalar_lea.vmem %s17, 256
    %v2734 = vld [vmem:[%s2733] sm:$0xff]
    %v2735 = vld [vmem:[%s2733 + $0x8] sm:$0xff]
    %v2736 = vld [vmem:[%s2733 + $0x10] sm:$0xff]
    %v2737 = vld [vmem:[%s2733 + $0x18] sm:$0xff]
    %v2738 = vld [vmem:[%s2733 + $0x20] sm:$0xff]
    %v2739 = vld [vmem:[%s2733 + $0x28] sm:$0xff]
    %v2740 = vld [vmem:[%s2733 + $0x30] sm:$0xff]
    %v2741 = vld [vmem:[%s2733 + $0x38] sm:$0xff]
    %v2742 = vld [vmem:[%s2733 + $0x40] sm:$0xff]
    %v2743 = vld [vmem:[%s2733 + $0x48] sm:$0xff]
    %v2744 = vld [vmem:[%s2733 + $0x50] sm:$0xff]
    %v2745 = vld [vmem:[%s2733 + $0x58] sm:$0xff]
    %v2746 = vld [vmem:[%s2733 + $0x60] sm:$0xff]
    %v2747 = vld [vmem:[%s2733 + $0x68] sm:$0xff]
    %v2748 = vld [vmem:[%s2733 + $0x70] sm:$0xff]
    %v2749 = vld [vmem:[%s2733 + $0x78] sm:$0xff]
    %v2750 = vld [vmem:[%s2733 + $0x80] sm:$0xff]
    %v2751 = vld [vmem:[%s2733 + $0x88] sm:$0xff]
    %v2752 = vld [vmem:[%s2733 + $0x90] sm:$0xff]
    %v2753 = vld [vmem:[%s2733 + $0x98] sm:$0xff]
    %v2754 = vld [vmem:[%s2733 + $0xa0] sm:$0xff]
    %v2755 = vld [vmem:[%s2733 + $0xa8] sm:$0xff]
    %v2756 = vld [vmem:[%s2733 + $0xb0] sm:$0xff]
    %v2757 = vld [vmem:[%s2733 + $0xb8] sm:$0xff]
    %v2758 = vld [vmem:[%s2733 + $0xc0] sm:$0xff]
    %v2759 = vld [vmem:[%s2733 + $0xc8] sm:$0xff]
    %v2760 = vld [vmem:[%s2733 + $0xd0] sm:$0xff]
    %v2761 = vld [vmem:[%s2733 + $0xd8] sm:$0xff]
    %v2762 = vld [vmem:[%s2733 + $0xe0] sm:$0xff]
    %v2763 = vld [vmem:[%s2733 + $0xe8] sm:$0xff]
    %v2764 = vld [vmem:[%s2733 + $0xf0] sm:$0xff]
    %v2765 = vld [vmem:[%s2733 + $0xf8] sm:$0xff]
    %s2766 = scalar_lea.vmem %s18, 1
    %v2767 = vld [vmem:[%s2766] sm:$0x1]
    %v2769 = vlaneseq
    %v2770 = vshrl.u32 %v2769, 7
    %v2771 = vsub.s32 0, %v2770
    %v2772 = vrot.slane %v2767, %v2771
    %2774 = vmatprep.subr.mxu0 0.0
    %2775 = vmatpush1.msra.mxu0 %v2734
    %2776 = vmatprep.subr.mxu0 0.0
    %2777 = vmatpush1.msra.mxu0 %v2735
    %2778 = vmatprep.subr.mxu0 0.0
    %2779 = vmatpush1.msra.mxu0 %v2736
    %2780 = vmatprep.subr.mxu0 0.0
    %2781 = vmatpush1.msra.mxu0 %v2737
    %2782 = vmatprep.subr.mxu0 0.0
    %2783 = vmatpush1.msra.mxu0 %v2738
    %2784 = vmatprep.subr.mxu0 0.0
    %2785 = vmatpush1.msra.mxu0 %v2739
    %2786 = vmatprep.subr.mxu0 0.0
    %2787 = vmatpush1.msra.mxu0 %v2740
    %2788 = vmatprep.subr.mxu0 0.0
    %2789 = vmatpush1.msra.mxu0 %v2741
    %2790 = vmatprep.subr.mxu0 0.0
    %2791 = vmatpush1.msra.mxu0 %v2742
    %2792 = vmatprep.subr.mxu0 0.0
    %2793 = vmatpush1.msra.mxu0 %v2743
    %2794 = vmatprep.subr.mxu0 0.0
    %2795 = vmatpush1.msra.mxu0 %v2744
    %2796 = vmatprep.subr.mxu0 0.0
    %2797 = vmatpush1.msra.mxu0 %v2745
    %2798 = vmatprep.subr.mxu0 0.0
    %2799 = vmatpush1.msra.mxu0 %v2746
    %2800 = vmatprep.subr.mxu0 0.0
    %2801 = vmatpush1.msra.mxu0 %v2747
    %2802 = vmatprep.subr.mxu0 0.0
    %2803 = vmatpush1.msra.mxu0 %v2748
    %2804 = vmatprep.subr.mxu0 0.0
    %2805 = vmatpush1.msra.mxu0 %v2749
    %2806 = vmatprep.subr.mxu0 0.0
    %2807 = vmatpush1.msra.mxu0 %v2750
    %2808 = vmatprep.subr.mxu0 0.0
    %2809 = vmatpush1.msra.mxu0 %v2751
    %2810 = vmatprep.subr.mxu0 0.0
    %2811 = vmatpush1.msra.mxu0 %v2752
    %2812 = vmatprep.subr.mxu0 0.0
    %2813 = vmatpush1.msra.mxu0 %v2753
    %2814 = vmatprep.subr.mxu0 0.0
    %2815 = vmatpush1.msra.mxu0 %v2754
    %2816 = vmatprep.subr.mxu0 0.0
    %2817 = vmatpush1.msra.mxu0 %v2755
    %2818 = vmatprep.subr.mxu0 0.0
    %2819 = vmatpush1.msra.mxu0 %v2756
    %2820 = vmatprep.subr.mxu0 0.0
    %2821 = vmatpush1.msra.mxu0 %v2757
    %2822 = vmatprep.subr.mxu0 0.0
    %2823 = vmatpush1.msra.mxu0 %v2758
    %2824 = vmatprep.subr.mxu0 0.0
    %2825 = vmatpush1.msra.mxu0 %v2759
    %2826 = vmatprep.subr.mxu0 0.0
    %2827 = vmatpush1.msra.mxu0 %v2760
    %2828 = vmatprep.subr.mxu0 0.0
    %2829 = vmatpush1.msra.mxu0 %v2761
    %2830 = vmatprep.subr.mxu0 0.0
    %2831 = vmatpush1.msra.mxu0 %v2762
    %2832 = vmatprep.subr.mxu0 0.0
    %2833 = vmatpush1.msra.mxu0 %v2763
    %2834 = vmatprep.subr.mxu0 0.0
    %2835 = vmatpush1.msra.mxu0 %v2764
    %2836 = vmatprep.subr.mxu0 0.0
    %2837 = vmatpush1.msra.mxu0 %v2765
    %2838 = vmatprep.mubr.f32.mxu0 %v2730
    %2839 = vmatmul.mubr.f32.gmra.mrb[0].mxu0 %v2729
    %v2840 = vpop.f32.mrb[0].mxu0
    %v2841 = vadd.f32 %v2772, %v2840
    %v2842 = vpop.f32.mrb[0].mxu0
    %2843 = vmatprep.mubr.f32.mxu0 %v2732
    %2844 = vmatmul.mubr.f32.gmra.mrb[0].mxu0 %v2731
    %v2845 = vpop.f32.mrb[0].mxu0
    %v2846 = vadd.f32 %v2772, %v2845
    %v2847 = vpop.f32.mrb[0].mxu0
    %2848 = vdwg.mxu0
    %v2849 = vadd.f32 %v2464, %v2841
    %v2850 = vadd.f32 %v2465, %v2846
    %v2851 = vld [vmem:[%s19] sm:$0x1]
    %v2852 = vld [vmem:[%s20] sm:$0x1]
    %v2853 = vsel %vm108, %v2849, 0.0
    %2854 = vadd.xlane.f32.xlu0 %v2853
    %v2855 = vpop.xlane.xlu0 %2854
    %v2856 = vsel %vm108, %v2850, 0.0
    %2857 = vadd.xlane.f32.xlu0 %v2856
    %v2858 = vpop.xlane.xlu0 %2857
    %v2859 = vmul.f32 %v2855, %v235
    %v2860 = vmul.f32 %v2858, %v235
    %v2861 = vsub.f32 %v2849, %v2859
    %v2862 = vsub.f32 %v2850, %v2860
    %v2863 = vmul.f32 %v2861, %v2861
    %v2864 = vmul.f32 %v2862, %v2862
    %v2865 = vsel %vm108, %v2863, 0.0
    %2866 = vadd.xlane.f32.xlu0 %v2865
    %v2867 = vpop.xlane.xlu0 %2866
    %v2868 = vsel %vm108, %v2864, 0.0
    %2869 = vadd.xlane.f32.xlu0 %v2868
    %v2870 = vpop.xlane.xlu0 %2869
    %v2871 = vmul.f32 %v2867, %v235
    %v2872 = vmul.f32 %v2870, %v235
    %v2873 = vadd.f32 %v2871, 1e-06
    %v2874 = vadd.f32 %v2872, 1e-06
    %v2875 = vrsqrt.pop %v2873
    %v2876 = vrsqrt.pop %v2874
    %v2877 = vmul.f32 %v2861, %v2875
    %v2878 = vmul.f32 %v2862, %v2876
    %v2880 = vlaneseq
    %v2881 = vshrl.u32 %v2880, 7
    %v2882 = vsub.s32 0, %v2881
    %v2883 = vrot.slane %v2851, %v2882
    %v2885 = vmul.f32 %v2877, %v2883
    %v2886 = vmul.f32 %v2878, %v2883
    %v2888 = vlaneseq
    %v2889 = vshrl.u32 %v2888, 7
    %v2890 = vsub.s32 0, %v2889
    %v2891 = vrot.slane %v2852, %v2890
    %v2893 = vadd.f32 %v2885, %v2891
    %v2894 = vadd.f32 %v2886, %v2891
    %v2895 = vld [vmem:[%s21] sm:$0xff]
    %v2896 = vld [vmem:[%s21 + $0x8] sm:$0xff]
    %v2897 = vld [vmem:[%s21 + $0x10] sm:$0xff]
    %v2898 = vld [vmem:[%s21 + $0x18] sm:$0xff]
    %v2899 = vld [vmem:[%s21 + $0x20] sm:$0xff]
    %v2900 = vld [vmem:[%s21 + $0x28] sm:$0xff]
    %v2901 = vld [vmem:[%s21 + $0x30] sm:$0xff]
    %v2902 = vld [vmem:[%s21 + $0x38] sm:$0xff]
    %v2903 = vld [vmem:[%s22] sm:$0x1]
    %v2905 = vlaneseq
    %v2906 = vshrl.u32 %v2905, 7
    %v2907 = vsub.s32 0, %v2906
    %v2908 = vrot.slane %v2903, %v2907
    %v2911 = vsel %vm108, %v2893, 0
    %v2914 = vsel %vm108, %v2894, 0
    %2916 = vmatprep.subr.mxu0 0.0
    %2917 = vmatpush1.msra.mxu0 %v2895
    %2918 = vmatprep.subr.mxu0 0.0
    %2919 = vmatpush1.msra.mxu0 %v2896
    %2920 = vmatprep.subr.mxu0 0.0
    %2921 = vmatpush1.msra.mxu0 %v2897
    %2922 = vmatprep.subr.mxu0 0.0
    %2923 = vmatpush1.msra.mxu0 %v2898
    %2924 = vmatprep.subr.mxu0 0.0
    %2925 = vmatpush1.msra.mxu0 %v2899
    %2926 = vmatprep.subr.mxu0 0.0
    %2927 = vmatpush1.msra.mxu0 %v2900
    %2928 = vmatprep.subr.mxu0 0.0
    %2929 = vmatpush1.msra.mxu0 %v2901
    %2930 = vmatprep.subr.mxu0 0.0
    %2931 = vmatpush1.msra.mxu0 %v2902
    %2932 = vmatprep.subr.mxu0 0.0
    %2933 = vmatpush1.msra.mxu0 0.0
    %2934 = vmatprep.subr.mxu0 0.0
    %2935 = vmatpush1.msra.mxu0 0.0
    %2936 = vmatprep.subr.mxu0 0.0
    %2937 = vmatpush1.msra.mxu0 0.0
    %2938 = vmatprep.subr.mxu0 0.0
    %2939 = vmatpush1.msra.mxu0 0.0
    %2940 = vmatprep.subr.mxu0 0.0
    %2941 = vmatpush1.msra.mxu0 0.0
    %2942 = vmatprep.subr.mxu0 0.0
    %2943 = vmatpush1.msra.mxu0 0.0
    %2944 = vmatprep.subr.mxu0 0.0
    %2945 = vmatpush1.msra.mxu0 0.0
    %2946 = vmatprep.subr.mxu0 0.0
    %2947 = vmatpush1.msra.mxu0 0.0
    %2948 = vmatprep.subr.mxu0 0.0
    %2949 = vmatpush1.msra.mxu0 0.0
    %2950 = vmatprep.subr.mxu0 0.0
    %2951 = vmatpush1.msra.mxu0 0.0
    %2952 = vmatprep.subr.mxu0 0.0
    %2953 = vmatpush1.msra.mxu0 0.0
    %2954 = vmatprep.subr.mxu0 0.0
    %2955 = vmatpush1.msra.mxu0 0.0
    %2956 = vmatprep.subr.mxu0 0.0
    %2957 = vmatpush1.msra.mxu0 0.0
    %2958 = vmatprep.subr.mxu0 0.0
    %2959 = vmatpush1.msra.mxu0 0.0
    %2960 = vmatprep.subr.mxu0 0.0
    %2961 = vmatpush1.msra.mxu0 0.0
    %2962 = vmatprep.subr.mxu0 0.0
    %2963 = vmatpush1.msra.mxu0 0.0
    %2964 = vmatprep.subr.mxu0 0.0
    %2965 = vmatpush1.msra.mxu0 0.0
    %2966 = vmatprep.subr.mxu0 0.0
    %2967 = vmatpush1.msra.mxu0 0.0
    %2968 = vmatprep.subr.mxu0 0.0
    %2969 = vmatpush1.msra.mxu0 0.0
    %2970 = vmatprep.subr.mxu0 0.0
    %2971 = vmatpush1.msra.mxu0 0.0
    %2972 = vmatprep.subr.mxu0 0.0
    %2973 = vmatpush1.msra.mxu0 0.0
    %2974 = vmatprep.subr.mxu0 0.0
    %2975 = vmatpush1.msra.mxu0 0.0
    %2976 = vmatprep.subr.mxu0 0.0
    %2977 = vmatpush1.msra.mxu0 0.0
    %2978 = vmatprep.subr.mxu0 0.0
    %2979 = vmatpush1.msra.mxu0 0.0
    %2980 = vmatprep.mubr.f32.mxu0 0.0
    %2981 = vmatmul.mubr.f32.gmra.mrb[0].mxu0 %v2911
    %v2982 = vpop.f32.mrb[0].mxu0
    %v2983 = vadd.f32 %v2908, %v2982
    %v2984 = vpop.f32.mrb[0].mxu0
    %2985 = vmatprep.mubr.f32.mxu0 0.0
    %2986 = vmatmul.mubr.f32.gmra.mrb[0].mxu0 %v2914
    %v2987 = vpop.f32.mrb[0].mxu0
    %v2988 = vadd.f32 %v2908, %v2987
    %v2989 = vpop.f32.mrb[0].mxu0
    %2990 = vdwg.mxu0
    %2991 = vst.msk [vmem:[#allocation3] sm:$0xff] %vm108, %v2983
    %2992 = vst.msk [vmem:[#allocation3 + $0x8] sm:$0xff] %vm108, %v2988
    // Predicated region
    $region94: #{_forward_core.1} parent=1 // pred_check
      _
    $region95: #{_forward_core.1} parent=1 // pred_check_branch
      %2994 = sbr.rel (0) target = $region97
    $region96: #{_forward_core.1} parent=1 // pred_region
      %s2996 = ssub.s32 256, 256
      %2997 = vsyncadd [#allocation4], %s2996
      %s2998 = sshll.u32 [#allocation3], 4
      %s2999 = int_to_ptr.vmem [resolvable:$true] %s2998
      %3004 = dma.vmem_to_hbm [thread:$0]  %s2999, 256, %s23, [#allocation4], 128, 128, 8
    $region97: #{_forward_core.1} parent=1 // pred_fallthru
      _
    // Predicated region
    $region98: #{_forward_core.1} parent=1 // pred_check
      _
    $region99: #{_forward_core.1} parent=1 // pred_check_branch
      %3006 = sbr.rel (0) target = $region101
    $region100: #{_forward_core.1} parent=1 // pred_region
      %3007 = dma.done [#allocation4], 256
    $region101: #{_forward_core.1} parent=1 // pred_fallthru
      _
    %3008 = vsyncpa [#allocation4], 1

</llo_original>
